<compile_context>
chip_gen: v7x
topology: tpu7x:2x2x1
jax: 0.10.0
libtpu: 0.0.40
codegen_flags: <defaults>
</compile_context>

<pallas_src>
import functools

import jax
import jax.numpy as jnp
from jax.experimental import pallas as pl
from jax.experimental.pallas import tpu as pltpu

BN_EPS = 1e-5


# --------------------------------------------------------------------------
# Hardware-aware knobs
# --------------------------------------------------------------------------

def _vmem_budget():
    """~75% of physical VMEM, capped at 100 MiB (96 MiB on 128 MiB parts,
    48 MiB on v7x's 64 MiB) -> headroom for compiler scratch/double buffers."""
    try:
        cap = int(pltpu.get_tpu_info().vmem_capacity_bytes)
    except Exception:            # pragma: no cover - conservative fallback
        cap = 128 * 1024 * 1024
    return min(cap * 3 // 4, 100 * 1024 * 1024)


def _row_targets(vmem_bytes):
    """Row-tile targets for the two mem-bound 1x1 convs (bigger on 128 MiB
    parts, smaller on v7x)."""
    big = vmem_bytes >= 80 * 1024 * 1024
    return (4096 if big else 2048), (2048 if big else 1024)


def _pick_images_per_tile(n_imgs, hw, target_rows):
    """Largest divisor d of n_imgs with d*hw <= target_rows and (d*hw) % 8 == 0
    (legal sublane block).  Falls back to one full tile (always legal via the
    full-dim escape); no remainder padding is ever needed."""
    if n_imgs * hw <= target_rows:
        return n_imgs
    best = None
    for d in range(1, n_imgs):
        if n_imgs % d == 0 and d * hw <= target_rows and (d * hw) % 8 == 0:
            best = d
    # TODO(synk): if hw % 8 != 0 and no legal divisor exists this falls back to
    # a single (large) tile; could pad rows instead.
    return best if best is not None else n_imgs


# --------------------------------------------------------------------------
# Pallas kernels
# --------------------------------------------------------------------------

def _make_pw_bn_relu_pool_kernel(hw, ipt):
    """1x1 conv (BN scale folded into weights) + shift + ReLU, plus per-image
    spatial sums for TAM pooling (one reshape+reduce + one store)."""
    def kernel(x_ref, w_ref, shift_ref, o_ref, sum_ref):
        y = jnp.dot(x_ref[...], w_ref[...], preferred_element_type=jnp.float32)
        y = jnp.maximum(y + shift_ref[...], 0.0)
        o_ref[...] = y.astype(o_ref.dtype)
        sums = jnp.sum(y.reshape(ipt, hw, y.shape[-1]), axis=1)   # (ipt, Cout)
        sum_ref[0, :ipt, :] = sums
    return kernel


def _pw_bn_add_relu_kernel(x_ref, w_ref, shift_ref, id_ref, o_ref):
    # conv3: 1x1 conv (scale folded) + shift + residual add + final ReLU.
    y = jnp.dot(x_ref[...], w_ref[...], preferred_element_type=jnp.float32)
    y = y + shift_ref[...] + id_ref[...].astype(jnp.float32)
    o_ref[...] = jnp.maximum(y, 0.0).astype(o_ref.dtype)


def _make_tam_conv3x3_kernel(h, w, cout):
    """Fused TAM temporal mix + 3x3 conv + folded BN + ReLU for one image.

    The three neighbouring conv1 planes arrive via clamped index_maps; coef is
    exactly zero for out-of-range temporal taps, so clamping is harmless.  The
    mixed plane is written (with zero borders: 1 top / 2 bottom rows, 1 col
    each side) into a VMEM scratch whose flattened layout makes each 3x3 tap a
    constant sublane offset -> 9 accumulated bf16 matmuls, no f32 round trip,
    and a single (H*(W+2), Cout) output store."""
    p = w + 2
    hp = h * p

    def kernel(xm_ref, x0_ref, xp_ref, coef_ref, w_ref, shift_ref, o_ref,
               pad_ref):
        coef = coef_ref[0, 0]                                  # (3, C) f32
        mix = (xm_ref[0, 0] * coef[0:1, :]
               + x0_ref[0, 0] * coef[1:2, :]
               + xp_ref[0, 0] * coef[2:3, :]).astype(jnp.bfloat16)   # (HW, C)

        # Build the spatially padded plane in VMEM (borders stay zero).
        pad_ref[...] = jnp.zeros_like(pad_ref)
        for r in range(h):
            pad_ref[(r + 1) * p + 1:(r + 1) * p + 1 + w, :] = \
                mix[r * w:(r + 1) * w, :]

        # 9 shifted taps -> 9 accumulated matmuls, all in VMEM.
        acc = jnp.zeros((hp, cout), jnp.float32)
        for k in range(9):
            dy, dx = divmod(k, 3)
            off = dy * p + dx
            acc = acc + jnp.dot(pad_ref[off:off + hp, :], w_ref[k],
                                preferred_element_type=jnp.float32)
        y = jnp.maximum(acc + shift_ref[...], 0.0)             # (H*(W+2), Cout)
        # One store; the 2 garbage columns per row are stripped by the wrapper.
        o_ref[0, 0] = y.astype(o_ref.dtype)
    return kernel


# --------------------------------------------------------------------------
# pallas_call wrappers
# --------------------------------------------------------------------------

def pointwise_conv_bn_relu_pool(x_flat, w_bf16, shift, hw, n_imgs,
                                target_rows, vmem_bytes):
    """conv1: row tiles cover whole images so the fused per-image pooling
    lines up with the tile boundaries.  The sums block is padded to a multiple
    of 8 rows so the out_spec is always (8,128)-legal."""
    m, cin = x_flat.shape
    cout = w_bf16.shape[1]
    ipt = _pick_images_per_tile(n_imgs, hw, target_rows)
    ipt8 = ((ipt + 7) // 8) * 8
    tm = ipt * hw
    n_tiles = n_imgs // ipt
    out, sums3 = pl.pallas_call(
        _make_pw_bn_relu_pool_kernel(hw, ipt),
        out_shape=(jax.ShapeDtypeStruct((m, cout), jnp.bfloat16),
                   jax.ShapeDtypeStruct((n_tiles, ipt8, cout), jnp.float32)),
        grid=(n_tiles,),
        in_specs=[
            pl.BlockSpec((tm, cin), lambda i: (i, 0)),
            pl.BlockSpec((cin, cout), lambda i: (0, 0)),
            pl.BlockSpec((1, cout), lambda i: (0, 0)),
        ],
        out_specs=(
            pl.BlockSpec((tm, cout), lambda i: (i, 0)),
            pl.BlockSpec((1, ipt8, cout), lambda i: (i, 0, 0)),
        ),
        compiler_params=pltpu.CompilerParams(
            dimension_semantics=("parallel",),
            vmem_limit_bytes=vmem_bytes),
    )(x_flat, w_bf16, shift.reshape(1, cout))
    sums = sums3[:, :ipt, :].reshape(n_imgs, cout)
    return out, sums


def pointwise_conv_bn_add_relu(x_flat, w_bf16, shift, identity, hw, n_imgs,
                               target_rows, vmem_bytes):
    """conv3 + BN + residual + ReLU.  Tiles are whole images (divisors of M),
    so no remainder padding / extra HBM copies of x or identity."""
    m, cin = x_flat.shape
    cout = w_bf16.shape[1]
    ipt = _pick_images_per_tile(n_imgs, hw, target_rows)
    tm = ipt * hw
    n_tiles = n_imgs // ipt
    return pl.pallas_call(
        _pw_bn_add_relu_kernel,
        out_shape=jax.ShapeDtypeStruct((m, cout), jnp.float32),
        grid=(n_tiles,),
        in_specs=[
            pl.BlockSpec((tm, cin), lambda i: (i, 0)),
            pl.BlockSpec((cin, cout), lambda i: (0, 0)),
            pl.BlockSpec((1, cout), lambda i: (0, 0)),
            pl.BlockSpec((tm, cout), lambda i: (i, 0)),
        ],
        out_specs=pl.BlockSpec((tm, cout), lambda i: (i, 0)),
        compiler_params=pltpu.CompilerParams(
            dimension_semantics=("parallel",),
            vmem_limit_bytes=vmem_bytes),
    )(x_flat, w_bf16, shift.reshape(1, cout), identity)


def tam_conv3x3_bn_relu(out1_flat, coef, w9_bf16, shift, nb, t, h, w,
                        vmem_bytes):
    """Fused TAM + conv2.  Grid = (num_batches, num_segments); both axes
    parallel (>=2 steps for megacore sharding on v7x)."""
    c = out1_flat.shape[-1]
    cout = w9_bf16.shape[-1]
    hw, p = h * w, w + 2
    hp, lp = h * p, (h + 3) * p
    x4 = out1_flat.reshape(nb, t, hw, c)
    # TODO(synk): add an H-row tile axis for very large H*W on v7x (64 MiB).
    out = pl.pallas_call(
        _make_tam_conv3x3_kernel(h, w, cout),
        out_shape=jax.ShapeDtypeStruct((nb, t, hp, cout), jnp.bfloat16),
        grid=(nb, t),
        in_specs=[
            pl.BlockSpec((1, 1, hw, c),
                         lambda b, s: (b, jnp.maximum(s - 1, 0), 0, 0)),
            pl.BlockSpec((1, 1, hw, c), lambda b, s: (b, s, 0, 0)),
            pl.BlockSpec((1, 1, hw, c),
                         lambda b, s: (b, jnp.minimum(s + 1, t - 1), 0, 0)),
            pl.BlockSpec((1, 1, 3, c), lambda b, s: (b, s, 0, 0)),
            pl.BlockSpec((9, c, cout), lambda b, s: (0, 0, 0)),
            pl.BlockSpec((1, cout), lambda b, s: (0, 0)),
        ],
        out_specs=pl.BlockSpec((1, 1, hp, cout), lambda b, s: (b, s, 0, 0)),
        scratch_shapes=[pltpu.VMEM((lp, c), jnp.bfloat16)],
        compiler_params=pltpu.CompilerParams(
            dimension_semantics=("parallel", "parallel"),
            vmem_limit_bytes=vmem_bytes),
    )(x4, x4, x4, coef, w9_bf16, shift.reshape(1, cout))
    # (nb, T, H*(W+2), Cout) -> strip the 2 pad columns per row -> (N, H, W, Cout)
    return out.reshape(nb * t, h, p, cout)[:, :, :w, :]


# --------------------------------------------------------------------------
# Parameters / glue
# --------------------------------------------------------------------------

def fold_bn(bn):
    gamma, beta, mean, var = bn
    scale = gamma / jnp.sqrt(var + BN_EPS)
    return scale, beta - mean * scale


def init_params(key, inplanes, planes, num_segments, alpha=2, ksize=3, beta_r=4):
    ks = jax.random.split(key, 8)
    exp = 4

    def bn(c):
        return (jnp.ones((c,), jnp.float32), jnp.zeros((c,), jnp.float32),
                jnp.zeros((c,), jnp.float32), jnp.ones((c,), jnp.float32))

    w1 = jax.random.normal(ks[0], (inplanes, planes), jnp.float32) * (2.0 / planes) ** 0.5
    w2 = jax.random.normal(ks[1], (9, planes, planes), jnp.float32) * (2.0 / (planes * 9)) ** 0.5
    w3 = jax.random.normal(ks[2], (planes, planes * exp), jnp.float32) * (2.0 / (planes * exp)) ** 0.5
    wg1 = jax.random.normal(ks[3], (num_segments * alpha, num_segments), jnp.float32) * 0.1
    wg2 = jax.random.normal(ks[4], (ksize, num_segments * alpha), jnp.float32) * 0.1
    wl1 = jax.random.normal(ks[5], (planes // beta_r, planes, 3), jnp.float32) * 0.1
    wl2 = jax.random.normal(ks[6], (planes, planes // beta_r, 1), jnp.float32) * 0.1
    return dict(
        w1=w1, bn1=bn(planes),
        w2=w2, bn2=bn(planes),
        w3=w3, bn3=bn(planes * exp),
        wg1=wg1, g_bn=bn(num_segments * alpha), wg2=wg2,
        wl1=wl1, l_bn=bn(planes // beta_r), wl2=wl2,
    )


@functools.partial(jax.jit, static_argnames=("num_segments",))
def tablock_forward(x_nchw, params, num_segments):
    n, cin, h, w = x_nchw.shape
    t = num_segments
    nb = n // t
    hw = h * w

    vmem_bytes = _vmem_budget()
    conv1_rows, conv3_rows = _row_targets(vmem_bytes)

    # NCHW -> NHWC with the bf16 downcast fused into the same XLA copy: halves
    # the HBM bytes read by conv1 and by the conv3 residual.
    x_flat = jnp.transpose(x_nchw, (0, 2, 3, 1)).astype(jnp.bfloat16)
    x_flat = x_flat.reshape(n * hw, cin)

    # -------- block.conv1: 1x1 + BN + ReLU (+ fused TAM pooling) ----------
    s1, b1 = fold_bn(params["bn1"])
    w1f = (params["w1"] * s1[None, :]).astype(jnp.bfloat16)     # fold BN scale
    out1, sums1 = pointwise_conv_bn_relu_pool(
        x_flat, w1f, b1, hw, n, conv1_rows, vmem_bytes)
    c = params["w1"].shape[1]

    # -------- TAM coefficients (tiny pooled tensors -> plain JAX glue) ----
    theta = (sums1 / hw).reshape(nb, t, c).transpose(0, 2, 1)   # (nb, C, T)

    gs, gb = fold_bn(params["g_bn"])                            # G branch
    hg = theta.reshape(nb * c, t) @ params["wg1"].T
    hg = jnp.maximum(hg * gs + gb, 0.0)
    kernel_g = jax.nn.softmax(hg @ params["wg2"].T, axis=-1).reshape(nb, c, -1)

    ls, lb = fold_bn(params["l_bn"])                            # L branch
    tpad = jnp.pad(theta, ((0, 0), (0, 0), (1, 1)))
    hl = sum(jnp.einsum("oc,nct->not", params["wl1"][:, :, k], tpad[:, :, k:k + t])
             for k in range(3))
    hl = jnp.maximum(hl * ls[None, :, None] + lb[None, :, None], 0.0)
    act = jax.nn.sigmoid(jnp.einsum("oc,nct->not", params["wl2"][:, :, 0], hl))

    # coef[b,t,k,c] = kernel_g[b,c,k] * act[b,c,t+k-1]   (exactly zero outside)
    act_pad = jnp.pad(act, ((0, 0), (0, 0), (1, 1)))
    act_win = jnp.stack([act_pad[:, :, k:k + t] for k in range(3)], axis=-1)
    coef = (kernel_g[:, :, None, :] * act_win).transpose(0, 2, 3, 1)  # (nb,T,3,C)

    # -------- TAM temporal conv + block.conv2 (3x3 + BN + ReLU), fused -----
    s2, b2 = fold_bn(params["bn2"])
    w2f = (params["w2"] * s2[None, None, :]).astype(jnp.bfloat16)
    out2 = tam_conv3x3_bn_relu(out1, coef, w2f, b2, nb, t, h, w, vmem_bytes)

    # -------- block.conv3: 1x1 + BN, residual add, ReLU (Pallas) -----------
    # downsample is None -> identity = x (requires inplanes == planes * 4)
    s3, b3 = fold_bn(params["bn3"])
    w3f = (params["w3"] * s3[None, :]).astype(jnp.bfloat16)
    out = pointwise_conv_bn_add_relu(
        out2.reshape(n * hw, c), w3f, b3, x_flat, hw, n, conv3_rows, vmem_bytes)
    return jnp.transpose(out.reshape(n, h, w, -1), (0, 3, 1, 2))  # back to NCHW


if __name__ == "__main__":
    key = jax.random.PRNGKey(0)
    kx, kp = jax.random.split(key)

    num_segments = 4          # T
    num_batches = 2           # video clips
    n = num_batches * num_segments
    inplanes = 32             # == planes * Bottleneck.expansion (no downsample)
    planes = 8
    h = w = 8

    x = jax.random.normal(kx, (n, inplanes, h, w), jnp.float32)
    params = init_params(kp, inplanes, planes, num_segments)

    out = tablock_forward(x, params, num_segments)
    out = jax.block_until_ready(out)
    assert out.shape == (n, inplanes, h, w)
    assert bool(jnp.all(jnp.isfinite(out)))
    print("KERNEL_OK")
</pallas_src>

<mosaic_0001>
module attributes {stable_mosaic.version = 11 : i64} {
  func.func @kernel(%arg0: i32, %arg1: memref<512x32xbf16, #tpu.memory_space<vmem>>, %arg2: memref<32x8xbf16, #tpu.memory_space<vmem>>, %arg3: memref<1x8xf32, #tpu.memory_space<vmem>>, %arg4: memref<512x8xbf16, #tpu.memory_space<vmem>>, %arg5: memref<1x8x8xf32, #tpu.memory_space<vmem>>) attributes {dimension_semantics = [#tpu.dimension_semantics<parallel>], iteration_bounds = array<i64: 1>, scalar_prefetch = 0 : i64, scratch_operands = 0 : i64, tpu.core_type = #tpu.core_type<tc>, window_params = [{transform_indices = @transform_0, window_bounds = array<i64: 512, 32>}, {pipeline_mode = #tpu.pipeline_mode<synchronous>, transform_indices = @transform_1, window_bounds = array<i64: 32, 8>}, {pipeline_mode = #tpu.pipeline_mode<synchronous>, transform_indices = @transform_2, window_bounds = array<i64: 1, 8>}, {transform_indices = @transform_3, window_bounds = array<i64: 512, 8>}, {transform_indices = @transform_4, window_bounds = array<i64: 1, 8, 8>}]} {
    %c0 = arith.constant 0 : index
    %c0_0 = arith.constant 0 : index
    %0 = vector.load %arg1[%c0, %c0_0] : memref<512x32xbf16, #tpu.memory_space<vmem>>, vector<512x32xbf16>
    %c0_1 = arith.constant 0 : index
    %c0_2 = arith.constant 0 : index
    %1 = vector.load %arg2[%c0_1, %c0_2] : memref<32x8xbf16, #tpu.memory_space<vmem>>, vector<32x8xbf16>
    %cst = arith.constant dense<0.000000e+00> : vector<512x8xf32>
    %2 = tpu.matmul %0, %1, %cst {dimension_numbers = #tpu.dot_dimension_numbers<[1], [0], [0], [1], [0, 0, 1, 1], [], []>} : vector<512x32xbf16>, vector<32x8xbf16>, vector<512x8xf32> -> vector<512x8xf32>
    %c0_3 = arith.constant 0 : index
    %c0_4 = arith.constant 0 : index
    %3 = vector.load %arg3[%c0_3, %c0_4] : memref<1x8xf32, #tpu.memory_space<vmem>>, vector<1x8xf32>
    %4 = vector.broadcast %3 : vector<1x8xf32> to vector<512x8xf32>
    %5 = arith.addf %2, %4 : vector<512x8xf32>
    %cst_5 = arith.constant 0.000000e+00 : f32
    %6 = vector.broadcast %cst_5 : f32 to vector<512x8xf32>
    %7 = arith.maximumf %5, %6 : vector<512x8xf32>
    %8 = arith.truncf %7 : vector<512x8xf32> to vector<512x8xbf16>
    %c0_6 = arith.constant 0 : index
    %c0_7 = arith.constant 0 : index
    %9 = vector.load %arg4[%c0_6, %c0_7] : memref<512x8xbf16, #tpu.memory_space<vmem>>, vector<512x8xbf16>
    tpu.vector_store %arg4[%c0_6, %c0_7], %8 {strides = array<i32>} : memref<512x8xbf16, #tpu.memory_space<vmem>>, vector<512x8xbf16>,
    %10 = vector.shape_cast %7 : vector<512x8xf32> to vector<8x64x8xf32>
    %cst_8 = arith.constant dense<0.000000e+00> : vector<8x8xf32>
    %11 = vector.multi_reduction <add>, %10, %cst_8 [1] : vector<8x64x8xf32> to vector<8x8xf32>
    %c0_9 = arith.constant 0 : index
    %c0_10 = arith.constant 0 : index
    %c0_11 = arith.constant 0 : index
    %12 = vector.load %arg5[%c0_9, %c0_10, %c0_11] : memref<1x8x8xf32, #tpu.memory_space<vmem>>, vector<1x8x8xf32>
    %13 = vector.shape_cast %12 : vector<1x8x8xf32> to vector<8x8xf32>
    %14 = vector.shape_cast %11 : vector<8x8xf32> to vector<1x8x8xf32>
    tpu.vector_store %arg5[%c0_9, %c0_10, %c0_11], %14 {strides = array<i32>} : memref<1x8x8xf32, #tpu.memory_space<vmem>>, vector<1x8x8xf32>,
    return
  }
  func.func @transform_0(%arg0: i32) -> (i32, i32) {
    %c0_i32 = arith.constant 0 : i32
    %c0_i32_0 = arith.constant 0 : i32
    return %arg0, %c0_i32 : i32, i32
  }
  func.func @transform_1(%arg0: i32) -> (i32, i32) {
    %c0_i32 = arith.constant 0 : i32
    %c0_i32_0 = arith.constant 0 : i32
    %c0_i32_1 = arith.constant 0 : i32
    return %c0_i32, %c0_i32_0 : i32, i32
  }
  func.func @transform_2(%arg0: i32) -> (i32, i32) {
    %c0_i32 = arith.constant 0 : i32
    %c0_i32_0 = arith.constant 0 : i32
    %c0_i32_1 = arith.constant 0 : i32
    return %c0_i32, %c0_i32_0 : i32, i32
  }
  func.func @transform_3(%arg0: i32) -> (i32, i32) {
    %c0_i32 = arith.constant 0 : i32
    %c0_i32_0 = arith.constant 0 : i32
    return %arg0, %c0_i32 : i32, i32
  }
  func.func @transform_4(%arg0: i32) -> (i32, i32, i32) {
    %c0_i32 = arith.constant 0 : i32
    %c0_i32_0 = arith.constant 0 : i32
    %c0_i32_1 = arith.constant 0 : i32
    return %arg0, %c0_i32, %c0_i32_0 : i32, i32, i32
  }
}

module attributes {stable_mosaic.version = 11 : i64} {
  func.func @kernel(%arg0: i32, %arg1: i32, %arg2: memref<1x1x64x8xbf16, #tpu.memory_space<vmem>>, %arg3: memref<1x1x64x8xbf16, #tpu.memory_space<vmem>>, %arg4: memref<1x1x64x8xbf16, #tpu.memory_space<vmem>>, %arg5: memref<1x1x3x8xf32, #tpu.memory_space<vmem>>, %arg6: memref<9x8x8xbf16, #tpu.memory_space<vmem>>, %arg7: memref<1x8xf32, #tpu.memory_space<vmem>>, %arg8: memref<1x1x80x8xbf16, #tpu.memory_space<vmem>>, %arg9: memref<110x8xbf16, #tpu.memory_space<vmem>>) attributes {dimension_semantics = [#tpu.dimension_semantics<parallel>, #tpu.dimension_semantics<parallel>], iteration_bounds = array<i64: 2, 4>, scalar_prefetch = 0 : i64, scratch_operands = 1 : i64, tpu.core_type = #tpu.core_type<tc>, window_params = [{transform_indices = @transform_0, window_bounds = array<i64: 1, 1, 64, 8>}, {transform_indices = @transform_1, window_bounds = array<i64: 1, 1, 64, 8>}, {transform_indices = @transform_2, window_bounds = array<i64: 1, 1, 64, 8>}, {transform_indices = @transform_3, window_bounds = array<i64: 1, 1, 3, 8>}, {pipeline_mode = #tpu.pipeline_mode<synchronous>, transform_indices = @transform_4, window_bounds = array<i64: 9, 8, 8>}, {pipeline_mode = #tpu.pipeline_mode<synchronous>, transform_indices = @transform_5, window_bounds = array<i64: 1, 8>}, {transform_indices = @transform_6, window_bounds = array<i64: 1, 1, 80, 8>}]} {
    %c0 = arith.constant 0 : index
    %c0_0 = arith.constant 0 : index
    %c0_1 = arith.constant 0 : index
    %c0_2 = arith.constant 0 : index
    %0 = vector.load %arg5[%c0, %c0_0, %c0_1, %c0_2] : memref<1x1x3x8xf32, #tpu.memory_space<vmem>>, vector<1x1x3x8xf32>
    %1 = vector.shape_cast %0 : vector<1x1x3x8xf32> to vector<3x8xf32>
    %c0_3 = arith.constant 0 : index
    %c0_4 = arith.constant 0 : index
    %c0_5 = arith.constant 0 : index
    %c0_6 = arith.constant 0 : index
    %2 = vector.load %arg2[%c0_3, %c0_4, %c0_5, %c0_6] : memref<1x1x64x8xbf16, #tpu.memory_space<vmem>>, vector<1x1x64x8xbf16>
    %3 = vector.shape_cast %2 : vector<1x1x64x8xbf16> to vector<64x8xbf16>
    %4 = vector.extract_strided_slice %1 {offsets = [0, 0], sizes = [1, 8], strides = [1, 1]} : vector<3x8xf32> to vector<1x8xf32>
    %5 = arith.extf %3 : vector<64x8xbf16> to vector<64x8xf32>
    %6 = vector.broadcast %4 : vector<1x8xf32> to vector<64x8xf32>
    %7 = arith.mulf %5, %6 : vector<64x8xf32>
    %c0_7 = arith.constant 0 : index
    %c0_8 = arith.constant 0 : index
    %c0_9 = arith.constant 0 : index
    %c0_10 = arith.constant 0 : index
    %8 = vector.load %arg3[%c0_7, %c0_8, %c0_9, %c0_10] : memref<1x1x64x8xbf16, #tpu.memory_space<vmem>>, vector<1x1x64x8xbf16>
    %9 = vector.shape_cast %8 : vector<1x1x64x8xbf16> to vector<64x8xbf16>
    %10 = vector.extract_strided_slice %1 {offsets = [1, 0], sizes = [1, 8], strides = [1, 1]} : vector<3x8xf32> to vector<1x8xf32>
    %11 = arith.extf %9 : vector<64x8xbf16> to vector<64x8xf32>
    %12 = vector.broadcast %10 : vector<1x8xf32> to vector<64x8xf32>
    %13 = arith.mulf %11, %12 : vector<64x8xf32>
    %14 = arith.addf %7, %13 : vector<64x8xf32>
    %c0_11 = arith.constant 0 : index
    %c0_12 = arith.constant 0 : index
    %c0_13 = arith.constant 0 : index
    %c0_14 = arith.constant 0 : index
    %15 = vector.load %arg4[%c0_11, %c0_12, %c0_13, %c0_14] : memref<1x1x64x8xbf16, #tpu.memory_space<vmem>>, vector<1x1x64x8xbf16>
    %16 = vector.shape_cast %15 : vector<1x1x64x8xbf16> to vector<64x8xbf16>
    %17 = vector.extract_strided_slice %1 {offsets = [2, 0], sizes = [1, 8], strides = [1, 1]} : vector<3x8xf32> to vector<1x8xf32>
    %18 = arith.extf %16 : vector<64x8xbf16> to vector<64x8xf32>
    %19 = vector.broadcast %17 : vector<1x8xf32> to vector<64x8xf32>
    %20 = arith.mulf %18, %19 : vector<64x8xf32>
    %21 = arith.addf %14, %20 : vector<64x8xf32>
    %22 = arith.truncf %21 : vector<64x8xf32> to vector<64x8xbf16>
    %cst = arith.constant 0.000000e+00 : bf16
    %23 = vector.broadcast %cst : bf16 to vector<110x8xbf16>
    %c0_15 = arith.constant 0 : index
    %c0_16 = arith.constant 0 : index
    %24 = vector.load %arg9[%c0_15, %c0_16] : memref<110x8xbf16, #tpu.memory_space<vmem>>, vector<110x8xbf16>
    tpu.vector_store %arg9[%c0_15, %c0_16], %23 {strides = array<i32>} : memref<110x8xbf16, #tpu.memory_space<vmem>>, vector<110x8xbf16>,
    %25 = vector.extract_strided_slice %22 {offsets = [0, 0], sizes = [8, 8], strides = [1, 1]} : vector<64x8xbf16> to vector<8x8xbf16>
    %c11 = arith.constant 11 : index
    %c0_17 = arith.constant 0 : index
    %26 = vector.load %arg9[%c11, %c0_17] : memref<110x8xbf16, #tpu.memory_space<vmem>>, vector<8x8xbf16>
    tpu.vector_store %arg9[%c11, %c0_17], %25 {strides = array<i32>} : memref<110x8xbf16, #tpu.memory_space<vmem>>, vector<8x8xbf16>,
    %27 = vector.extract_strided_slice %22 {offsets = [8, 0], sizes = [8, 8], strides = [1, 1]} : vector<64x8xbf16> to vector<8x8xbf16>
    %c21 = arith.constant 21 : index
    %c0_18 = arith.constant 0 : index
    %28 = vector.load %arg9[%c21, %c0_18] : memref<110x8xbf16, #tpu.memory_space<vmem>>, vector<8x8xbf16>
    tpu.vector_store %arg9[%c21, %c0_18], %27 {strides = array<i32>} : memref<110x8xbf16, #tpu.memory_space<vmem>>, vector<8x8xbf16>,
    %29 = vector.extract_strided_slice %22 {offsets = [16, 0], sizes = [8, 8], strides = [1, 1]} : vector<64x8xbf16> to vector<8x8xbf16>
    %c31 = arith.constant 31 : index
    %c0_19 = arith.constant 0 : index
    %30 = vector.load %arg9[%c31, %c0_19] : memref<110x8xbf16, #tpu.memory_space<vmem>>, vector<8x8xbf16>
    tpu.vector_store %arg9[%c31, %c0_19], %29 {strides = array<i32>} : memref<110x8xbf16, #tpu.memory_space<vmem>>, vector<8x8xbf16>,
    %31 = vector.extract_strided_slice %22 {offsets = [24, 0], sizes = [8, 8], strides = [1, 1]} : vector<64x8xbf16> to vector<8x8xbf16>
    %c41 = arith.constant 41 : index
    %c0_20 = arith.constant 0 : index
    %32 = vector.load %arg9[%c41, %c0_20] : memref<110x8xbf16, #tpu.memory_space<vmem>>, vector<8x8xbf16>
    tpu.vector_store %arg9[%c41, %c0_20], %31 {strides = array<i32>} : memref<110x8xbf16, #tpu.memory_space<vmem>>, vector<8x8xbf16>,
    %33 = vector.extract_strided_slice %22 {offsets = [32, 0], sizes = [8, 8], strides = [1, 1]} : vector<64x8xbf16> to vector<8x8xbf16>
    %c51 = arith.constant 51 : index
    %c0_21 = arith.constant 0 : index
    %34 = vector.load %arg9[%c51, %c0_21] : memref<110x8xbf16, #tpu.memory_space<vmem>>, vector<8x8xbf16>
    tpu.vector_store %arg9[%c51, %c0_21], %33 {strides = array<i32>} : memref<110x8xbf16, #tpu.memory_space<vmem>>, vector<8x8xbf16>,
    %35 = vector.extract_strided_slice %22 {offsets = [40, 0], sizes = [8, 8], strides = [1, 1]} : vector<64x8xbf16> to vector<8x8xbf16>
    %c61 = arith.constant 61 : index
    %c0_22 = arith.constant 0 : index
    %36 = vector.load %arg9[%c61, %c0_22] : memref<110x8xbf16, #tpu.memory_space<vmem>>, vector<8x8xbf16>
    tpu.vector_store %arg9[%c61, %c0_22], %35 {strides = array<i32>} : memref<110x8xbf16, #tpu.memory_space<vmem>>, vector<8x8xbf16>,
    %37 = vector.extract_strided_slice %22 {offsets = [48, 0], sizes = [8, 8], strides = [1, 1]} : vector<64x8xbf16> to vector<8x8xbf16>
    %c71 = arith.constant 71 : index
    %c0_23 = arith.constant 0 : index
    %38 = vector.load %arg9[%c71, %c0_23] : memref<110x8xbf16, #tpu.memory_space<vmem>>, vector<8x8xbf16>
    tpu.vector_store %arg9[%c71, %c0_23], %37 {strides = array<i32>} : memref<110x8xbf16, #tpu.memory_space<vmem>>, vector<8x8xbf16>,
    %39 = vector.extract_strided_slice %22 {offsets = [56, 0], sizes = [8, 8], strides = [1, 1]} : vector<64x8xbf16> to vector<8x8xbf16>
    %c81 = arith.constant 81 : index
    %c0_24 = arith.constant 0 : index
    %40 = vector.load %arg9[%c81, %c0_24] : memref<110x8xbf16, #tpu.memory_space<vmem>>, vector<8x8xbf16>
    tpu.vector_store %arg9[%c81, %c0_24], %39 {strides = array<i32>} : memref<110x8xbf16, #tpu.memory_space<vmem>>, vector<8x8xbf16>,
    %cst_25 = arith.constant 0.000000e+00 : f32
    %41 = vector.broadcast %cst_25 : f32 to vector<80x8xf32>
    %c0_26 = arith.constant 0 : index
    %c0_27 = arith.constant 0 : index
    %42 = vector.load %arg9[%c0_26, %c0_27] : memref<110x8xbf16, #tpu.memory_space<vmem>>, vector<80x8xbf16>
    %c0_28 = arith.constant 0 : index
    %c0_29 = arith.constant 0 : index
    %c0_30 = arith.constant 0 : index
    %43 = vector.load %arg6[%c0_28, %c0_29, %c0_30] : memref<9x8x8xbf16, #tpu.memory_space<vmem>>, vector<1x8x8xbf16>
    %44 = vector.shape_cast %43 : vector<1x8x8xbf16> to vector<8x8xbf16>
    %cst_31 = arith.constant dense<0.000000e+00> : vector<80x8xf32>
    %45 = tpu.matmul %42, %44, %cst_31 {dimension_numbers = #tpu.dot_dimension_numbers<[1], [0], [0], [1], [0, 0, 1, 1], [], []>} : vector<80x8xbf16>, vector<8x8xbf16>, vector<80x8xf32> -> vector<80x8xf32>
    %46 = arith.addf %41, %45 : vector<80x8xf32>
    %c1 = arith.constant 1 : index
    %c0_32 = arith.constant 0 : index
    %47 = vector.load %arg9[%c1, %c0_32] : memref<110x8xbf16, #tpu.memory_space<vmem>>, vector<80x8xbf16>
    %c1_33 = arith.constant 1 : index
    %c0_34 = arith.constant 0 : index
    %c0_35 = arith.constant 0 : index
    %48 = vector.load %arg6[%c1_33, %c0_34, %c0_35] : memref<9x8x8xbf16, #tpu.memory_space<vmem>>, vector<1x8x8xbf16>
    %49 = vector.shape_cast %48 : vector<1x8x8xbf16> to vector<8x8xbf16>
    %cst_36 = arith.constant dense<0.000000e+00> : vector<80x8xf32>
    %50 = tpu.matmul %47, %49, %cst_36 {dimension_numbers = #tpu.dot_dimension_numbers<[1], [0], [0], [1], [0, 0, 1, 1], [], []>} : vector<80x8xbf16>, vector<8x8xbf16>, vector<80x8xf32> -> vector<80x8xf32>
    %51 = arith.addf %46, %50 : vector<80x8xf32>
    %c2 = arith.constant 2 : index
    %c0_37 = arith.constant 0 : index
    %52 = vector.load %arg9[%c2, %c0_37] : memref<110x8xbf16, #tpu.memory_space<vmem>>, vector<80x8xbf16>
    %c2_38 = arith.constant 2 : index
    %c0_39 = arith.constant 0 : index
    %c0_40 = arith.constant 0 : index
    %53 = vector.load %arg6[%c2_38, %c0_39, %c0_40] : memref<9x8x8xbf16, #tpu.memory_space<vmem>>, vector<1x8x8xbf16>
    %54 = vector.shape_cast %53 : vector<1x8x8xbf16> to vector<8x8xbf16>
    %cst_41 = arith.constant dense<0.000000e+00> : vector<80x8xf32>
    %55 = tpu.matmul %52, %54, %cst_41 {dimension_numbers = #tpu.dot_dimension_numbers<[1], [0], [0], [1], [0, 0, 1, 1], [], []>} : vector<80x8xbf16>, vector<8x8xbf16>, vector<80x8xf32> -> vector<80x8xf32>
    %56 = arith.addf %51, %55 : vector<80x8xf32>
    %c10 = arith.constant 10 : index
    %c0_42 = arith.constant 0 : index
    %57 = vector.load %arg9[%c10, %c0_42] : memref<110x8xbf16, #tpu.memory_space<vmem>>, vector<80x8xbf16>
    %c3 = arith.constant 3 : index
    %c0_43 = arith.constant 0 : index
    %c0_44 = arith.constant 0 : index
    %58 = vector.load %arg6[%c3, %c0_43, %c0_44] : memref<9x8x8xbf16, #tpu.memory_space<vmem>>, vector<1x8x8xbf16>
    %59 = vector.shape_cast %58 : vector<1x8x8xbf16> to vector<8x8xbf16>
    %cst_45 = arith.constant dense<0.000000e+00> : vector<80x8xf32>
    %60 = tpu.matmul %57, %59, %cst_45 {dimension_numbers = #tpu.dot_dimension_numbers<[1], [0], [0], [1], [0, 0, 1, 1], [], []>} : vector<80x8xbf16>, vector<8x8xbf16>, vector<80x8xf32> -> vector<80x8xf32>
    %61 = arith.addf %56, %60 : vector<80x8xf32>
    %c11_46 = arith.constant 11 : index
    %c0_47 = arith.constant 0 : index
    %62 = vector.load %arg9[%c11_46, %c0_47] : memref<110x8xbf16, #tpu.memory_space<vmem>>, vector<80x8xbf16>
    %c4 = arith.constant 4 : index
    %c0_48 = arith.constant 0 : index
    %c0_49 = arith.constant 0 : index
    %63 = vector.load %arg6[%c4, %c0_48, %c0_49] : memref<9x8x8xbf16, #tpu.memory_space<vmem>>, vector<1x8x8xbf16>
    %64 = vector.shape_cast %63 : vector<1x8x8xbf16> to vector<8x8xbf16>
    %cst_50 = arith.constant dense<0.000000e+00> : vector<80x8xf32>
    %65 = tpu.matmul %62, %64, %cst_50 {dimension_numbers = #tpu.dot_dimension_numbers<[1], [0], [0], [1], [0, 0, 1, 1], [], []>} : vector<80x8xbf16>, vector<8x8xbf16>, vector<80x8xf32> -> vector<80x8xf32>
    %66 = arith.addf %61, %65 : vector<80x8xf32>
    %c12 = arith.constant 12 : index
    %c0_51 = arith.constant 0 : index
    %67 = vector.load %arg9[%c12, %c0_51] : memref<110x8xbf16, #tpu.memory_space<vmem>>, vector<80x8xbf16>
    %c5 = arith.constant 5 : index
    %c0_52 = arith.constant 0 : index
    %c0_53 = arith.constant 0 : index
    %68 = vector.load %arg6[%c5, %c0_52, %c0_53] : memref<9x8x8xbf16, #tpu.memory_space<vmem>>, vector<1x8x8xbf16>
    %69 = vector.shape_cast %68 : vector<1x8x8xbf16> to vector<8x8xbf16>
    %cst_54 = arith.constant dense<0.000000e+00> : vector<80x8xf32>
    %70 = tpu.matmul %67, %69, %cst_54 {dimension_numbers = #tpu.dot_dimension_numbers<[1], [0], [0], [1], [0, 0, 1, 1], [], []>} : vector<80x8xbf16>, vector<8x8xbf16>, vector<80x8xf32> -> vector<80x8xf32>
    %71 = arith.addf %66, %70 : vector<80x8xf32>
    %c20 = arith.constant 20 : index
    %c0_55 = arith.constant 0 : index
    %72 = vector.load %arg9[%c20, %c0_55] : memref<110x8xbf16, #tpu.memory_space<vmem>>, vector<80x8xbf16>
    %c6 = arith.constant 6 : index
    %c0_56 = arith.constant 0 : index
    %c0_57 = arith.constant 0 : index
    %73 = vector.load %arg6[%c6, %c0_56, %c0_57] : memref<9x8x8xbf16, #tpu.memory_space<vmem>>, vector<1x8x8xbf16>
    %74 = vector.shape_cast %73 : vector<1x8x8xbf16> to vector<8x8xbf16>
    %cst_58 = arith.constant dense<0.000000e+00> : vector<80x8xf32>
    %75 = tpu.matmul %72, %74, %cst_58 {dimension_numbers = #tpu.dot_dimension_numbers<[1], [0], [0], [1], [0, 0, 1, 1], [], []>} : vector<80x8xbf16>, vector<8x8xbf16>, vector<80x8xf32> -> vector<80x8xf32>
    %76 = arith.addf %71, %75 : vector<80x8xf32>
    %c21_59 = arith.constant 21 : index
    %c0_60 = arith.constant 0 : index
    %77 = vector.load %arg9[%c21_59, %c0_60] : memref<110x8xbf16, #tpu.memory_space<vmem>>, vector<80x8xbf16>
    %c7 = arith.constant 7 : index
    %c0_61 = arith.constant 0 : index
    %c0_62 = arith.constant 0 : index
    %78 = vector.load %arg6[%c7, %c0_61, %c0_62] : memref<9x8x8xbf16, #tpu.memory_space<vmem>>, vector<1x8x8xbf16>
    %79 = vector.shape_cast %78 : vector<1x8x8xbf16> to vector<8x8xbf16>
    %cst_63 = arith.constant dense<0.000000e+00> : vector<80x8xf32>
    %80 = tpu.matmul %77, %79, %cst_63 {dimension_numbers = #tpu.dot_dimension_numbers<[1], [0], [0], [1], [0, 0, 1, 1], [], []>} : vector<80x8xbf16>, vector<8x8xbf16>, vector<80x8xf32> -> vector<80x8xf32>
    %81 = arith.addf %76, %80 : vector<80x8xf32>
    %c22 = arith.constant 22 : index
    %c0_64 = arith.constant 0 : index
    %82 = vector.load %arg9[%c22, %c0_64] : memref<110x8xbf16, #tpu.memory_space<vmem>>, vector<80x8xbf16>
    %c8 = arith.constant 8 : index
    %c0_65 = arith.constant 0 : index
    %c0_66 = arith.constant 0 : index
    %83 = vector.load %arg6[%c8, %c0_65, %c0_66] : memref<9x8x8xbf16, #tpu.memory_space<vmem>>, vector<1x8x8xbf16>
    %84 = vector.shape_cast %83 : vector<1x8x8xbf16> to vector<8x8xbf16>
    %cst_67 = arith.constant dense<0.000000e+00> : vector<80x8xf32>
    %85 = tpu.matmul %82, %84, %cst_67 {dimension_numbers = #tpu.dot_dimension_numbers<[1], [0], [0], [1], [0, 0, 1, 1], [], []>} : vector<80x8xbf16>, vector<8x8xbf16>, vector<80x8xf32> -> vector<80x8xf32>
    %86 = arith.addf %81, %85 : vector<80x8xf32>
    %c0_68 = arith.constant 0 : index
    %c0_69 = arith.constant 0 : index
    %87 = vector.load %arg7[%c0_68, %c0_69] : memref<1x8xf32, #tpu.memory_space<vmem>>, vector<1x8xf32>
    %88 = vector.broadcast %87 : vector<1x8xf32> to vector<80x8xf32>
    %89 = arith.addf %86, %88 : vector<80x8xf32>
    %cst_70 = arith.constant 0.000000e+00 : f32
    %90 = vector.broadcast %cst_70 : f32 to vector<80x8xf32>
    %91 = arith.maximumf %89, %90 : vector<80x8xf32>
    %92 = arith.truncf %91 : vector<80x8xf32> to vector<80x8xbf16>
    %c0_71 = arith.constant 0 : index
    %c0_72 = arith.constant 0 : index
    %c0_73 = arith.constant 0 : index
    %c0_74 = arith.constant 0 : index
    %93 = vector.load %arg8[%c0_71, %c0_72, %c0_73, %c0_74] : memref<1x1x80x8xbf16, #tpu.memory_space<vmem>>, vector<1x1x80x8xbf16>
    %94 = vector.shape_cast %93 : vector<1x1x80x8xbf16> to vector<80x8xbf16>
    %95 = vector.shape_cast %92 : vector<80x8xbf16> to vector<1x1x80x8xbf16>
    tpu.vector_store %arg8[%c0_71, %c0_72, %c0_73, %c0_74], %95 {strides = array<i32>} : memref<1x1x80x8xbf16, #tpu.memory_space<vmem>>, vector<1x1x80x8xbf16>,
    return
  }
  func.func @transform_0(%arg0: i32, %arg1: i32) -> (i32, i32, i32, i32) {
    %c1_i32 = arith.constant 1 : i32
    %0 = arith.subi %arg1, %c1_i32 : i32
    %c0_i32 = arith.constant 0 : i32
    %1 = arith.maxsi %0, %c0_i32 : i32
    %c0_i32_0 = arith.constant 0 : i32
    %c0_i32_1 = arith.constant 0 : i32
    %c0_i32_2 = arith.constant 0 : i32
    return %arg0, %1, %c0_i32_0, %c0_i32_1 : i32, i32, i32, i32
  }
  func.func @transform_1(%arg0: i32, %arg1: i32) -> (i32, i32, i32, i32) {
    %c0_i32 = arith.constant 0 : i32
    %c0_i32_0 = arith.constant 0 : i32
    %c0_i32_1 = arith.constant 0 : i32
    return %arg0, %arg1, %c0_i32, %c0_i32_0 : i32, i32, i32, i32
  }
  func.func @transform_2(%arg0: i32, %arg1: i32) -> (i32, i32, i32, i32) {
    %c1_i32 = arith.constant 1 : i32
    %0 = arith.addi %arg1, %c1_i32 : i32
    %c3_i32 = arith.constant 3 : i32
    %1 = arith.minsi %0, %c3_i32 : i32
    %c0_i32 = arith.constant 0 : i32
    %c0_i32_0 = arith.constant 0 : i32
    %c0_i32_1 = arith.constant 0 : i32
    return %arg0, %1, %c0_i32, %c0_i32_0 : i32, i32, i32, i32
  }
  func.func @transform_3(%arg0: i32, %arg1: i32) -> (i32, i32, i32, i32) {
    %c0_i32 = arith.constant 0 : i32
    %c0_i32_0 = arith.constant 0 : i32
    %c0_i32_1 = arith.constant 0 : i32
    return %arg0, %arg1, %c0_i32, %c0_i32_0 : i32, i32, i32, i32
  }
  func.func @transform_4(%arg0: i32, %arg1: i32) -> (i32, i32, i32) {
    %c0_i32 = arith.constant 0 : i32
    %c0_i32_0 = arith.constant 0 : i32
    %c0_i32_1 = arith.constant 0 : i32
    %c0_i32_2 = arith.constant 0 : i32
    return %c0_i32, %c0_i32_0, %c0_i32_1 : i32, i32, i32
  }
  func.func @transform_5(%arg0: i32, %arg1: i32) -> (i32, i32) {
    %c0_i32 = arith.constant 0 : i32
    %c0_i32_0 = arith.constant 0 : i32
    %c0_i32_1 = arith.constant 0 : i32
    return %c0_i32, %c0_i32_0 : i32, i32
  }
  func.func @transform_6(%arg0: i32, %arg1: i32) -> (i32, i32, i32, i32) {
    %c0_i32 = arith.constant 0 : i32
    %c0_i32_0 = arith.constant 0 : i32
    %c0_i32_1 = arith.constant 0 : i32
    return %arg0, %arg1, %c0_i32, %c0_i32_0 : i32, i32, i32, i32
  }
}

module attributes {stable_mosaic.version = 11 : i64} {
  func.func @_pw_bn_add_relu_kernel(%arg0: i32, %arg1: memref<512x8xbf16, #tpu.memory_space<vmem>>, %arg2: memref<8x32xbf16, #tpu.memory_space<vmem>>, %arg3: memref<1x32xf32, #tpu.memory_space<vmem>>, %arg4: memref<512x32xbf16, #tpu.memory_space<vmem>>, %arg5: memref<512x32xf32, #tpu.memory_space<vmem>>) attributes {dimension_semantics = [#tpu.dimension_semantics<parallel>], iteration_bounds = array<i64: 1>, scalar_prefetch = 0 : i64, scratch_operands = 0 : i64, tpu.core_type = #tpu.core_type<tc>, window_params = [{transform_indices = @transform_0, window_bounds = array<i64: 512, 8>}, {pipeline_mode = #tpu.pipeline_mode<synchronous>, transform_indices = @transform_1, window_bounds = array<i64: 8, 32>}, {pipeline_mode = #tpu.pipeline_mode<synchronous>, transform_indices = @transform_2, window_bounds = array<i64: 1, 32>}, {transform_indices = @transform_3, window_bounds = array<i64: 512, 32>}, {transform_indices = @transform_4, window_bounds = array<i64: 512, 32>}]} {
    %c0 = arith.constant 0 : index
    %c0_0 = arith.constant 0 : index
    %0 = vector.load %arg1[%c0, %c0_0] : memref<512x8xbf16, #tpu.memory_space<vmem>>, vector<512x8xbf16>
    %c0_1 = arith.constant 0 : index
    %c0_2 = arith.constant 0 : index
    %1 = vector.load %arg2[%c0_1, %c0_2] : memref<8x32xbf16, #tpu.memory_space<vmem>>, vector<8x32xbf16>
    %cst = arith.constant dense<0.000000e+00> : vector<512x32xf32>
    %2 = tpu.matmul %0, %1, %cst {dimension_numbers = #tpu.dot_dimension_numbers<[1], [0], [0], [1], [0, 0, 1, 1], [], []>} : vector<512x8xbf16>, vector<8x32xbf16>, vector<512x32xf32> -> vector<512x32xf32>
    %c0_3 = arith.constant 0 : index
    %c0_4 = arith.constant 0 : index
    %3 = vector.load %arg3[%c0_3, %c0_4] : memref<1x32xf32, #tpu.memory_space<vmem>>, vector<1x32xf32>
    %4 = vector.broadcast %3 : vector<1x32xf32> to vector<512x32xf32>
    %5 = arith.addf %2, %4 : vector<512x32xf32>
    %c0_5 = arith.constant 0 : index
    %c0_6 = arith.constant 0 : index
    %6 = vector.load %arg4[%c0_5, %c0_6] : memref<512x32xbf16, #tpu.memory_space<vmem>>, vector<512x32xbf16>
    %7 = arith.extf %6 : vector<512x32xbf16> to vector<512x32xf32>
    %8 = arith.addf %5, %7 : vector<512x32xf32>
    %cst_7 = arith.constant 0.000000e+00 : f32
    %9 = vector.broadcast %cst_7 : f32 to vector<512x32xf32>
    %10 = arith.maximumf %8, %9 : vector<512x32xf32>
    %c0_8 = arith.constant 0 : index
    %c0_9 = arith.constant 0 : index
    %11 = vector.load %arg5[%c0_8, %c0_9] : memref<512x32xf32, #tpu.memory_space<vmem>>, vector<512x32xf32>
    tpu.vector_store %arg5[%c0_8, %c0_9], %10 {strides = array<i32>} : memref<512x32xf32, #tpu.memory_space<vmem>>, vector<512x32xf32>,
    return
  }
  func.func @transform_0(%arg0: i32) -> (i32, i32) {
    %c0_i32 = arith.constant 0 : i32
    %c0_i32_0 = arith.constant 0 : i32
    return %arg0, %c0_i32 : i32, i32
  }
  func.func @transform_1(%arg0: i32) -> (i32, i32) {
    %c0_i32 = arith.constant 0 : i32
    %c0_i32_0 = arith.constant 0 : i32
    %c0_i32_1 = arith.constant 0 : i32
    return %c0_i32, %c0_i32_0 : i32, i32
  }
  func.func @transform_2(%arg0: i32) -> (i32, i32) {
    %c0_i32 = arith.constant 0 : i32
    %c0_i32_0 = arith.constant 0 : i32
    %c0_i32_1 = arith.constant 0 : i32
    return %c0_i32, %c0_i32_0 : i32, i32
  }
  func.func @transform_3(%arg0: i32) -> (i32, i32) {
    %c0_i32 = arith.constant 0 : i32
    %c0_i32_0 = arith.constant 0 : i32
    return %arg0, %c0_i32 : i32, i32
  }
  func.func @transform_4(%arg0: i32) -> (i32, i32) {
    %c0_i32 = arith.constant 0 : i32
    %c0_i32_0 = arith.constant 0 : i32
    return %arg0, %c0_i32 : i32, i32
  }
}

</mosaic_0001>

<llo_original>
// kernel: mul.45
$region0: #{mul.45}
  %s0 = inlined_call_operand.vmem [shape: f32[16,3], index: 0, kind: input, shape index: {}]
  %s1 = inlined_call_operand.vmem [shape: f32[2,8,3], index: 1, kind: output, shape index: {}]
  $region1: #{mul.45} parent=0
    #allocation0 [shape = 'u8[12288]{0}', space=vmem, size = 0x3000, scoped, tag = 'scoped mem for output reshape']
    #allocation1 [shape = 'u8[4096]{0}', space=vmem, size = 0x1000, scoped, tag = 'scoped mem for input reshape']
    %s3 = sshllo.u32 0, 4
    %v4 = vld [vmem:[%s0] sm:%s3]
    %5 = vst [vmem:[#allocation1] sm:%s3] %v4
    %v6 = vld [vmem:[#allocation1] sm:$0x7]
    %vm7 = vcmask 64512
    %8 = vst.msk [vmem:[#allocation0] ss:$8 sm:$0x7] %vm7, %v6
    %v9 = vld [vmem:[#allocation1] sm:$0x7]
    %10 = vrot.lane.b32.xlu0 %v9, 120
    %v11 = vpop.permute.xlu0 %10
    %vm12 = vcmask 64512
    %s13 = scalar_lea.vmem [#allocation0], 1
    %14 = vst.msk [vmem:[%s13] ss:$8 sm:$0x7] %vm12, %v11
    %s16 = sshllo.u32 0, 2
    %v18 = vld [vmem:[#allocation0] sm:%s16]
    %s19 = sshllo.u32 0, 2
    %20 = vst [vmem:[%s1] sm:%s19] %v18
    %s21 = scalar_lea.vmem [#allocation0], 8
    %v22 = vld [vmem:[%s21] sm:%s16]
    %s23 = sshllo.u32 0, 2
    %s24 = scalar_lea.vmem %s1, 2
    %25 = vst [vmem:[%s24] sm:%s23] %v22
    %s26 = scalar_lea.vmem [#allocation0], 16
    %v27 = vld [vmem:[%s26] sm:%s16]
    %s28 = sshllo.u32 0, 2
    %s29 = smul.addr 2, 2
    %s30 = scalar_lea.vmem %s1, %s29
    %31 = vst [vmem:[%s30] sm:%s28] %v27

// kernel: tablock_forward.3
$region0: #{tablock_forward.3}
  #allocation0 [shape = 'u32[]', space=smem, size = 0x4, offset = 0x4, fixed_abs, tag = 'smem constant byte address 0x4 - core index']
  #allocation1 [shape = 'u32[144,128]{1,0:T(1,128)}', space=vmem, size = 0x12000, scoped, tag = 'internal scratch']
  %s0 = inlined_call_operand.hbm [shape: bf16[512,32], index: 0, kind: input, shape index: {}]
  %s1 = inlined_call_operand.hbm [shape: bf16[32,8], index: 1, kind: input, shape index: {}]
  %s2 = inlined_call_operand.hbm [shape: f32[1,8], index: 2, kind: input, shape index: {}]
  %s3 = inlined_call_operand.hbm [shape: bf16[512,8], index: 3, kind: output, shape index: {0}]
  %s4 = inlined_call_operand.hbm [shape: f32[1,8,8], index: 4, kind: output, shape index: {1}]
  %5 = xla_tuple %s3, %s4
  %s6 = sld [smem:[#allocation0]]
  $region42: #{tablock_forward.3} parent=0
    _
  %s8 = ssub.s32 1, %s6
  %s9 = scalar_select 0, %s8, %s6
  $region1: #{tablock_forward.3} parent=0
    #allocation2 [shape = 'u8[131072]{0}', space=vmem, size = 0x20000, scoped, tag = 'input window, operand 0, single buffered']
    #allocation3 [shape = 's32[1]{0}', space=sflag, size = 0x4, scoped, tag = 'scoped memory for tablock_forward.3']
    #allocation4 [shape = 's32[1]{0}', space=sflag, size = 0x4, scoped, tag = 'scoped memory for tablock_forward.3']
    #allocation5 [shape = 'u8[8192]{0}', space=vmem, size = 0x2000, scoped, tag = 'input window, operand 1, single buffered']
    #allocation6 [shape = 's32[1]{0}', space=sflag, size = 0x4, scoped, tag = 'scoped memory for tablock_forward.3']
    #allocation7 [shape = 'u8[512]{0}', space=vmem, size = 0x400, scoped, tag = 'input window, operand 2, single buffered']
    #allocation8 [shape = 'u8[131072]{0}', space=vmem, size = 0x20000, scoped, tag = 'output window, operand 0, single buffered']
    #allocation9 [shape = 'u8[4096]{0}', space=vmem, size = 0x1000, scoped, tag = 'output window, operand 1, single buffered']
    #allocation10 [shape = 's32[1]{0}', space=sflag, size = 0x4, scoped, tag = 'scoped memory for tablock_forward.3']
    %10 = vsyncpa [#allocation3], 0
    %11 = vsyncpa [#allocation6], 0
    %12 = vsyncpa [#allocation4], 0
    %13 = vsyncpa [#allocation10], 0
    // Predicated region
    $region2: #{tablock_forward.3} parent=1 // pred_check
      _
    $region3: #{tablock_forward.3} parent=1 // pred_check_branch
      %15 = sbr.rel (0) target = $region5
    $region4: #{tablock_forward.3} parent=1 // pred_region
      %s17 = ssub.s32 4096, 4096
      %18 = vsyncadd [#allocation3], %s17
      %s19 = sshll.u32 [#allocation2], 4
      %s20 = int_to_ptr.vmem [resolvable:$true] %s19
      %25 = dma.hbm_to_vmem [thread:$0]  %s0, 4096, %s20, [#allocation3], 64, 64, 4
    $region5: #{tablock_forward.3} parent=1 // pred_fallthru
      _
    // Predicated region
    $region6: #{tablock_forward.3} parent=1 // pred_check
      _
    $region7: #{tablock_forward.3} parent=1 // pred_check_branch
      %27 = sbr.rel (0) target = $region9
    $region8: #{tablock_forward.3} parent=1 // pred_region
      %s29 = ssub.s32 256, 256
      %30 = vsyncadd [#allocation6], %s29
      %s31 = sshll.u32 [#allocation5], 4
      %s32 = int_to_ptr.vmem [resolvable:$true] %s31
      %37 = dma.hbm_to_vmem [thread:$0]  %s1, 256, %s32, [#allocation6], 64, 64, 4
    $region9: #{tablock_forward.3} parent=1 // pred_fallthru
      _
    // Predicated region
    $region10: #{tablock_forward.3} parent=1 // pred_check
      _
    $region11: #{tablock_forward.3} parent=1 // pred_check_branch
      %39 = sbr.rel (0) target = $region13
    $region12: #{tablock_forward.3} parent=1 // pred_region
      %s41 = ssub.s32 16, 16
      %42 = vsyncadd [#allocation6], %s41
      %s44 = sshll.u32 [#allocation7], 4
      %s45 = int_to_ptr.vmem [resolvable:$true] %s44
      %47 = dma.hbm_to_vmem [thread:$0]  %s2, 16, %s45, [#allocation6]
    $region13: #{tablock_forward.3} parent=1 // pred_fallthru
      _
    // Predicated region
    $region14: #{tablock_forward.3} parent=1 // pred_check
      _
    $region15: #{tablock_forward.3} parent=1 // pred_check_branch
      %49 = sbr.rel (0) target = $region17
    $region16: #{tablock_forward.3} parent=1 // pred_region
      %50 = dma.done [#allocation3], 4096
    $region17: #{tablock_forward.3} parent=1 // pred_fallthru
      _
    // Predicated region
    $region18: #{tablock_forward.3} parent=1 // pred_check
      _
    $region19: #{tablock_forward.3} parent=1 // pred_check_branch
      %52 = sbr.rel (0) target = $region21
    $region20: #{tablock_forward.3} parent=1 // pred_region
      %53 = dma.done [#allocation6], 256
    $region21: #{tablock_forward.3} parent=1 // pred_fallthru
      _
    // Predicated region
    $region22: #{tablock_forward.3} parent=1 // pred_check
      _
    $region23: #{tablock_forward.3} parent=1 // pred_check_branch
      %55 = sbr.rel (0) target = $region25
    $region24: #{tablock_forward.3} parent=1 // pred_region
      %56 = dma.done [#allocation6], 16
    $region25: #{tablock_forward.3} parent=1 // pred_fallthru
      _
    %v58 = vld [vmem:[#allocation2] sm:$0xf]
    %v59 = vld [vmem:[#allocation2 + $0x4] sm:$0xf]
    %v60 = vld [vmem:[#allocation2 + $0x8] sm:$0xf]
    %v61 = vld [vmem:[#allocation2 + $0xc] sm:$0xf]
    %v62 = vld [vmem:[#allocation2 + $0x10] sm:$0xf]
    %v63 = vld [vmem:[#allocation2 + $0x14] sm:$0xf]
    %v64 = vld [vmem:[#allocation2 + $0x18] sm:$0xf]
    %v65 = vld [vmem:[#allocation2 + $0x1c] sm:$0xf]
    %v66 = vld [vmem:[#allocation2 + $0x20] sm:$0xf]
    %v67 = vld [vmem:[#allocation2 + $0x24] sm:$0xf]
    %v68 = vld [vmem:[#allocation2 + $0x28] sm:$0xf]
    %v69 = vld [vmem:[#allocation2 + $0x2c] sm:$0xf]
    %v70 = vld [vmem:[#allocation2 + $0x30] sm:$0xf]
    %v71 = vld [vmem:[#allocation2 + $0x34] sm:$0xf]
    %v72 = vld [vmem:[#allocation2 + $0x38] sm:$0xf]
    %v73 = vld [vmem:[#allocation2 + $0x3c] sm:$0xf]
    %v74 = vld [vmem:[#allocation2 + $0x40] sm:$0xf]
    %v75 = vld [vmem:[#allocation2 + $0x44] sm:$0xf]
    %v76 = vld [vmem:[#allocation2 + $0x48] sm:$0xf]
    %v77 = vld [vmem:[#allocation2 + $0x4c] sm:$0xf]
    %v78 = vld [vmem:[#allocation2 + $0x50] sm:$0xf]
    %v79 = vld [vmem:[#allocation2 + $0x54] sm:$0xf]
    %v80 = vld [vmem:[#allocation2 + $0x58] sm:$0xf]
    %v81 = vld [vmem:[#allocation2 + $0x5c] sm:$0xf]
    %v82 = vld [vmem:[#allocation2 + $0x60] sm:$0xf]
    %v83 = vld [vmem:[#allocation2 + $0x64] sm:$0xf]
    %v84 = vld [vmem:[#allocation2 + $0x68] sm:$0xf]
    %v85 = vld [vmem:[#allocation2 + $0x6c] sm:$0xf]
    %v86 = vld [vmem:[#allocation2 + $0x70] sm:$0xf]
    %v87 = vld [vmem:[#allocation2 + $0x74] sm:$0xf]
    %v88 = vld [vmem:[#allocation2 + $0x78] sm:$0xf]
    %v89 = vld [vmem:[#allocation2 + $0x7c] sm:$0xf]
    %v90 = vld [vmem:[#allocation2 + $0x80] sm:$0xf]
    %v91 = vld [vmem:[#allocation2 + $0x84] sm:$0xf]
    %v92 = vld [vmem:[#allocation2 + $0x88] sm:$0xf]
    %v93 = vld [vmem:[#allocation2 + $0x8c] sm:$0xf]
    %v94 = vld [vmem:[#allocation2 + $0x90] sm:$0xf]
    %v95 = vld [vmem:[#allocation2 + $0x94] sm:$0xf]
    %v96 = vld [vmem:[#allocation2 + $0x98] sm:$0xf]
    %v97 = vld [vmem:[#allocation2 + $0x9c] sm:$0xf]
    %v98 = vld [vmem:[#allocation2 + $0xa0] sm:$0xf]
    %v99 = vld [vmem:[#allocation2 + $0xa4] sm:$0xf]
    %v100 = vld [vmem:[#allocation2 + $0xa8] sm:$0xf]
    %v101 = vld [vmem:[#allocation2 + $0xac] sm:$0xf]
    %v102 = vld [vmem:[#allocation2 + $0xb0] sm:$0xf]
    %v103 = vld [vmem:[#allocation2 + $0xb4] sm:$0xf]
    %v104 = vld [vmem:[#allocation2 + $0xb8] sm:$0xf]
    %v105 = vld [vmem:[#allocation2 + $0xbc] sm:$0xf]
    %v106 = vld [vmem:[#allocation2 + $0xc0] sm:$0xf]
    %v107 = vld [vmem:[#allocation2 + $0xc4] sm:$0xf]
    %v108 = vld [vmem:[#allocation2 + $0xc8] sm:$0xf]
    %v109 = vld [vmem:[#allocation2 + $0xcc] sm:$0xf]
    %v110 = vld [vmem:[#allocation2 + $0xd0] sm:$0xf]
    %v111 = vld [vmem:[#allocation2 + $0xd4] sm:$0xf]
    %v112 = vld [vmem:[#allocation2 + $0xd8] sm:$0xf]
    %v113 = vld [vmem:[#allocation2 + $0xdc] sm:$0xf]
    %v114 = vld [vmem:[#allocation2 + $0xe0] sm:$0xf]
    %v115 = vld [vmem:[#allocation2 + $0xe4] sm:$0xf]
    %v116 = vld [vmem:[#allocation2 + $0xe8] sm:$0xf]
    %v117 = vld [vmem:[#allocation2 + $0xec] sm:$0xf]
    %v118 = vld [vmem:[#allocation2 + $0xf0] sm:$0xf]
    %v119 = vld [vmem:[#allocation2 + $0xf4] sm:$0xf]
    %v120 = vld [vmem:[#allocation2 + $0xf8] sm:$0xf]
    %v121 = vld [vmem:[#allocation2 + $0xfc] sm:$0xf]
    %v122 = vld [vmem:[#allocation5] sm:$0xf]
    %v123 = vld [vmem:[#allocation5 + $0x4] sm:$0xf]
    %v124 = vld [vmem:[#allocation5 + $0x8] sm:$0xf]
    %v125 = vld [vmem:[#allocation5 + $0xc] sm:$0xf]
    %v126 = vld [vmem:[#allocation7] sm:$0x1]
    %v128 = vlaneseq
    %v129 = vshrl.u32 %v128, 7
    %v130 = vsub.s32 0, %v129
    %v131 = vrot.slane %v126, %v130
    %v197 = vunpack.c.l.b16 %v58
    %v198 = vunpack.c.l.b16 %v59
    %v199 = vunpack.c.l.b16 %v60
    %v200 = vunpack.c.l.b16 %v61
    %v201 = vunpack.c.l.b16 %v62
    %v202 = vunpack.c.l.b16 %v63
    %v203 = vunpack.c.l.b16 %v64
    %v204 = vunpack.c.l.b16 %v65
    %v205 = vunpack.c.l.b16 %v66
    %v206 = vunpack.c.l.b16 %v67
    %v207 = vunpack.c.l.b16 %v68
    %v208 = vunpack.c.l.b16 %v69
    %v209 = vunpack.c.l.b16 %v70
    %v210 = vunpack.c.l.b16 %v71
    %v211 = vunpack.c.l.b16 %v72
    %v212 = vunpack.c.l.b16 %v73
    %v213 = vunpack.c.l.b16 %v74
    %v214 = vunpack.c.l.b16 %v75
    %v215 = vunpack.c.l.b16 %v76
    %v216 = vunpack.c.l.b16 %v77
    %v217 = vunpack.c.l.b16 %v78
    %v218 = vunpack.c.l.b16 %v79
    %v219 = vunpack.c.l.b16 %v80
    %v220 = vunpack.c.l.b16 %v81
    %v221 = vunpack.c.l.b16 %v82
    %v222 = vunpack.c.l.b16 %v83
    %v223 = vunpack.c.l.b16 %v84
    %v224 = vunpack.c.l.b16 %v85
    %v225 = vunpack.c.l.b16 %v86
    %v226 = vunpack.c.l.b16 %v87
    %v227 = vunpack.c.l.b16 %v88
    %v228 = vunpack.c.l.b16 %v89
    %v229 = vunpack.c.l.b16 %v90
    %v230 = vunpack.c.l.b16 %v91
    %v231 = vunpack.c.l.b16 %v92
    %v232 = vunpack.c.l.b16 %v93
    %v233 = vunpack.c.l.b16 %v94
    %v234 = vunpack.c.l.b16 %v95
    %v235 = vunpack.c.l.b16 %v96
    %v236 = vunpack.c.l.b16 %v97
    %v237 = vunpack.c.l.b16 %v98
    %v238 = vunpack.c.l.b16 %v99
    %v239 = vunpack.c.l.b16 %v100
    %v240 = vunpack.c.l.b16 %v101
    %v241 = vunpack.c.l.b16 %v102
    %v242 = vunpack.c.l.b16 %v103
    %v243 = vunpack.c.l.b16 %v104
    %v244 = vunpack.c.l.b16 %v105
    %v245 = vunpack.c.l.b16 %v106
    %v246 = vunpack.c.l.b16 %v107
    %v247 = vunpack.c.l.b16 %v108
    %v248 = vunpack.c.l.b16 %v109
    %v249 = vunpack.c.l.b16 %v110
    %v250 = vunpack.c.l.b16 %v111
    %v251 = vunpack.c.l.b16 %v112
    %v252 = vunpack.c.l.b16 %v113
    %v253 = vunpack.c.l.b16 %v114
    %v254 = vunpack.c.l.b16 %v115
    %v255 = vunpack.c.l.b16 %v116
    %v256 = vunpack.c.l.b16 %v117
    %v257 = vunpack.c.l.b16 %v118
    %v258 = vunpack.c.l.b16 %v119
    %v259 = vunpack.c.l.b16 %v120
    %v260 = vunpack.c.l.b16 %v121
    %v261 = vpack.c.b16 %v198, %v197
    %v262 = vpack.c.b16 %v200, %v199
    %v263 = vpack.c.b16 %v202, %v201
    %v264 = vpack.c.b16 %v204, %v203
    %v265 = vpack.c.b16 %v206, %v205
    %v266 = vpack.c.b16 %v208, %v207
    %v267 = vpack.c.b16 %v210, %v209
    %v268 = vpack.c.b16 %v212, %v211
    %v269 = vpack.c.b16 %v214, %v213
    %v270 = vpack.c.b16 %v216, %v215
    %v271 = vpack.c.b16 %v218, %v217
    %v272 = vpack.c.b16 %v220, %v219
    %v273 = vpack.c.b16 %v222, %v221
    %v274 = vpack.c.b16 %v224, %v223
    %v275 = vpack.c.b16 %v226, %v225
    %v276 = vpack.c.b16 %v228, %v227
    %v277 = vpack.c.b16 %v230, %v229
    %v278 = vpack.c.b16 %v232, %v231
    %v279 = vpack.c.b16 %v234, %v233
    %v280 = vpack.c.b16 %v236, %v235
    %v281 = vpack.c.b16 %v238, %v237
    %v282 = vpack.c.b16 %v240, %v239
    %v283 = vpack.c.b16 %v242, %v241
    %v284 = vpack.c.b16 %v244, %v243
    %v285 = vpack.c.b16 %v246, %v245
    %v286 = vpack.c.b16 %v248, %v247
    %v287 = vpack.c.b16 %v250, %v249
    %v288 = vpack.c.b16 %v252, %v251
    %v289 = vpack.c.b16 %v254, %v253
    %v290 = vpack.c.b16 %v256, %v255
    %v291 = vpack.c.b16 %v258, %v257
    %v292 = vpack.c.b16 %v260, %v259
    %v297 = vunpack.c.l.b16 %v122
    %v298 = vunpack.c.l.b16 %v123
    %v299 = vunpack.c.l.b16 %v124
    %v300 = vunpack.c.l.b16 %v125
    %v301 = vpack.c.b16 %v298, %v297
    %v302 = vpack.c.b16 %v300, %v299
    %vm305 = vcmask 261120
    %v307 = vsel %vm305, %v261, 0
    %v310 = vsel %vm305, %v262, 0
    %v313 = vsel %vm305, %v263, 0
    %v316 = vsel %vm305, %v264, 0
    %v319 = vsel %vm305, %v265, 0
    %v322 = vsel %vm305, %v266, 0
    %v325 = vsel %vm305, %v267, 0
    %v328 = vsel %vm305, %v268, 0
    %v331 = vsel %vm305, %v269, 0
    %v334 = vsel %vm305, %v270, 0
    %v337 = vsel %vm305, %v271, 0
    %v340 = vsel %vm305, %v272, 0
    %v343 = vsel %vm305, %v273, 0
    %v346 = vsel %vm305, %v274, 0
    %v349 = vsel %vm305, %v275, 0
    %v352 = vsel %vm305, %v276, 0
    %v355 = vsel %vm305, %v277, 0
    %v358 = vsel %vm305, %v278, 0
    %v361 = vsel %vm305, %v279, 0
    %v364 = vsel %vm305, %v280, 0
    %v367 = vsel %vm305, %v281, 0
    %v370 = vsel %vm305, %v282, 0
    %v373 = vsel %vm305, %v283, 0
    %v376 = vsel %vm305, %v284, 0
    %v379 = vsel %vm305, %v285, 0
    %v382 = vsel %vm305, %v286, 0
    %v385 = vsel %vm305, %v287, 0
    %v388 = vsel %vm305, %v288, 0
    %v391 = vsel %vm305, %v289, 0
    %v394 = vsel %vm305, %v290, 0
    %v397 = vsel %vm305, %v291, 0
    %v400 = vsel %vm305, %v292, 0
    %402 = vmatprep.subr.bf16.mxu0 0
    %403 = vmatpush1.bf16.msra.mxu0 %v301
    %404 = vmatprep.subr.bf16.mxu0 0
    %405 = vmatpush1.bf16.msra.mxu0 %v302
    %406 = vmatprep.subr.bf16.mxu0 0
    %407 = vmatpush1.bf16.msra.mxu0 0
    %408 = vmatprep.subr.bf16.mxu0 0
    %409 = vmatpush1.bf16.msra.mxu0 0
    %410 = vmatprep.subr.bf16.mxu0 0
    %411 = vmatpush1.bf16.msra.mxu0 0
    %412 = vmatprep.subr.bf16.mxu0 0
    %413 = vmatpush1.bf16.msra.mxu0 0
    %414 = vmatprep.subr.bf16.mxu0 0
    %415 = vmatpush1.bf16.msra.mxu0 0
    %416 = vmatprep.subr.bf16.mxu0 0
    %417 = vmatpush1.bf16.msra.mxu0 0
    %418 = vmatprep.subr.bf16.mxu0 0
    %419 = vmatpush1.bf16.msra.mxu0 0
    %420 = vmatprep.subr.bf16.mxu0 0
    %421 = vmatpush1.bf16.msra.mxu0 0
    %422 = vmatprep.subr.bf16.mxu0 0
    %423 = vmatpush1.bf16.msra.mxu0 0
    %424 = vmatprep.subr.bf16.mxu0 0
    %425 = vmatpush1.bf16.msra.mxu0 0
    %426 = vmatprep.subr.bf16.mxu0 0
    %427 = vmatpush1.bf16.msra.mxu0 0
    %428 = vmatprep.subr.bf16.mxu0 0
    %429 = vmatpush1.bf16.msra.mxu0 0
    %430 = vmatprep.subr.bf16.mxu0 0
    %431 = vmatpush1.bf16.msra.mxu0 0
    %432 = vmatprep.subr.bf16.mxu0 0
    %433 = vmatpush1.bf16.msra.mxu0 0
    %434 = vmatprep.mubr.bf16.mxu0 0
    %435 = vmatmul.mubr.bf16.gmra.mrb[0].mxu0 %v307
    %v436 = vpop.f32.mrb[0].mxu0
    %v437 = vadd.f32 %v131, %v436
    %v438 = vpop.f32.mrb[0].mxu0
    %v439 = vpop.f32.mrb[0].mxu0
    %v440 = vadd.f32 %v131, %v439
    %v441 = vpop.f32.mrb[0].mxu0
    %442 = vmatprep.mubr.bf16.mxu0 0
    %443 = vmatmul.mubr.bf16.gmra.mrb[0].mxu0 %v310
    %v444 = vpop.f32.mrb[0].mxu0
    %v445 = vadd.f32 %v131, %v444
    %v446 = vpop.f32.mrb[0].mxu0
    %v447 = vpop.f32.mrb[0].mxu0
    %v448 = vadd.f32 %v131, %v447
    %v449 = vpop.f32.mrb[0].mxu0
    %450 = vmatprep.mubr.bf16.mxu0 0
    %451 = vmatmul.mubr.bf16.gmra.mrb[0].mxu0 %v313
    %v452 = vpop.f32.mrb[0].mxu0
    %v453 = vadd.f32 %v131, %v452
    %v454 = vpop.f32.mrb[0].mxu0
    %v455 = vpop.f32.mrb[0].mxu0
    %v456 = vadd.f32 %v131, %v455
    %v457 = vpop.f32.mrb[0].mxu0
    %458 = vmatprep.mubr.bf16.mxu0 0
    %459 = vmatmul.mubr.bf16.gmra.mrb[0].mxu0 %v316
    %v460 = vpop.f32.mrb[0].mxu0
    %v461 = vadd.f32 %v131, %v460
    %v462 = vpop.f32.mrb[0].mxu0
    %v463 = vpop.f32.mrb[0].mxu0
    %v464 = vadd.f32 %v131, %v463
    %v465 = vpop.f32.mrb[0].mxu0
    %466 = vmatprep.mubr.bf16.mxu0 0
    %467 = vmatmul.mubr.bf16.gmra.mrb[0].mxu0 %v319
    %v468 = vpop.f32.mrb[0].mxu0
    %v469 = vadd.f32 %v131, %v468
    %v470 = vpop.f32.mrb[0].mxu0
    %v471 = vpop.f32.mrb[0].mxu0
    %v472 = vadd.f32 %v131, %v471
    %v473 = vpop.f32.mrb[0].mxu0
    %474 = vmatprep.mubr.bf16.mxu0 0
    %475 = vmatmul.mubr.bf16.gmra.mrb[0].mxu0 %v322
    %v476 = vpop.f32.mrb[0].mxu0
    %v477 = vadd.f32 %v131, %v476
    %v478 = vpop.f32.mrb[0].mxu0
    %v479 = vpop.f32.mrb[0].mxu0
    %v480 = vadd.f32 %v131, %v479
    %v481 = vpop.f32.mrb[0].mxu0
    %482 = vmatprep.mubr.bf16.mxu0 0
    %483 = vmatmul.mubr.bf16.gmra.mrb[0].mxu0 %v325
    %v484 = vpop.f32.mrb[0].mxu0
    %v485 = vadd.f32 %v131, %v484
    %v486 = vpop.f32.mrb[0].mxu0
    %v487 = vpop.f32.mrb[0].mxu0
    %v488 = vadd.f32 %v131, %v487
    %v489 = vpop.f32.mrb[0].mxu0
    %490 = vmatprep.mubr.bf16.mxu0 0
    %491 = vmatmul.mubr.bf16.gmra.mrb[0].mxu0 %v328
    %v492 = vpop.f32.mrb[0].mxu0
    %v493 = vadd.f32 %v131, %v492
    %v494 = vpop.f32.mrb[0].mxu0
    %v495 = vpop.f32.mrb[0].mxu0
    %v496 = vadd.f32 %v131, %v495
    %v497 = vpop.f32.mrb[0].mxu0
    %498 = vmatprep.mubr.bf16.mxu0 0
    %499 = vmatmul.mubr.bf16.gmra.mrb[0].mxu0 %v331
    %v500 = vpop.f32.mrb[0].mxu0
    %v501 = vadd.f32 %v131, %v500
    %v502 = vpop.f32.mrb[0].mxu0
    %v503 = vpop.f32.mrb[0].mxu0
    %v504 = vadd.f32 %v131, %v503
    %v505 = vpop.f32.mrb[0].mxu0
    %506 = vmatprep.mubr.bf16.mxu0 0
    %507 = vmatmul.mubr.bf16.gmra.mrb[0].mxu0 %v334
    %v508 = vpop.f32.mrb[0].mxu0
    %v509 = vadd.f32 %v131, %v508
    %v510 = vpop.f32.mrb[0].mxu0
    %v511 = vpop.f32.mrb[0].mxu0
    %v512 = vadd.f32 %v131, %v511
    %v513 = vpop.f32.mrb[0].mxu0
    %514 = vmatprep.mubr.bf16.mxu0 0
    %515 = vmatmul.mubr.bf16.gmra.mrb[0].mxu0 %v337
    %v516 = vpop.f32.mrb[0].mxu0
    %v517 = vadd.f32 %v131, %v516
    %v518 = vpop.f32.mrb[0].mxu0
    %v519 = vpop.f32.mrb[0].mxu0
    %v520 = vadd.f32 %v131, %v519
    %v521 = vpop.f32.mrb[0].mxu0
    %522 = vmatprep.mubr.bf16.mxu0 0
    %523 = vmatmul.mubr.bf16.gmra.mrb[0].mxu0 %v340
    %v524 = vpop.f32.mrb[0].mxu0
    %v525 = vadd.f32 %v131, %v524
    %v526 = vpop.f32.mrb[0].mxu0
    %v527 = vpop.f32.mrb[0].mxu0
    %v528 = vadd.f32 %v131, %v527
    %v529 = vpop.f32.mrb[0].mxu0
    %530 = vmatprep.mubr.bf16.mxu0 0
    %531 = vmatmul.mubr.bf16.gmra.mrb[0].mxu0 %v343
    %v532 = vpop.f32.mrb[0].mxu0
    %v533 = vadd.f32 %v131, %v532
    %v534 = vpop.f32.mrb[0].mxu0
    %v535 = vpop.f32.mrb[0].mxu0
    %v536 = vadd.f32 %v131, %v535
    %v537 = vpop.f32.mrb[0].mxu0
    %538 = vmatprep.mubr.bf16.mxu0 0
    %539 = vmatmul.mubr.bf16.gmra.mrb[0].mxu0 %v346
    %v540 = vpop.f32.mrb[0].mxu0
    %v541 = vadd.f32 %v131, %v540
    %v542 = vpop.f32.mrb[0].mxu0
    %v543 = vpop.f32.mrb[0].mxu0
    %v544 = vadd.f32 %v131, %v543
    %v545 = vpop.f32.mrb[0].mxu0
    %546 = vmatprep.mubr.bf16.mxu0 0
    %547 = vmatmul.mubr.bf16.gmra.mrb[0].mxu0 %v349
    %v548 = vpop.f32.mrb[0].mxu0
    %v549 = vadd.f32 %v131, %v548
    %v550 = vpop.f32.mrb[0].mxu0
    %v551 = vpop.f32.mrb[0].mxu0
    %v552 = vadd.f32 %v131, %v551
    %v553 = vpop.f32.mrb[0].mxu0
    %554 = vmatprep.mubr.bf16.mxu0 0
    %555 = vmatmul.mubr.bf16.gmra.mrb[0].mxu0 %v352
    %v556 = vpop.f32.mrb[0].mxu0
    %v557 = vadd.f32 %v131, %v556
    %v558 = vpop.f32.mrb[0].mxu0
    %v559 = vpop.f32.mrb[0].mxu0
    %v560 = vadd.f32 %v131, %v559
    %v561 = vpop.f32.mrb[0].mxu0
    %562 = vmatprep.mubr.bf16.mxu0 0
    %563 = vmatmul.mubr.bf16.gmra.mrb[0].mxu0 %v355
    %v564 = vpop.f32.mrb[0].mxu0
    %v565 = vadd.f32 %v131, %v564
    %v566 = vpop.f32.mrb[0].mxu0
    %v567 = vpop.f32.mrb[0].mxu0
    %v568 = vadd.f32 %v131, %v567
    %v569 = vpop.f32.mrb[0].mxu0
    %570 = vmatprep.mubr.bf16.mxu0 0
    %571 = vmatmul.mubr.bf16.gmra.mrb[0].mxu0 %v358
    %v572 = vpop.f32.mrb[0].mxu0
    %v573 = vadd.f32 %v131, %v572
    %v574 = vpop.f32.mrb[0].mxu0
    %v575 = vpop.f32.mrb[0].mxu0
    %v576 = vadd.f32 %v131, %v575
    %v577 = vpop.f32.mrb[0].mxu0
    %578 = vmatprep.mubr.bf16.mxu0 0
    %579 = vmatmul.mubr.bf16.gmra.mrb[0].mxu0 %v361
    %v580 = vpop.f32.mrb[0].mxu0
    %v581 = vadd.f32 %v131, %v580
    %v582 = vpop.f32.mrb[0].mxu0
    %v583 = vpop.f32.mrb[0].mxu0
    %v584 = vadd.f32 %v131, %v583
    %v585 = vpop.f32.mrb[0].mxu0
    %586 = vmatprep.mubr.bf16.mxu0 0
    %587 = vmatmul.mubr.bf16.gmra.mrb[0].mxu0 %v364
    %v588 = vpop.f32.mrb[0].mxu0
    %v589 = vadd.f32 %v131, %v588
    %v590 = vpop.f32.mrb[0].mxu0
    %v591 = vpop.f32.mrb[0].mxu0
    %v592 = vadd.f32 %v131, %v591
    %v593 = vpop.f32.mrb[0].mxu0
    %594 = vmatprep.mubr.bf16.mxu0 0
    %595 = vmatmul.mubr.bf16.gmra.mrb[0].mxu0 %v367
    %v596 = vpop.f32.mrb[0].mxu0
    %v597 = vadd.f32 %v131, %v596
    %v598 = vpop.f32.mrb[0].mxu0
    %v599 = vpop.f32.mrb[0].mxu0
    %v600 = vadd.f32 %v131, %v599
    %v601 = vpop.f32.mrb[0].mxu0
    %602 = vmatprep.mubr.bf16.mxu0 0
    %603 = vmatmul.mubr.bf16.gmra.mrb[0].mxu0 %v370
    %v604 = vpop.f32.mrb[0].mxu0
    %v605 = vadd.f32 %v131, %v604
    %v606 = vpop.f32.mrb[0].mxu0
    %v607 = vpop.f32.mrb[0].mxu0
    %v608 = vadd.f32 %v131, %v607
    %v609 = vpop.f32.mrb[0].mxu0
    %610 = vmatprep.mubr.bf16.mxu0 0
    %611 = vmatmul.mubr.bf16.gmra.mrb[0].mxu0 %v373
    %v612 = vpop.f32.mrb[0].mxu0
    %v613 = vadd.f32 %v131, %v612
    %v614 = vpop.f32.mrb[0].mxu0
    %v615 = vpop.f32.mrb[0].mxu0
    %v616 = vadd.f32 %v131, %v615
    %v617 = vpop.f32.mrb[0].mxu0
    %618 = vmatprep.mubr.bf16.mxu0 0
    %619 = vmatmul.mubr.bf16.gmra.mrb[0].mxu0 %v376
    %v620 = vpop.f32.mrb[0].mxu0
    %v621 = vadd.f32 %v131, %v620
    %v622 = vpop.f32.mrb[0].mxu0
    %v623 = vpop.f32.mrb[0].mxu0
    %v624 = vadd.f32 %v131, %v623
    %v625 = vpop.f32.mrb[0].mxu0
    %626 = vmatprep.mubr.bf16.mxu0 0
    %627 = vmatmul.mubr.bf16.gmra.mrb[0].mxu0 %v379
    %v628 = vpop.f32.mrb[0].mxu0
    %v629 = vadd.f32 %v131, %v628
    %v630 = vpop.f32.mrb[0].mxu0
    %v631 = vpop.f32.mrb[0].mxu0
    %v632 = vadd.f32 %v131, %v631
    %v633 = vpop.f32.mrb[0].mxu0
    %634 = vmatprep.mubr.bf16.mxu0 0
    %635 = vmatmul.mubr.bf16.gmra.mrb[0].mxu0 %v382
    %v636 = vpop.f32.mrb[0].mxu0
    %v637 = vadd.f32 %v131, %v636
    %v638 = vpop.f32.mrb[0].mxu0
    %v639 = vpop.f32.mrb[0].mxu0
    %v640 = vadd.f32 %v131, %v639
    %v641 = vpop.f32.mrb[0].mxu0
    %642 = vmatprep.mubr.bf16.mxu0 0
    %643 = vmatmul.mubr.bf16.gmra.mrb[0].mxu0 %v385
    %v644 = vpop.f32.mrb[0].mxu0
    %v645 = vadd.f32 %v131, %v644
    %v646 = vpop.f32.mrb[0].mxu0
    %v647 = vpop.f32.mrb[0].mxu0
    %v648 = vadd.f32 %v131, %v647
    %v649 = vpop.f32.mrb[0].mxu0
    %650 = vmatprep.mubr.bf16.mxu0 0
    %651 = vmatmul.mubr.bf16.gmra.mrb[0].mxu0 %v388
    %v652 = vpop.f32.mrb[0].mxu0
    %v653 = vadd.f32 %v131, %v652
    %v654 = vpop.f32.mrb[0].mxu0
    %v655 = vpop.f32.mrb[0].mxu0
    %v656 = vadd.f32 %v131, %v655
    %v657 = vpop.f32.mrb[0].mxu0
    %658 = vmatprep.mubr.bf16.mxu0 0
    %659 = vmatmul.mubr.bf16.gmra.mrb[0].mxu0 %v391
    %v660 = vpop.f32.mrb[0].mxu0
    %v661 = vadd.f32 %v131, %v660
    %v662 = vpop.f32.mrb[0].mxu0
    %v663 = vpop.f32.mrb[0].mxu0
    %v664 = vadd.f32 %v131, %v663
    %v665 = vpop.f32.mrb[0].mxu0
    %666 = vmatprep.mubr.bf16.mxu0 0
    %667 = vmatmul.mubr.bf16.gmra.mrb[0].mxu0 %v394
    %v668 = vpop.f32.mrb[0].mxu0
    %v669 = vadd.f32 %v131, %v668
    %v670 = vpop.f32.mrb[0].mxu0
    %v671 = vpop.f32.mrb[0].mxu0
    %v672 = vadd.f32 %v131, %v671
    %v673 = vpop.f32.mrb[0].mxu0
    %674 = vmatprep.mubr.bf16.mxu0 0
    %675 = vmatmul.mubr.bf16.gmra.mrb[0].mxu0 %v397
    %v676 = vpop.f32.mrb[0].mxu0
    %v677 = vadd.f32 %v131, %v676
    %v678 = vpop.f32.mrb[0].mxu0
    %v679 = vpop.f32.mrb[0].mxu0
    %v680 = vadd.f32 %v131, %v679
    %v681 = vpop.f32.mrb[0].mxu0
    %682 = vmatprep.mubr.bf16.mxu0 0
    %683 = vmatmul.mubr.bf16.gmra.mrb[0].mxu0 %v400
    %v684 = vpop.f32.mrb[0].mxu0
    %v685 = vadd.f32 %v131, %v684
    %v686 = vpop.f32.mrb[0].mxu0
    %v687 = vpop.f32.mrb[0].mxu0
    %v688 = vadd.f32 %v131, %v687
    %v689 = vpop.f32.mrb[0].mxu0
    %690 = vdwg.mxu0
    %v691 = vmax.f32 %v437, 0.0
    %v692 = vmax.f32 %v440, 0.0
    %v693 = vmax.f32 %v445, 0.0
    %v694 = vmax.f32 %v448, 0.0
    %v695 = vmax.f32 %v453, 0.0
    %v696 = vmax.f32 %v456, 0.0
    %v697 = vmax.f32 %v461, 0.0
    %v698 = vmax.f32 %v464, 0.0
    %v699 = vmax.f32 %v469, 0.0
    %v700 = vmax.f32 %v472, 0.0
    %v701 = vmax.f32 %v477, 0.0
    %v702 = vmax.f32 %v480, 0.0
    %v703 = vmax.f32 %v485, 0.0
    %v704 = vmax.f32 %v488, 0.0
    %v705 = vmax.f32 %v493, 0.0
    %v706 = vmax.f32 %v496, 0.0
    %v707 = vmax.f32 %v501, 0.0
    %v708 = vmax.f32 %v504, 0.0
    %v709 = vmax.f32 %v509, 0.0
    %v710 = vmax.f32 %v512, 0.0
    %v711 = vmax.f32 %v517, 0.0
    %v712 = vmax.f32 %v520, 0.0
    %v713 = vmax.f32 %v525, 0.0
    %v714 = vmax.f32 %v528, 0.0
    %v715 = vmax.f32 %v533, 0.0
    %v716 = vmax.f32 %v536, 0.0
    %v717 = vmax.f32 %v541, 0.0
    %v718 = vmax.f32 %v544, 0.0
    %v719 = vmax.f32 %v549, 0.0
    %v720 = vmax.f32 %v552, 0.0
    %v721 = vmax.f32 %v557, 0.0
    %v722 = vmax.f32 %v560, 0.0
    %v723 = vmax.f32 %v565, 0.0
    %v724 = vmax.f32 %v568, 0.0
    %v725 = vmax.f32 %v573, 0.0
    %v726 = vmax.f32 %v576, 0.0
    %v727 = vmax.f32 %v581, 0.0
    %v728 = vmax.f32 %v584, 0.0
    %v729 = vmax.f32 %v589, 0.0
    %v730 = vmax.f32 %v592, 0.0
    %v731 = vmax.f32 %v597, 0.0
    %v732 = vmax.f32 %v600, 0.0
    %v733 = vmax.f32 %v605, 0.0
    %v734 = vmax.f32 %v608, 0.0
    %v735 = vmax.f32 %v613, 0.0
    %v736 = vmax.f32 %v616, 0.0
    %v737 = vmax.f32 %v621, 0.0
    %v738 = vmax.f32 %v624, 0.0
    %v739 = vmax.f32 %v629, 0.0
    %v740 = vmax.f32 %v632, 0.0
    %v741 = vmax.f32 %v637, 0.0
    %v742 = vmax.f32 %v640, 0.0
    %v743 = vmax.f32 %v645, 0.0
    %v744 = vmax.f32 %v648, 0.0
    %v745 = vmax.f32 %v653, 0.0
    %v746 = vmax.f32 %v656, 0.0
    %v747 = vmax.f32 %v661, 0.0
    %v748 = vmax.f32 %v664, 0.0
    %v749 = vmax.f32 %v669, 0.0
    %v750 = vmax.f32 %v672, 0.0
    %v751 = vmax.f32 %v677, 0.0
    %v752 = vmax.f32 %v680, 0.0
    %v753 = vmax.f32 %v685, 0.0
    %v754 = vmax.f32 %v688, 0.0
    %v755 = vpack.c.bf16 %v692, %v691
    %v756 = vpack.c.bf16 %v694, %v693
    %v757 = vpack.c.bf16 %v696, %v695
    %v758 = vpack.c.bf16 %v698, %v697
    %v759 = vpack.c.bf16 %v700, %v699
    %v760 = vpack.c.bf16 %v702, %v701
    %v761 = vpack.c.bf16 %v704, %v703
    %v762 = vpack.c.bf16 %v706, %v705
    %v763 = vpack.c.bf16 %v708, %v707
    %v764 = vpack.c.bf16 %v710, %v709
    %v765 = vpack.c.bf16 %v712, %v711
    %v766 = vpack.c.bf16 %v714, %v713
    %v767 = vpack.c.bf16 %v716, %v715
    %v768 = vpack.c.bf16 %v718, %v717
    %v769 = vpack.c.bf16 %v720, %v719
    %v770 = vpack.c.bf16 %v722, %v721
    %v771 = vpack.c.bf16 %v724, %v723
    %v772 = vpack.c.bf16 %v726, %v725
    %v773 = vpack.c.bf16 %v728, %v727
    %v774 = vpack.c.bf16 %v730, %v729
    %v775 = vpack.c.bf16 %v732, %v731
    %v776 = vpack.c.bf16 %v734, %v733
    %v777 = vpack.c.bf16 %v736, %v735
    %v778 = vpack.c.bf16 %v738, %v737
    %v779 = vpack.c.bf16 %v740, %v739
    %v780 = vpack.c.bf16 %v742, %v741
    %v781 = vpack.c.bf16 %v744, %v743
    %v782 = vpack.c.bf16 %v746, %v745
    %v783 = vpack.c.bf16 %v748, %v747
    %v784 = vpack.c.bf16 %v750, %v749
    %v785 = vpack.c.bf16 %v752, %v751
    %v786 = vpack.c.bf16 %v754, %v753
    %v819 = vunpack.c.l.b16 %v755
    %v820 = vunpack.c.h.b16 %v755
    %v821 = vunpack.c.l.b16 %v756
    %v822 = vunpack.c.h.b16 %v756
    %v823 = vunpack.c.l.b16 %v757
    %v824 = vunpack.c.h.b16 %v757
    %v825 = vunpack.c.l.b16 %v758
    %v826 = vunpack.c.h.b16 %v758
    %v827 = vunpack.c.l.b16 %v759
    %v828 = vunpack.c.h.b16 %v759
    %v829 = vunpack.c.l.b16 %v760
    %v830 = vunpack.c.h.b16 %v760
    %v831 = vunpack.c.l.b16 %v761
    %v832 = vunpack.c.h.b16 %v761
    %v833 = vunpack.c.l.b16 %v762
    %v834 = vunpack.c.h.b16 %v762
    %v835 = vunpack.c.l.b16 %v763
    %v836 = vunpack.c.h.b16 %v763
    %v837 = vunpack.c.l.b16 %v764
    %v838 = vunpack.c.h.b16 %v764
    %v839 = vunpack.c.l.b16 %v765
    %v840 = vunpack.c.h.b16 %v765
    %v841 = vunpack.c.l.b16 %v766
    %v842 = vunpack.c.h.b16 %v766
    %v843 = vunpack.c.l.b16 %v767
    %v844 = vunpack.c.h.b16 %v767
    %v845 = vunpack.c.l.b16 %v768
    %v846 = vunpack.c.h.b16 %v768
    %v847 = vunpack.c.l.b16 %v769
    %v848 = vunpack.c.h.b16 %v769
    %v849 = vunpack.c.l.b16 %v770
    %v850 = vunpack.c.h.b16 %v770
    %v851 = vunpack.c.l.b16 %v771
    %v852 = vunpack.c.h.b16 %v771
    %v853 = vunpack.c.l.b16 %v772
    %v854 = vunpack.c.h.b16 %v772
    %v855 = vunpack.c.l.b16 %v773
    %v856 = vunpack.c.h.b16 %v773
    %v857 = vunpack.c.l.b16 %v774
    %v858 = vunpack.c.h.b16 %v774
    %v859 = vunpack.c.l.b16 %v775
    %v860 = vunpack.c.h.b16 %v775
    %v861 = vunpack.c.l.b16 %v776
    %v862 = vunpack.c.h.b16 %v776
    %v863 = vunpack.c.l.b16 %v777
    %v864 = vunpack.c.h.b16 %v777
    %v865 = vunpack.c.l.b16 %v778
    %v866 = vunpack.c.h.b16 %v778
    %v867 = vunpack.c.l.b16 %v779
    %v868 = vunpack.c.h.b16 %v779
    %v869 = vunpack.c.l.b16 %v780
    %v870 = vunpack.c.h.b16 %v780
    %v871 = vunpack.c.l.b16 %v781
    %v872 = vunpack.c.h.b16 %v781
    %v873 = vunpack.c.l.b16 %v782
    %v874 = vunpack.c.h.b16 %v782
    %v875 = vunpack.c.l.b16 %v783
    %v876 = vunpack.c.h.b16 %v783
    %v877 = vunpack.c.l.b16 %v784
    %v878 = vunpack.c.h.b16 %v784
    %v879 = vunpack.c.l.b16 %v785
    %v880 = vunpack.c.h.b16 %v785
    %v881 = vunpack.c.l.b16 %v786
    %v882 = vunpack.c.h.b16 %v786
    %v883 = vpack.c.b16 %v819, %v819
    %v884 = vpack.c.b16 %v820, %v820
    %v885 = vpack.c.b16 %v821, %v821
    %v886 = vpack.c.b16 %v822, %v822
    %v887 = vpack.c.b16 %v823, %v823
    %v888 = vpack.c.b16 %v824, %v824
    %v889 = vpack.c.b16 %v825, %v825
    %v890 = vpack.c.b16 %v826, %v826
    %v891 = vpack.c.b16 %v827, %v827
    %v892 = vpack.c.b16 %v828, %v828
    %v893 = vpack.c.b16 %v829, %v829
    %v894 = vpack.c.b16 %v830, %v830
    %v895 = vpack.c.b16 %v831, %v831
    %v896 = vpack.c.b16 %v832, %v832
    %v897 = vpack.c.b16 %v833, %v833
    %v898 = vpack.c.b16 %v834, %v834
    %v899 = vpack.c.b16 %v835, %v835
    %v900 = vpack.c.b16 %v836, %v836
    %v901 = vpack.c.b16 %v837, %v837
    %v902 = vpack.c.b16 %v838, %v838
    %v903 = vpack.c.b16 %v839, %v839
    %v904 = vpack.c.b16 %v840, %v840
    %v905 = vpack.c.b16 %v841, %v841
    %v906 = vpack.c.b16 %v842, %v842
    %v907 = vpack.c.b16 %v843, %v843
    %v908 = vpack.c.b16 %v844, %v844
    %v909 = vpack.c.b16 %v845, %v845
    %v910 = vpack.c.b16 %v846, %v846
    %v911 = vpack.c.b16 %v847, %v847
    %v912 = vpack.c.b16 %v848, %v848
    %v913 = vpack.c.b16 %v849, %v849
    %v914 = vpack.c.b16 %v850, %v850
    %v915 = vpack.c.b16 %v851, %v851
    %v916 = vpack.c.b16 %v852, %v852
    %v917 = vpack.c.b16 %v853, %v853
    %v918 = vpack.c.b16 %v854, %v854
    %v919 = vpack.c.b16 %v855, %v855
    %v920 = vpack.c.b16 %v856, %v856
    %v921 = vpack.c.b16 %v857, %v857
    %v922 = vpack.c.b16 %v858, %v858
    %v923 = vpack.c.b16 %v859, %v859
    %v924 = vpack.c.b16 %v860, %v860
    %v925 = vpack.c.b16 %v861, %v861
    %v926 = vpack.c.b16 %v862, %v862
    %v927 = vpack.c.b16 %v863, %v863
    %v928 = vpack.c.b16 %v864, %v864
    %v929 = vpack.c.b16 %v865, %v865
    %v930 = vpack.c.b16 %v866, %v866
    %v931 = vpack.c.b16 %v867, %v867
    %v932 = vpack.c.b16 %v868, %v868
    %v933 = vpack.c.b16 %v869, %v869
    %v934 = vpack.c.b16 %v870, %v870
    %v935 = vpack.c.b16 %v871, %v871
    %v936 = vpack.c.b16 %v872, %v872
    %v937 = vpack.c.b16 %v873, %v873
    %v938 = vpack.c.b16 %v874, %v874
    %v939 = vpack.c.b16 %v875, %v875
    %v940 = vpack.c.b16 %v876, %v876
    %v941 = vpack.c.b16 %v877, %v877
    %v942 = vpack.c.b16 %v878, %v878
    %v943 = vpack.c.b16 %v879, %v879
    %v944 = vpack.c.b16 %v880, %v880
    %v945 = vpack.c.b16 %v881, %v881
    %v946 = vpack.c.b16 %v882, %v882
    %vm1011 = vcmask 60416
    %1012 = vst.msk [vmem:[#allocation8] sm:$0xf] %vm1011, %v883
    %1013 = vst.msk [vmem:[#allocation8 + $0x4] sm:$0xf] %vm1011, %v884
    %1014 = vst.msk [vmem:[#allocation8 + $0x8] sm:$0xf] %vm1011, %v885
    %1015 = vst.msk [vmem:[#allocation8 + $0xc] sm:$0xf] %vm1011, %v886
    %1016 = vst.msk [vmem:[#allocation8 + $0x10] sm:$0xf] %vm1011, %v887
    %1017 = vst.msk [vmem:[#allocation8 + $0x14] sm:$0xf] %vm1011, %v888
    %1018 = vst.msk [vmem:[#allocation8 + $0x18] sm:$0xf] %vm1011, %v889
    %1019 = vst.msk [vmem:[#allocation8 + $0x1c] sm:$0xf] %vm1011, %v890
    %1020 = vst.msk [vmem:[#allocation8 + $0x20] sm:$0xf] %vm1011, %v891
    %1021 = vst.msk [vmem:[#allocation8 + $0x24] sm:$0xf] %vm1011, %v892
    %1022 = vst.msk [vmem:[#allocation8 + $0x28] sm:$0xf] %vm1011, %v893
    %1023 = vst.msk [vmem:[#allocation8 + $0x2c] sm:$0xf] %vm1011, %v894
    %1024 = vst.msk [vmem:[#allocation8 + $0x30] sm:$0xf] %vm1011, %v895
    %1025 = vst.msk [vmem:[#allocation8 + $0x34] sm:$0xf] %vm1011, %v896
    %1026 = vst.msk [vmem:[#allocation8 + $0x38] sm:$0xf] %vm1011, %v897
    %1027 = vst.msk [vmem:[#allocation8 + $0x3c] sm:$0xf] %vm1011, %v898
    %1028 = vst.msk [vmem:[#allocation8 + $0x40] sm:$0xf] %vm1011, %v899
    %1029 = vst.msk [vmem:[#allocation8 + $0x44] sm:$0xf] %vm1011, %v900
    %1030 = vst.msk [vmem:[#allocation8 + $0x48] sm:$0xf] %vm1011, %v901
    %1031 = vst.msk [vmem:[#allocation8 + $0x4c] sm:$0xf] %vm1011, %v902
    %1032 = vst.msk [vmem:[#allocation8 + $0x50] sm:$0xf] %vm1011, %v903
    %1033 = vst.msk [vmem:[#allocation8 + $0x54] sm:$0xf] %vm1011, %v904
    %1034 = vst.msk [vmem:[#allocation8 + $0x58] sm:$0xf] %vm1011, %v905
    %1035 = vst.msk [vmem:[#allocation8 + $0x5c] sm:$0xf] %vm1011, %v906
    %1036 = vst.msk [vmem:[#allocation8 + $0x60] sm:$0xf] %vm1011, %v907
    %1037 = vst.msk [vmem:[#allocation8 + $0x64] sm:$0xf] %vm1011, %v908
    %1038 = vst.msk [vmem:[#allocation8 + $0x68] sm:$0xf] %vm1011, %v909
    %1039 = vst.msk [vmem:[#allocation8 + $0x6c] sm:$0xf] %vm1011, %v910
    %1040 = vst.msk [vmem:[#allocation8 + $0x70] sm:$0xf] %vm1011, %v911
    %1041 = vst.msk [vmem:[#allocation8 + $0x74] sm:$0xf] %vm1011, %v912
    %1042 = vst.msk [vmem:[#allocation8 + $0x78] sm:$0xf] %vm1011, %v913
    %1043 = vst.msk [vmem:[#allocation8 + $0x7c] sm:$0xf] %vm1011, %v914
    %1044 = vst.msk [vmem:[#allocation8 + $0x80] sm:$0xf] %vm1011, %v915
    %1045 = vst.msk [vmem:[#allocation8 + $0x84] sm:$0xf] %vm1011, %v916
    %1046 = vst.msk [vmem:[#allocation8 + $0x88] sm:$0xf] %vm1011, %v917
    %1047 = vst.msk [vmem:[#allocation8 + $0x8c] sm:$0xf] %vm1011, %v918
    %1048 = vst.msk [vmem:[#allocation8 + $0x90] sm:$0xf] %vm1011, %v919
    %1049 = vst.msk [vmem:[#allocation8 + $0x94] sm:$0xf] %vm1011, %v920
    %1050 = vst.msk [vmem:[#allocation8 + $0x98] sm:$0xf] %vm1011, %v921
    %1051 = vst.msk [vmem:[#allocation8 + $0x9c] sm:$0xf] %vm1011, %v922
    %1052 = vst.msk [vmem:[#allocation8 + $0xa0] sm:$0xf] %vm1011, %v923
    %1053 = vst.msk [vmem:[#allocation8 + $0xa4] sm:$0xf] %vm1011, %v924
    %1054 = vst.msk [vmem:[#allocation8 + $0xa8] sm:$0xf] %vm1011, %v925
    %1055 = vst.msk [vmem:[#allocation8 + $0xac] sm:$0xf] %vm1011, %v926
    %1056 = vst.msk [vmem:[#allocation8 + $0xb0] sm:$0xf] %vm1011, %v927
    %1057 = vst.msk [vmem:[#allocation8 + $0xb4] sm:$0xf] %vm1011, %v928
    %1058 = vst.msk [vmem:[#allocation8 + $0xb8] sm:$0xf] %vm1011, %v929
    %1059 = vst.msk [vmem:[#allocation8 + $0xbc] sm:$0xf] %vm1011, %v930
    %1060 = vst.msk [vmem:[#allocation8 + $0xc0] sm:$0xf] %vm1011, %v931
    %1061 = vst.msk [vmem:[#allocation8 + $0xc4] sm:$0xf] %vm1011, %v932
    %1062 = vst.msk [vmem:[#allocation8 + $0xc8] sm:$0xf] %vm1011, %v933
    %1063 = vst.msk [vmem:[#allocation8 + $0xcc] sm:$0xf] %vm1011, %v934
    %1064 = vst.msk [vmem:[#allocation8 + $0xd0] sm:$0xf] %vm1011, %v935
    %1065 = vst.msk [vmem:[#allocation8 + $0xd4] sm:$0xf] %vm1011, %v936
    %1066 = vst.msk [vmem:[#allocation8 + $0xd8] sm:$0xf] %vm1011, %v937
    %1067 = vst.msk [vmem:[#allocation8 + $0xdc] sm:$0xf] %vm1011, %v938
    %1068 = vst.msk [vmem:[#allocation8 + $0xe0] sm:$0xf] %vm1011, %v939
    %1069 = vst.msk [vmem:[#allocation8 + $0xe4] sm:$0xf] %vm1011, %v940
    %1070 = vst.msk [vmem:[#allocation8 + $0xe8] sm:$0xf] %vm1011, %v941
    %1071 = vst.msk [vmem:[#allocation8 + $0xec] sm:$0xf] %vm1011, %v942
    %1072 = vst.msk [vmem:[#allocation8 + $0xf0] sm:$0xf] %vm1011, %v943
    %1073 = vst.msk [vmem:[#allocation8 + $0xf4] sm:$0xf] %vm1011, %v944
    %1074 = vst.msk [vmem:[#allocation8 + $0xf8] sm:$0xf] %vm1011, %v945
    %1075 = vst.msk [vmem:[#allocation8 + $0xfc] sm:$0xf] %vm1011, %v946
    %vm1076 = vcmask 64512
    %v1077 = vsel %vm1076, %v691, 0.0
    %v1078 = vsel %vm1076, %v692, 0.0
    %v1079 = vadd.f32 %v1077, %v1078
    %v1080 = vsel %vm1076, %v693, 0.0
    %v1081 = vadd.f32 %v1079, %v1080
    %v1082 = vsel %vm1076, %v694, 0.0
    %v1083 = vadd.f32 %v1081, %v1082
    %v1084 = vsel %vm1076, %v695, 0.0
    %v1085 = vadd.f32 %v1083, %v1084
    %v1086 = vsel %vm1076, %v696, 0.0
    %v1087 = vadd.f32 %v1085, %v1086
    %v1088 = vsel %vm1076, %v697, 0.0
    %v1089 = vadd.f32 %v1087, %v1088
    %v1090 = vsel %vm1076, %v698, 0.0
    %v1091 = vadd.f32 %v1089, %v1090
    %v1092 = vrot.slane %v1091, 4
    %v1093 = vadd.f32 %v1091, %v1092
    %v1094 = vrot.slane %v1093, 2
    %v1095 = vadd.f32 %v1093, %v1094
    %v1096 = vrot.slane %v1095, 1
    %v1097 = vadd.f32 %v1095, %v1096
    %v1098 = vsel %vm1076, %v699, 0.0
    %v1099 = vsel %vm1076, %v700, 0.0
    %v1100 = vadd.f32 %v1098, %v1099
    %v1101 = vsel %vm1076, %v701, 0.0
    %v1102 = vadd.f32 %v1100, %v1101
    %v1103 = vsel %vm1076, %v702, 0.0
    %v1104 = vadd.f32 %v1102, %v1103
    %v1105 = vsel %vm1076, %v703, 0.0
    %v1106 = vadd.f32 %v1104, %v1105
    %v1107 = vsel %vm1076, %v704, 0.0
    %v1108 = vadd.f32 %v1106, %v1107
    %v1109 = vsel %vm1076, %v705, 0.0
    %v1110 = vadd.f32 %v1108, %v1109
    %v1111 = vsel %vm1076, %v706, 0.0
    %v1112 = vadd.f32 %v1110, %v1111
    %v1113 = vrot.slane %v1112, 4
    %v1114 = vadd.f32 %v1112, %v1113
    %v1115 = vrot.slane %v1114, 2
    %v1116 = vadd.f32 %v1114, %v1115
    %v1117 = vrot.slane %v1116, 1
    %v1118 = vadd.f32 %v1116, %v1117
    %v1119 = vsel %vm1076, %v707, 0.0
    %v1120 = vsel %vm1076, %v708, 0.0
    %v1121 = vadd.f32 %v1119, %v1120
    %v1122 = vsel %vm1076, %v709, 0.0
    %v1123 = vadd.f32 %v1121, %v1122
    %v1124 = vsel %vm1076, %v710, 0.0
    %v1125 = vadd.f32 %v1123, %v1124
    %v1126 = vsel %vm1076, %v711, 0.0
    %v1127 = vadd.f32 %v1125, %v1126
    %v1128 = vsel %vm1076, %v712, 0.0
    %v1129 = vadd.f32 %v1127, %v1128
    %v1130 = vsel %vm1076, %v713, 0.0
    %v1131 = vadd.f32 %v1129, %v1130
    %v1132 = vsel %vm1076, %v714, 0.0
    %v1133 = vadd.f32 %v1131, %v1132
    %v1134 = vrot.slane %v1133, 4
    %v1135 = vadd.f32 %v1133, %v1134
    %v1136 = vrot.slane %v1135, 2
    %v1137 = vadd.f32 %v1135, %v1136
    %v1138 = vrot.slane %v1137, 1
    %v1139 = vadd.f32 %v1137, %v1138
    %v1140 = vsel %vm1076, %v715, 0.0
    %v1141 = vsel %vm1076, %v716, 0.0
    %v1142 = vadd.f32 %v1140, %v1141
    %v1143 = vsel %vm1076, %v717, 0.0
    %v1144 = vadd.f32 %v1142, %v1143
    %v1145 = vsel %vm1076, %v718, 0.0
    %v1146 = vadd.f32 %v1144, %v1145
    %v1147 = vsel %vm1076, %v719, 0.0
    %v1148 = vadd.f32 %v1146, %v1147
    %v1149 = vsel %vm1076, %v720, 0.0
    %v1150 = vadd.f32 %v1148, %v1149
    %v1151 = vsel %vm1076, %v721, 0.0
    %v1152 = vadd.f32 %v1150, %v1151
    %v1153 = vsel %vm1076, %v722, 0.0
    %v1154 = vadd.f32 %v1152, %v1153
    %v1155 = vrot.slane %v1154, 4
    %v1156 = vadd.f32 %v1154, %v1155
    %v1157 = vrot.slane %v1156, 2
    %v1158 = vadd.f32 %v1156, %v1157
    %v1159 = vrot.slane %v1158, 1
    %v1160 = vadd.f32 %v1158, %v1159
    %v1161 = vsel %vm1076, %v723, 0.0
    %v1162 = vsel %vm1076, %v724, 0.0
    %v1163 = vadd.f32 %v1161, %v1162
    %v1164 = vsel %vm1076, %v725, 0.0
    %v1165 = vadd.f32 %v1163, %v1164
    %v1166 = vsel %vm1076, %v726, 0.0
    %v1167 = vadd.f32 %v1165, %v1166
    %v1168 = vsel %vm1076, %v727, 0.0
    %v1169 = vadd.f32 %v1167, %v1168
    %v1170 = vsel %vm1076, %v728, 0.0
    %v1171 = vadd.f32 %v1169, %v1170
    %v1172 = vsel %vm1076, %v729, 0.0
    %v1173 = vadd.f32 %v1171, %v1172
    %v1174 = vsel %vm1076, %v730, 0.0
    %v1175 = vadd.f32 %v1173, %v1174
    %v1176 = vrot.slane %v1175, 4
    %v1177 = vadd.f32 %v1175, %v1176
    %v1178 = vrot.slane %v1177, 2
    %v1179 = vadd.f32 %v1177, %v1178
    %v1180 = vrot.slane %v1179, 1
    %v1181 = vadd.f32 %v1179, %v1180
    %v1182 = vsel %vm1076, %v731, 0.0
    %v1183 = vsel %vm1076, %v732, 0.0
    %v1184 = vadd.f32 %v1182, %v1183
    %v1185 = vsel %vm1076, %v733, 0.0
    %v1186 = vadd.f32 %v1184, %v1185
    %v1187 = vsel %vm1076, %v734, 0.0
    %v1188 = vadd.f32 %v1186, %v1187
    %v1189 = vsel %vm1076, %v735, 0.0
    %v1190 = vadd.f32 %v1188, %v1189
    %v1191 = vsel %vm1076, %v736, 0.0
    %v1192 = vadd.f32 %v1190, %v1191
    %v1193 = vsel %vm1076, %v737, 0.0
    %v1194 = vadd.f32 %v1192, %v1193
    %v1195 = vsel %vm1076, %v738, 0.0
    %v1196 = vadd.f32 %v1194, %v1195
    %v1197 = vrot.slane %v1196, 4
    %v1198 = vadd.f32 %v1196, %v1197
    %v1199 = vrot.slane %v1198, 2
    %v1200 = vadd.f32 %v1198, %v1199
    %v1201 = vrot.slane %v1200, 1
    %v1202 = vadd.f32 %v1200, %v1201
    %v1203 = vsel %vm1076, %v739, 0.0
    %v1204 = vsel %vm1076, %v740, 0.0
    %v1205 = vadd.f32 %v1203, %v1204
    %v1206 = vsel %vm1076, %v741, 0.0
    %v1207 = vadd.f32 %v1205, %v1206
    %v1208 = vsel %vm1076, %v742, 0.0
    %v1209 = vadd.f32 %v1207, %v1208
    %v1210 = vsel %vm1076, %v743, 0.0
    %v1211 = vadd.f32 %v1209, %v1210
    %v1212 = vsel %vm1076, %v744, 0.0
    %v1213 = vadd.f32 %v1211, %v1212
    %v1214 = vsel %vm1076, %v745, 0.0
    %v1215 = vadd.f32 %v1213, %v1214
    %v1216 = vsel %vm1076, %v746, 0.0
    %v1217 = vadd.f32 %v1215, %v1216
    %v1218 = vrot.slane %v1217, 4
    %v1219 = vadd.f32 %v1217, %v1218
    %v1220 = vrot.slane %v1219, 2
    %v1221 = vadd.f32 %v1219, %v1220
    %v1222 = vrot.slane %v1221, 1
    %v1223 = vadd.f32 %v1221, %v1222
    %v1224 = vsel %vm1076, %v747, 0.0
    %v1225 = vsel %vm1076, %v748, 0.0
    %v1226 = vadd.f32 %v1224, %v1225
    %v1227 = vsel %vm1076, %v749, 0.0
    %v1228 = vadd.f32 %v1226, %v1227
    %v1229 = vsel %vm1076, %v750, 0.0
    %v1230 = vadd.f32 %v1228, %v1229
    %v1231 = vsel %vm1076, %v751, 0.0
    %v1232 = vadd.f32 %v1230, %v1231
    %v1233 = vsel %vm1076, %v752, 0.0
    %v1234 = vadd.f32 %v1232, %v1233
    %v1235 = vsel %vm1076, %v753, 0.0
    %v1236 = vadd.f32 %v1234, %v1235
    %v1237 = vsel %vm1076, %v754, 0.0
    %v1238 = vadd.f32 %v1236, %v1237
    %v1239 = vrot.slane %v1238, 4
    %v1240 = vadd.f32 %v1238, %v1239
    %v1241 = vrot.slane %v1240, 2
    %v1242 = vadd.f32 %v1240, %v1241
    %v1243 = vrot.slane %v1242, 1
    %v1244 = vadd.f32 %v1242, %v1243
    %vm1253 = vcmask 1041409
    %v1254 = vsel %vm1253, %v1118, %v1097
    %vm1255 = vcmask 1042434
    %v1256 = vsel %vm1255, %v1139, %v1254
    %vm1257 = vcmask 1043459
    %v1258 = vsel %vm1257, %v1160, %v1256
    %vm1259 = vcmask 1044484
    %v1260 = vsel %vm1259, %v1181, %v1258
    %vm1261 = vcmask 1045509
    %v1262 = vsel %vm1261, %v1202, %v1260
    %vm1263 = vcmask 1046534
    %v1264 = vsel %vm1263, %v1223, %v1262
    %vm1265 = vcmask 1047559
    %v1266 = vsel %vm1265, %v1244, %v1264
    %1268 = vst.msk [vmem:[#allocation9] sm:$0xff] %vm1076, %v1266
    // Predicated region
    $region26: #{tablock_forward.3} parent=1 // pred_check
      _
    $region27: #{tablock_forward.3} parent=1 // pred_check_branch
      %1270 = sbr.rel (0) target = $region29
    $region28: #{tablock_forward.3} parent=1 // pred_region
      %s1272 = ssub.s32 4096, 4096
      %1273 = vsyncadd [#allocation4], %s1272
      %s1274 = sshll.u32 [#allocation8], 4
      %s1275 = int_to_ptr.vmem [resolvable:$true] %s1274
      %1280 = dma.vmem_to_hbm [thread:$0]  %s1275, 4096, %s3, [#allocation4], 64, 64, 4
    $region29: #{tablock_forward.3} parent=1 // pred_fallthru
      _
    // Predicated region
    $region30: #{tablock_forward.3} parent=1 // pred_check
      _
    $region31: #{tablock_forward.3} parent=1 // pred_check_branch
      %1282 = sbr.rel (0) target = $region33
    $region32: #{tablock_forward.3} parent=1 // pred_region
      %s1284 = ssub.s32 128, 128
      %1285 = vsyncadd [#allocation10], %s1284
      %s1287 = sshll.u32 [#allocation9], 4
      %s1288 = int_to_ptr.vmem [resolvable:$true] %s1287
      %1290 = dma.vmem_to_hbm [thread:$0]  %s1288, 128, %s4, [#allocation10]
    $region33: #{tablock_forward.3} parent=1 // pred_fallthru
      _
    // Predicated region
    $region34: #{tablock_forward.3} parent=1 // pred_check
      _
    $region35: #{tablock_forward.3} parent=1 // pred_check_branch
      %1292 = sbr.rel (0) target = $region37
    $region36: #{tablock_forward.3} parent=1 // pred_region
      %1293 = dma.done [#allocation4], 4096
    $region37: #{tablock_forward.3} parent=1 // pred_fallthru
      _
    // Predicated region
    $region38: #{tablock_forward.3} parent=1 // pred_check
      _
    $region39: #{tablock_forward.3} parent=1 // pred_check_branch
      %1295 = sbr.rel (0) target = $region41
    $region40: #{tablock_forward.3} parent=1 // pred_region
      %1296 = dma.done [#allocation10], 128
    $region41: #{tablock_forward.3} parent=1 // pred_fallthru
      _
    %1297 = vsyncpa [#allocation3], 1
    %1298 = vsyncpa [#allocation6], 1
    %1299 = vsyncpa [#allocation4], 1
    %1300 = vsyncpa [#allocation10], 1

// kernel: tablock_forward.5
$region0: #{tablock_forward.5}
  #allocation0 [shape = 'u32[]', space=smem, size = 0x4, offset = 0x4, fixed_abs, tag = 'smem constant byte address 0x4 - core index']
  #allocation1 [shape = 'u32[144,128]{1,0:T(1,128)}', space=vmem, size = 0x12000, scoped, tag = 'internal scratch']
  %s0 = inlined_call_operand.hbm [shape: bf16[512,8], index: 0, kind: input, shape index: {}]
  %s1 = inlined_call_operand.hbm [shape: bf16[8,32], index: 1, kind: input, shape index: {}]
  %s2 = inlined_call_operand.hbm [shape: f32[1,32], index: 2, kind: input, shape index: {}]
  %s3 = inlined_call_operand.hbm [shape: bf16[512,32], index: 3, kind: input, shape index: {}]
  %s4 = inlined_call_operand.hbm [shape: f32[512,32], index: 4, kind: output, shape index: {}]
  %s5 = sld [smem:[#allocation0]]
  $region42: #{tablock_forward.5} parent=0
    _
  %s7 = ssub.s32 1, %s5
  %s8 = scalar_select 0, %s7, %s5
  $region1: #{tablock_forward.5} parent=0
    #allocation2 [shape = 'u8[131072]{0}', space=vmem, size = 0x20000, scoped, tag = 'input window, operand 0, single buffered']
    #allocation3 [shape = 's32[1]{0}', space=sflag, size = 0x4, scoped, tag = 'scoped memory for tablock_forward.5']
    #allocation4 [shape = 's32[1]{0}', space=sflag, size = 0x4, scoped, tag = 'scoped memory for tablock_forward.5']
    #allocation5 [shape = 'u8[2048]{0}', space=vmem, size = 0x800, scoped, tag = 'input window, operand 1, single buffered']
    #allocation6 [shape = 's32[1]{0}', space=sflag, size = 0x4, scoped, tag = 'scoped memory for tablock_forward.5']
    #allocation7 [shape = 'u8[512]{0}', space=vmem, size = 0x400, scoped, tag = 'input window, operand 2, single buffered']
    #allocation8 [shape = 'u8[131072]{0}', space=vmem, size = 0x20000, scoped, tag = 'input window, operand 3, single buffered']
    #allocation9 [shape = 's32[1]{0}', space=sflag, size = 0x4, scoped, tag = 'scoped memory for tablock_forward.5']
    #allocation10 [shape = 'u8[262144]{0}', space=vmem, size = 0x40000, scoped, tag = 'output window, operand 0, single buffered']
    %9 = vsyncpa [#allocation3], 0
    %10 = vsyncpa [#allocation6], 0
    %11 = vsyncpa [#allocation9], 0
    %12 = vsyncpa [#allocation4], 0
    // Predicated region
    $region2: #{tablock_forward.5} parent=1 // pred_check
      _
    $region3: #{tablock_forward.5} parent=1 // pred_check_branch
      %14 = sbr.rel (0) target = $region5
    $region4: #{tablock_forward.5} parent=1 // pred_region
      %s16 = ssub.s32 4096, 4096
      %17 = vsyncadd [#allocation3], %s16
      %s18 = sshll.u32 [#allocation2], 4
      %s19 = int_to_ptr.vmem [resolvable:$true] %s18
      %24 = dma.hbm_to_vmem [thread:$0]  %s0, 4096, %s19, [#allocation3], 64, 64, 4
    $region5: #{tablock_forward.5} parent=1 // pred_fallthru
      _
    // Predicated region
    $region6: #{tablock_forward.5} parent=1 // pred_check
      _
    $region7: #{tablock_forward.5} parent=1 // pred_check_branch
      %26 = sbr.rel (0) target = $region9
    $region8: #{tablock_forward.5} parent=1 // pred_region
      %s28 = ssub.s32 64, 64
      %29 = vsyncadd [#allocation6], %s28
      %s31 = sshll.u32 [#allocation5], 4
      %s32 = int_to_ptr.vmem [resolvable:$true] %s31
      %34 = dma.hbm_to_vmem [thread:$0]  %s1, 64, %s32, [#allocation6]
    $region9: #{tablock_forward.5} parent=1 // pred_fallthru
      _
    // Predicated region
    $region10: #{tablock_forward.5} parent=1 // pred_check
      _
    $region11: #{tablock_forward.5} parent=1 // pred_check_branch
      %36 = sbr.rel (0) target = $region13
    $region12: #{tablock_forward.5} parent=1 // pred_region
      %s38 = ssub.s32 16, 16
      %39 = vsyncadd [#allocation6], %s38
      %s41 = sshll.u32 [#allocation7], 4
      %s42 = int_to_ptr.vmem [resolvable:$true] %s41
      %44 = dma.hbm_to_vmem [thread:$0]  %s2, 16, %s42, [#allocation6]
    $region13: #{tablock_forward.5} parent=1 // pred_fallthru
      _
    // Predicated region
    $region14: #{tablock_forward.5} parent=1 // pred_check
      _
    $region15: #{tablock_forward.5} parent=1 // pred_check_branch
      %46 = sbr.rel (0) target = $region17
    $region16: #{tablock_forward.5} parent=1 // pred_region
      %s48 = ssub.s32 4096, 4096
      %49 = vsyncadd [#allocation9], %s48
      %s50 = sshll.u32 [#allocation8], 4
      %s51 = int_to_ptr.vmem [resolvable:$true] %s50
      %56 = dma.hbm_to_vmem [thread:$0]  %s3, 4096, %s51, [#allocation9], 64, 64, 4
    $region17: #{tablock_forward.5} parent=1 // pred_fallthru
      _
    // Predicated region
    $region18: #{tablock_forward.5} parent=1 // pred_check
      _
    $region19: #{tablock_forward.5} parent=1 // pred_check_branch
      %58 = sbr.rel (0) target = $region21
    $region20: #{tablock_forward.5} parent=1 // pred_region
      %59 = dma.done [#allocation3], 4096
    $region21: #{tablock_forward.5} parent=1 // pred_fallthru
      _
    // Predicated region
    $region22: #{tablock_forward.5} parent=1 // pred_check
      _
    $region23: #{tablock_forward.5} parent=1 // pred_check_branch
      %61 = sbr.rel (0) target = $region25
    $region24: #{tablock_forward.5} parent=1 // pred_region
      %62 = dma.done [#allocation6], 64
    $region25: #{tablock_forward.5} parent=1 // pred_fallthru
      _
    // Predicated region
    $region26: #{tablock_forward.5} parent=1 // pred_check
      _
    $region27: #{tablock_forward.5} parent=1 // pred_check_branch
      %64 = sbr.rel (0) target = $region29
    $region28: #{tablock_forward.5} parent=1 // pred_region
      %65 = dma.done [#allocation6], 16
    $region29: #{tablock_forward.5} parent=1 // pred_fallthru
      _
    // Predicated region
    $region30: #{tablock_forward.5} parent=1 // pred_check
      _
    $region31: #{tablock_forward.5} parent=1 // pred_check_branch
      %67 = sbr.rel (0) target = $region33
    $region32: #{tablock_forward.5} parent=1 // pred_region
      %68 = dma.done [#allocation9], 4096
    $region33: #{tablock_forward.5} parent=1 // pred_fallthru
      _
    %v70 = vld [vmem:[#allocation2] sm:$0xf]
    %v71 = vld [vmem:[#allocation2 + $0x4] sm:$0xf]
    %v72 = vld [vmem:[#allocation2 + $0x8] sm:$0xf]
    %v73 = vld [vmem:[#allocation2 + $0xc] sm:$0xf]
    %v74 = vld [vmem:[#allocation2 + $0x10] sm:$0xf]
    %v75 = vld [vmem:[#allocation2 + $0x14] sm:$0xf]
    %v76 = vld [vmem:[#allocation2 + $0x18] sm:$0xf]
    %v77 = vld [vmem:[#allocation2 + $0x1c] sm:$0xf]
    %v78 = vld [vmem:[#allocation2 + $0x20] sm:$0xf]
    %v79 = vld [vmem:[#allocation2 + $0x24] sm:$0xf]
    %v80 = vld [vmem:[#allocation2 + $0x28] sm:$0xf]
    %v81 = vld [vmem:[#allocation2 + $0x2c] sm:$0xf]
    %v82 = vld [vmem:[#allocation2 + $0x30] sm:$0xf]
    %v83 = vld [vmem:[#allocation2 + $0x34] sm:$0xf]
    %v84 = vld [vmem:[#allocation2 + $0x38] sm:$0xf]
    %v85 = vld [vmem:[#allocation2 + $0x3c] sm:$0xf]
    %v86 = vld [vmem:[#allocation2 + $0x40] sm:$0xf]
    %v87 = vld [vmem:[#allocation2 + $0x44] sm:$0xf]
    %v88 = vld [vmem:[#allocation2 + $0x48] sm:$0xf]
    %v89 = vld [vmem:[#allocation2 + $0x4c] sm:$0xf]
    %v90 = vld [vmem:[#allocation2 + $0x50] sm:$0xf]
    %v91 = vld [vmem:[#allocation2 + $0x54] sm:$0xf]
    %v92 = vld [vmem:[#allocation2 + $0x58] sm:$0xf]
    %v93 = vld [vmem:[#allocation2 + $0x5c] sm:$0xf]
    %v94 = vld [vmem:[#allocation2 + $0x60] sm:$0xf]
    %v95 = vld [vmem:[#allocation2 + $0x64] sm:$0xf]
    %v96 = vld [vmem:[#allocation2 + $0x68] sm:$0xf]
    %v97 = vld [vmem:[#allocation2 + $0x6c] sm:$0xf]
    %v98 = vld [vmem:[#allocation2 + $0x70] sm:$0xf]
    %v99 = vld [vmem:[#allocation2 + $0x74] sm:$0xf]
    %v100 = vld [vmem:[#allocation2 + $0x78] sm:$0xf]
    %v101 = vld [vmem:[#allocation2 + $0x7c] sm:$0xf]
    %v102 = vld [vmem:[#allocation2 + $0x80] sm:$0xf]
    %v103 = vld [vmem:[#allocation2 + $0x84] sm:$0xf]
    %v104 = vld [vmem:[#allocation2 + $0x88] sm:$0xf]
    %v105 = vld [vmem:[#allocation2 + $0x8c] sm:$0xf]
    %v106 = vld [vmem:[#allocation2 + $0x90] sm:$0xf]
    %v107 = vld [vmem:[#allocation2 + $0x94] sm:$0xf]
    %v108 = vld [vmem:[#allocation2 + $0x98] sm:$0xf]
    %v109 = vld [vmem:[#allocation2 + $0x9c] sm:$0xf]
    %v110 = vld [vmem:[#allocation2 + $0xa0] sm:$0xf]
    %v111 = vld [vmem:[#allocation2 + $0xa4] sm:$0xf]
    %v112 = vld [vmem:[#allocation2 + $0xa8] sm:$0xf]
    %v113 = vld [vmem:[#allocation2 + $0xac] sm:$0xf]
    %v114 = vld [vmem:[#allocation2 + $0xb0] sm:$0xf]
    %v115 = vld [vmem:[#allocation2 + $0xb4] sm:$0xf]
    %v116 = vld [vmem:[#allocation2 + $0xb8] sm:$0xf]
    %v117 = vld [vmem:[#allocation2 + $0xbc] sm:$0xf]
    %v118 = vld [vmem:[#allocation2 + $0xc0] sm:$0xf]
    %v119 = vld [vmem:[#allocation2 + $0xc4] sm:$0xf]
    %v120 = vld [vmem:[#allocation2 + $0xc8] sm:$0xf]
    %v121 = vld [vmem:[#allocation2 + $0xcc] sm:$0xf]
    %v122 = vld [vmem:[#allocation2 + $0xd0] sm:$0xf]
    %v123 = vld [vmem:[#allocation2 + $0xd4] sm:$0xf]
    %v124 = vld [vmem:[#allocation2 + $0xd8] sm:$0xf]
    %v125 = vld [vmem:[#allocation2 + $0xdc] sm:$0xf]
    %v126 = vld [vmem:[#allocation2 + $0xe0] sm:$0xf]
    %v127 = vld [vmem:[#allocation2 + $0xe4] sm:$0xf]
    %v128 = vld [vmem:[#allocation2 + $0xe8] sm:$0xf]
    %v129 = vld [vmem:[#allocation2 + $0xec] sm:$0xf]
    %v130 = vld [vmem:[#allocation2 + $0xf0] sm:$0xf]
    %v131 = vld [vmem:[#allocation2 + $0xf4] sm:$0xf]
    %v132 = vld [vmem:[#allocation2 + $0xf8] sm:$0xf]
    %v133 = vld [vmem:[#allocation2 + $0xfc] sm:$0xf]
    %v134 = vld [vmem:[#allocation5] sm:$0xf]
    %v135 = vld [vmem:[#allocation7] sm:$0x1]
    %v137 = vlaneseq
    %v138 = vshrl.u32 %v137, 7
    %v139 = vsub.s32 0, %v138
    %v140 = vrot.slane %v135, %v139
    %v206 = vunpack.c.l.b16 %v70
    %v207 = vunpack.c.l.b16 %v71
    %v208 = vunpack.c.l.b16 %v72
    %v209 = vunpack.c.l.b16 %v73
    %v210 = vunpack.c.l.b16 %v74
    %v211 = vunpack.c.l.b16 %v75
    %v212 = vunpack.c.l.b16 %v76
    %v213 = vunpack.c.l.b16 %v77
    %v214 = vunpack.c.l.b16 %v78
    %v215 = vunpack.c.l.b16 %v79
    %v216 = vunpack.c.l.b16 %v80
    %v217 = vunpack.c.l.b16 %v81
    %v218 = vunpack.c.l.b16 %v82
    %v219 = vunpack.c.l.b16 %v83
    %v220 = vunpack.c.l.b16 %v84
    %v221 = vunpack.c.l.b16 %v85
    %v222 = vunpack.c.l.b16 %v86
    %v223 = vunpack.c.l.b16 %v87
    %v224 = vunpack.c.l.b16 %v88
    %v225 = vunpack.c.l.b16 %v89
    %v226 = vunpack.c.l.b16 %v90
    %v227 = vunpack.c.l.b16 %v91
    %v228 = vunpack.c.l.b16 %v92
    %v229 = vunpack.c.l.b16 %v93
    %v230 = vunpack.c.l.b16 %v94
    %v231 = vunpack.c.l.b16 %v95
    %v232 = vunpack.c.l.b16 %v96
    %v233 = vunpack.c.l.b16 %v97
    %v234 = vunpack.c.l.b16 %v98
    %v235 = vunpack.c.l.b16 %v99
    %v236 = vunpack.c.l.b16 %v100
    %v237 = vunpack.c.l.b16 %v101
    %v238 = vunpack.c.l.b16 %v102
    %v239 = vunpack.c.l.b16 %v103
    %v240 = vunpack.c.l.b16 %v104
    %v241 = vunpack.c.l.b16 %v105
    %v242 = vunpack.c.l.b16 %v106
    %v243 = vunpack.c.l.b16 %v107
    %v244 = vunpack.c.l.b16 %v108
    %v245 = vunpack.c.l.b16 %v109
    %v246 = vunpack.c.l.b16 %v110
    %v247 = vunpack.c.l.b16 %v111
    %v248 = vunpack.c.l.b16 %v112
    %v249 = vunpack.c.l.b16 %v113
    %v250 = vunpack.c.l.b16 %v114
    %v251 = vunpack.c.l.b16 %v115
    %v252 = vunpack.c.l.b16 %v116
    %v253 = vunpack.c.l.b16 %v117
    %v254 = vunpack.c.l.b16 %v118
    %v255 = vunpack.c.l.b16 %v119
    %v256 = vunpack.c.l.b16 %v120
    %v257 = vunpack.c.l.b16 %v121
    %v258 = vunpack.c.l.b16 %v122
    %v259 = vunpack.c.l.b16 %v123
    %v260 = vunpack.c.l.b16 %v124
    %v261 = vunpack.c.l.b16 %v125
    %v262 = vunpack.c.l.b16 %v126
    %v263 = vunpack.c.l.b16 %v127
    %v264 = vunpack.c.l.b16 %v128
    %v265 = vunpack.c.l.b16 %v129
    %v266 = vunpack.c.l.b16 %v130
    %v267 = vunpack.c.l.b16 %v131
    %v268 = vunpack.c.l.b16 %v132
    %v269 = vunpack.c.l.b16 %v133
    %v270 = vpack.c.b16 %v207, %v206
    %v271 = vpack.c.b16 %v209, %v208
    %v272 = vpack.c.b16 %v211, %v210
    %v273 = vpack.c.b16 %v213, %v212
    %v274 = vpack.c.b16 %v215, %v214
    %v275 = vpack.c.b16 %v217, %v216
    %v276 = vpack.c.b16 %v219, %v218
    %v277 = vpack.c.b16 %v221, %v220
    %v278 = vpack.c.b16 %v223, %v222
    %v279 = vpack.c.b16 %v225, %v224
    %v280 = vpack.c.b16 %v227, %v226
    %v281 = vpack.c.b16 %v229, %v228
    %v282 = vpack.c.b16 %v231, %v230
    %v283 = vpack.c.b16 %v233, %v232
    %v284 = vpack.c.b16 %v235, %v234
    %v285 = vpack.c.b16 %v237, %v236
    %v286 = vpack.c.b16 %v239, %v238
    %v287 = vpack.c.b16 %v241, %v240
    %v288 = vpack.c.b16 %v243, %v242
    %v289 = vpack.c.b16 %v245, %v244
    %v290 = vpack.c.b16 %v247, %v246
    %v291 = vpack.c.b16 %v249, %v248
    %v292 = vpack.c.b16 %v251, %v250
    %v293 = vpack.c.b16 %v253, %v252
    %v294 = vpack.c.b16 %v255, %v254
    %v295 = vpack.c.b16 %v257, %v256
    %v296 = vpack.c.b16 %v259, %v258
    %v297 = vpack.c.b16 %v261, %v260
    %v298 = vpack.c.b16 %v263, %v262
    %v299 = vpack.c.b16 %v265, %v264
    %v300 = vpack.c.b16 %v267, %v266
    %v301 = vpack.c.b16 %v269, %v268
    %vm302 = vcmask 64512
    %v304 = vsel %vm302, %v270, 0
    %v307 = vsel %vm302, %v271, 0
    %v310 = vsel %vm302, %v272, 0
    %v313 = vsel %vm302, %v273, 0
    %v316 = vsel %vm302, %v274, 0
    %v319 = vsel %vm302, %v275, 0
    %v322 = vsel %vm302, %v276, 0
    %v325 = vsel %vm302, %v277, 0
    %v328 = vsel %vm302, %v278, 0
    %v331 = vsel %vm302, %v279, 0
    %v334 = vsel %vm302, %v280, 0
    %v337 = vsel %vm302, %v281, 0
    %v340 = vsel %vm302, %v282, 0
    %v343 = vsel %vm302, %v283, 0
    %v346 = vsel %vm302, %v284, 0
    %v349 = vsel %vm302, %v285, 0
    %v352 = vsel %vm302, %v286, 0
    %v355 = vsel %vm302, %v287, 0
    %v358 = vsel %vm302, %v288, 0
    %v361 = vsel %vm302, %v289, 0
    %v364 = vsel %vm302, %v290, 0
    %v367 = vsel %vm302, %v291, 0
    %v370 = vsel %vm302, %v292, 0
    %v373 = vsel %vm302, %v293, 0
    %v376 = vsel %vm302, %v294, 0
    %v379 = vsel %vm302, %v295, 0
    %v382 = vsel %vm302, %v296, 0
    %v385 = vsel %vm302, %v297, 0
    %v388 = vsel %vm302, %v298, 0
    %v391 = vsel %vm302, %v299, 0
    %v394 = vsel %vm302, %v300, 0
    %v397 = vsel %vm302, %v301, 0
    %vm399 = vcmask 1043456
    %v401 = vsel %vm399, %v134, 0
    %403 = vmatprep.subr.bf16.mxu0 0
    %404 = vmatpush1.bf16.msra.mxu0 %v401
    %405 = vmatprep.subr.bf16.mxu0 0
    %406 = vmatpush1.bf16.msra.mxu0 0
    %407 = vmatprep.subr.bf16.mxu0 0
    %408 = vmatpush1.bf16.msra.mxu0 0
    %409 = vmatprep.subr.bf16.mxu0 0
    %410 = vmatpush1.bf16.msra.mxu0 0
    %411 = vmatprep.subr.bf16.mxu0 0
    %412 = vmatpush1.bf16.msra.mxu0 0
    %413 = vmatprep.subr.bf16.mxu0 0
    %414 = vmatpush1.bf16.msra.mxu0 0
    %415 = vmatprep.subr.bf16.mxu0 0
    %416 = vmatpush1.bf16.msra.mxu0 0
    %417 = vmatprep.subr.bf16.mxu0 0
    %418 = vmatpush1.bf16.msra.mxu0 0
    %419 = vmatprep.subr.bf16.mxu0 0
    %420 = vmatpush1.bf16.msra.mxu0 0
    %421 = vmatprep.subr.bf16.mxu0 0
    %422 = vmatpush1.bf16.msra.mxu0 0
    %423 = vmatprep.subr.bf16.mxu0 0
    %424 = vmatpush1.bf16.msra.mxu0 0
    %425 = vmatprep.subr.bf16.mxu0 0
    %426 = vmatpush1.bf16.msra.mxu0 0
    %427 = vmatprep.subr.bf16.mxu0 0
    %428 = vmatpush1.bf16.msra.mxu0 0
    %429 = vmatprep.subr.bf16.mxu0 0
    %430 = vmatpush1.bf16.msra.mxu0 0
    %431 = vmatprep.subr.bf16.mxu0 0
    %432 = vmatpush1.bf16.msra.mxu0 0
    %433 = vmatprep.subr.bf16.mxu0 0
    %434 = vmatpush1.bf16.msra.mxu0 0
    %435 = vmatprep.mubr.bf16.mxu0 0
    %436 = vmatmul.mubr.bf16.gmra.mrb[0].mxu0 %v304
    %v437 = vpop.f32.mrb[0].mxu0
    %v438 = vadd.f32 %v140, %v437
    %v439 = vpop.f32.mrb[0].mxu0
    %v440 = vpop.f32.mrb[0].mxu0
    %v441 = vadd.f32 %v140, %v440
    %v442 = vpop.f32.mrb[0].mxu0
    %443 = vmatprep.mubr.bf16.mxu0 0
    %444 = vmatmul.mubr.bf16.gmra.mrb[0].mxu0 %v307
    %v445 = vpop.f32.mrb[0].mxu0
    %v446 = vadd.f32 %v140, %v445
    %v447 = vpop.f32.mrb[0].mxu0
    %v448 = vpop.f32.mrb[0].mxu0
    %v449 = vadd.f32 %v140, %v448
    %v450 = vpop.f32.mrb[0].mxu0
    %451 = vmatprep.mubr.bf16.mxu0 0
    %452 = vmatmul.mubr.bf16.gmra.mrb[0].mxu0 %v310
    %v453 = vpop.f32.mrb[0].mxu0
    %v454 = vadd.f32 %v140, %v453
    %v455 = vpop.f32.mrb[0].mxu0
    %v456 = vpop.f32.mrb[0].mxu0
    %v457 = vadd.f32 %v140, %v456
    %v458 = vpop.f32.mrb[0].mxu0
    %459 = vmatprep.mubr.bf16.mxu0 0
    %460 = vmatmul.mubr.bf16.gmra.mrb[0].mxu0 %v313
    %v461 = vpop.f32.mrb[0].mxu0
    %v462 = vadd.f32 %v140, %v461
    %v463 = vpop.f32.mrb[0].mxu0
    %v464 = vpop.f32.mrb[0].mxu0
    %v465 = vadd.f32 %v140, %v464
    %v466 = vpop.f32.mrb[0].mxu0
    %467 = vmatprep.mubr.bf16.mxu0 0
    %468 = vmatmul.mubr.bf16.gmra.mrb[0].mxu0 %v316
    %v469 = vpop.f32.mrb[0].mxu0
    %v470 = vadd.f32 %v140, %v469
    %v471 = vpop.f32.mrb[0].mxu0
    %v472 = vpop.f32.mrb[0].mxu0
    %v473 = vadd.f32 %v140, %v472
    %v474 = vpop.f32.mrb[0].mxu0
    %475 = vmatprep.mubr.bf16.mxu0 0
    %476 = vmatmul.mubr.bf16.gmra.mrb[0].mxu0 %v319
    %v477 = vpop.f32.mrb[0].mxu0
    %v478 = vadd.f32 %v140, %v477
    %v479 = vpop.f32.mrb[0].mxu0
    %v480 = vpop.f32.mrb[0].mxu0
    %v481 = vadd.f32 %v140, %v480
    %v482 = vpop.f32.mrb[0].mxu0
    %483 = vmatprep.mubr.bf16.mxu0 0
    %484 = vmatmul.mubr.bf16.gmra.mrb[0].mxu0 %v322
    %v485 = vpop.f32.mrb[0].mxu0
    %v486 = vadd.f32 %v140, %v485
    %v487 = vpop.f32.mrb[0].mxu0
    %v488 = vpop.f32.mrb[0].mxu0
    %v489 = vadd.f32 %v140, %v488
    %v490 = vpop.f32.mrb[0].mxu0
    %491 = vmatprep.mubr.bf16.mxu0 0
    %492 = vmatmul.mubr.bf16.gmra.mrb[0].mxu0 %v325
    %v493 = vpop.f32.mrb[0].mxu0
    %v494 = vadd.f32 %v140, %v493
    %v495 = vpop.f32.mrb[0].mxu0
    %v496 = vpop.f32.mrb[0].mxu0
    %v497 = vadd.f32 %v140, %v496
    %v498 = vpop.f32.mrb[0].mxu0
    %499 = vmatprep.mubr.bf16.mxu0 0
    %500 = vmatmul.mubr.bf16.gmra.mrb[0].mxu0 %v328
    %v501 = vpop.f32.mrb[0].mxu0
    %v502 = vadd.f32 %v140, %v501
    %v503 = vpop.f32.mrb[0].mxu0
    %v504 = vpop.f32.mrb[0].mxu0
    %v505 = vadd.f32 %v140, %v504
    %v506 = vpop.f32.mrb[0].mxu0
    %507 = vmatprep.mubr.bf16.mxu0 0
    %508 = vmatmul.mubr.bf16.gmra.mrb[0].mxu0 %v331
    %v509 = vpop.f32.mrb[0].mxu0
    %v510 = vadd.f32 %v140, %v509
    %v511 = vpop.f32.mrb[0].mxu0
    %v512 = vpop.f32.mrb[0].mxu0
    %v513 = vadd.f32 %v140, %v512
    %v514 = vpop.f32.mrb[0].mxu0
    %515 = vmatprep.mubr.bf16.mxu0 0
    %516 = vmatmul.mubr.bf16.gmra.mrb[0].mxu0 %v334
    %v517 = vpop.f32.mrb[0].mxu0
    %v518 = vadd.f32 %v140, %v517
    %v519 = vpop.f32.mrb[0].mxu0
    %v520 = vpop.f32.mrb[0].mxu0
    %v521 = vadd.f32 %v140, %v520
    %v522 = vpop.f32.mrb[0].mxu0
    %523 = vmatprep.mubr.bf16.mxu0 0
    %524 = vmatmul.mubr.bf16.gmra.mrb[0].mxu0 %v337
    %v525 = vpop.f32.mrb[0].mxu0
    %v526 = vadd.f32 %v140, %v525
    %v527 = vpop.f32.mrb[0].mxu0
    %v528 = vpop.f32.mrb[0].mxu0
    %v529 = vadd.f32 %v140, %v528
    %v530 = vpop.f32.mrb[0].mxu0
    %531 = vmatprep.mubr.bf16.mxu0 0
    %532 = vmatmul.mubr.bf16.gmra.mrb[0].mxu0 %v340
    %v533 = vpop.f32.mrb[0].mxu0
    %v534 = vadd.f32 %v140, %v533
    %v535 = vpop.f32.mrb[0].mxu0
    %v536 = vpop.f32.mrb[0].mxu0
    %v537 = vadd.f32 %v140, %v536
    %v538 = vpop.f32.mrb[0].mxu0
    %539 = vmatprep.mubr.bf16.mxu0 0
    %540 = vmatmul.mubr.bf16.gmra.mrb[0].mxu0 %v343
    %v541 = vpop.f32.mrb[0].mxu0
    %v542 = vadd.f32 %v140, %v541
    %v543 = vpop.f32.mrb[0].mxu0
    %v544 = vpop.f32.mrb[0].mxu0
    %v545 = vadd.f32 %v140, %v544
    %v546 = vpop.f32.mrb[0].mxu0
    %547 = vmatprep.mubr.bf16.mxu0 0
    %548 = vmatmul.mubr.bf16.gmra.mrb[0].mxu0 %v346
    %v549 = vpop.f32.mrb[0].mxu0
    %v550 = vadd.f32 %v140, %v549
    %v551 = vpop.f32.mrb[0].mxu0
    %v552 = vpop.f32.mrb[0].mxu0
    %v553 = vadd.f32 %v140, %v552
    %v554 = vpop.f32.mrb[0].mxu0
    %555 = vmatprep.mubr.bf16.mxu0 0
    %556 = vmatmul.mubr.bf16.gmra.mrb[0].mxu0 %v349
    %v557 = vpop.f32.mrb[0].mxu0
    %v558 = vadd.f32 %v140, %v557
    %v559 = vpop.f32.mrb[0].mxu0
    %v560 = vpop.f32.mrb[0].mxu0
    %v561 = vadd.f32 %v140, %v560
    %v562 = vpop.f32.mrb[0].mxu0
    %563 = vmatprep.mubr.bf16.mxu0 0
    %564 = vmatmul.mubr.bf16.gmra.mrb[0].mxu0 %v352
    %v565 = vpop.f32.mrb[0].mxu0
    %v566 = vadd.f32 %v140, %v565
    %v567 = vpop.f32.mrb[0].mxu0
    %v568 = vpop.f32.mrb[0].mxu0
    %v569 = vadd.f32 %v140, %v568
    %v570 = vpop.f32.mrb[0].mxu0
    %571 = vmatprep.mubr.bf16.mxu0 0
    %572 = vmatmul.mubr.bf16.gmra.mrb[0].mxu0 %v355
    %v573 = vpop.f32.mrb[0].mxu0
    %v574 = vadd.f32 %v140, %v573
    %v575 = vpop.f32.mrb[0].mxu0
    %v576 = vpop.f32.mrb[0].mxu0
    %v577 = vadd.f32 %v140, %v576
    %v578 = vpop.f32.mrb[0].mxu0
    %579 = vmatprep.mubr.bf16.mxu0 0
    %580 = vmatmul.mubr.bf16.gmra.mrb[0].mxu0 %v358
    %v581 = vpop.f32.mrb[0].mxu0
    %v582 = vadd.f32 %v140, %v581
    %v583 = vpop.f32.mrb[0].mxu0
    %v584 = vpop.f32.mrb[0].mxu0
    %v585 = vadd.f32 %v140, %v584
    %v586 = vpop.f32.mrb[0].mxu0
    %587 = vmatprep.mubr.bf16.mxu0 0
    %588 = vmatmul.mubr.bf16.gmra.mrb[0].mxu0 %v361
    %v589 = vpop.f32.mrb[0].mxu0
    %v590 = vadd.f32 %v140, %v589
    %v591 = vpop.f32.mrb[0].mxu0
    %v592 = vpop.f32.mrb[0].mxu0
    %v593 = vadd.f32 %v140, %v592
    %v594 = vpop.f32.mrb[0].mxu0
    %595 = vmatprep.mubr.bf16.mxu0 0
    %596 = vmatmul.mubr.bf16.gmra.mrb[0].mxu0 %v364
    %v597 = vpop.f32.mrb[0].mxu0
    %v598 = vadd.f32 %v140, %v597
    %v599 = vpop.f32.mrb[0].mxu0
    %v600 = vpop.f32.mrb[0].mxu0
    %v601 = vadd.f32 %v140, %v600
    %v602 = vpop.f32.mrb[0].mxu0
    %603 = vmatprep.mubr.bf16.mxu0 0
    %604 = vmatmul.mubr.bf16.gmra.mrb[0].mxu0 %v367
    %v605 = vpop.f32.mrb[0].mxu0
    %v606 = vadd.f32 %v140, %v605
    %v607 = vpop.f32.mrb[0].mxu0
    %v608 = vpop.f32.mrb[0].mxu0
    %v609 = vadd.f32 %v140, %v608
    %v610 = vpop.f32.mrb[0].mxu0
    %611 = vmatprep.mubr.bf16.mxu0 0
    %612 = vmatmul.mubr.bf16.gmra.mrb[0].mxu0 %v370
    %v613 = vpop.f32.mrb[0].mxu0
    %v614 = vadd.f32 %v140, %v613
    %v615 = vpop.f32.mrb[0].mxu0
    %v616 = vpop.f32.mrb[0].mxu0
    %v617 = vadd.f32 %v140, %v616
    %v618 = vpop.f32.mrb[0].mxu0
    %619 = vmatprep.mubr.bf16.mxu0 0
    %620 = vmatmul.mubr.bf16.gmra.mrb[0].mxu0 %v373
    %v621 = vpop.f32.mrb[0].mxu0
    %v622 = vadd.f32 %v140, %v621
    %v623 = vpop.f32.mrb[0].mxu0
    %v624 = vpop.f32.mrb[0].mxu0
    %v625 = vadd.f32 %v140, %v624
    %v626 = vpop.f32.mrb[0].mxu0
    %627 = vmatprep.mubr.bf16.mxu0 0
    %628 = vmatmul.mubr.bf16.gmra.mrb[0].mxu0 %v376
    %v629 = vpop.f32.mrb[0].mxu0
    %v630 = vadd.f32 %v140, %v629
    %v631 = vpop.f32.mrb[0].mxu0
    %v632 = vpop.f32.mrb[0].mxu0
    %v633 = vadd.f32 %v140, %v632
    %v634 = vpop.f32.mrb[0].mxu0
    %635 = vmatprep.mubr.bf16.mxu0 0
    %636 = vmatmul.mubr.bf16.gmra.mrb[0].mxu0 %v379
    %v637 = vpop.f32.mrb[0].mxu0
    %v638 = vadd.f32 %v140, %v637
    %v639 = vpop.f32.mrb[0].mxu0
    %v640 = vpop.f32.mrb[0].mxu0
    %v641 = vadd.f32 %v140, %v640
    %v642 = vpop.f32.mrb[0].mxu0
    %643 = vmatprep.mubr.bf16.mxu0 0
    %644 = vmatmul.mubr.bf16.gmra.mrb[0].mxu0 %v382
    %v645 = vpop.f32.mrb[0].mxu0
    %v646 = vadd.f32 %v140, %v645
    %v647 = vpop.f32.mrb[0].mxu0
    %v648 = vpop.f32.mrb[0].mxu0
    %v649 = vadd.f32 %v140, %v648
    %v650 = vpop.f32.mrb[0].mxu0
    %651 = vmatprep.mubr.bf16.mxu0 0
    %652 = vmatmul.mubr.bf16.gmra.mrb[0].mxu0 %v385
    %v653 = vpop.f32.mrb[0].mxu0
    %v654 = vadd.f32 %v140, %v653
    %v655 = vpop.f32.mrb[0].mxu0
    %v656 = vpop.f32.mrb[0].mxu0
    %v657 = vadd.f32 %v140, %v656
    %v658 = vpop.f32.mrb[0].mxu0
    %659 = vmatprep.mubr.bf16.mxu0 0
    %660 = vmatmul.mubr.bf16.gmra.mrb[0].mxu0 %v388
    %v661 = vpop.f32.mrb[0].mxu0
    %v662 = vadd.f32 %v140, %v661
    %v663 = vpop.f32.mrb[0].mxu0
    %v664 = vpop.f32.mrb[0].mxu0
    %v665 = vadd.f32 %v140, %v664
    %v666 = vpop.f32.mrb[0].mxu0
    %667 = vmatprep.mubr.bf16.mxu0 0
    %668 = vmatmul.mubr.bf16.gmra.mrb[0].mxu0 %v391
    %v669 = vpop.f32.mrb[0].mxu0
    %v670 = vadd.f32 %v140, %v669
    %v671 = vpop.f32.mrb[0].mxu0
    %v672 = vpop.f32.mrb[0].mxu0
    %v673 = vadd.f32 %v140, %v672
    %v674 = vpop.f32.mrb[0].mxu0
    %675 = vmatprep.mubr.bf16.mxu0 0
    %676 = vmatmul.mubr.bf16.gmra.mrb[0].mxu0 %v394
    %v677 = vpop.f32.mrb[0].mxu0
    %v678 = vadd.f32 %v140, %v677
    %v679 = vpop.f32.mrb[0].mxu0
    %v680 = vpop.f32.mrb[0].mxu0
    %v681 = vadd.f32 %v140, %v680
    %v682 = vpop.f32.mrb[0].mxu0
    %683 = vmatprep.mubr.bf16.mxu0 0
    %684 = vmatmul.mubr.bf16.gmra.mrb[0].mxu0 %v397
    %v685 = vpop.f32.mrb[0].mxu0
    %v686 = vadd.f32 %v140, %v685
    %v687 = vpop.f32.mrb[0].mxu0
    %v688 = vpop.f32.mrb[0].mxu0
    %v689 = vadd.f32 %v140, %v688
    %v690 = vpop.f32.mrb[0].mxu0
    %691 = vdwg.mxu0
    %v692 = vld [vmem:[#allocation8] sm:$0xf]
    %v693 = vld [vmem:[#allocation8 + $0x4] sm:$0xf]
    %v694 = vld [vmem:[#allocation8 + $0x8] sm:$0xf]
    %v695 = vld [vmem:[#allocation8 + $0xc] sm:$0xf]
    %v696 = vld [vmem:[#allocation8 + $0x10] sm:$0xf]
    %v697 = vld [vmem:[#allocation8 + $0x14] sm:$0xf]
    %v698 = vld [vmem:[#allocation8 + $0x18] sm:$0xf]
    %v699 = vld [vmem:[#allocation8 + $0x1c] sm:$0xf]
    %v700 = vld [vmem:[#allocation8 + $0x20] sm:$0xf]
    %v701 = vld [vmem:[#allocation8 + $0x24] sm:$0xf]
    %v702 = vld [vmem:[#allocation8 + $0x28] sm:$0xf]
    %v703 = vld [vmem:[#allocation8 + $0x2c] sm:$0xf]
    %v704 = vld [vmem:[#allocation8 + $0x30] sm:$0xf]
    %v705 = vld [vmem:[#allocation8 + $0x34] sm:$0xf]
    %v706 = vld [vmem:[#allocation8 + $0x38] sm:$0xf]
    %v707 = vld [vmem:[#allocation8 + $0x3c] sm:$0xf]
    %v708 = vld [vmem:[#allocation8 + $0x40] sm:$0xf]
    %v709 = vld [vmem:[#allocation8 + $0x44] sm:$0xf]
    %v710 = vld [vmem:[#allocation8 + $0x48] sm:$0xf]
    %v711 = vld [vmem:[#allocation8 + $0x4c] sm:$0xf]
    %v712 = vld [vmem:[#allocation8 + $0x50] sm:$0xf]
    %v713 = vld [vmem:[#allocation8 + $0x54] sm:$0xf]
    %v714 = vld [vmem:[#allocation8 + $0x58] sm:$0xf]
    %v715 = vld [vmem:[#allocation8 + $0x5c] sm:$0xf]
    %v716 = vld [vmem:[#allocation8 + $0x60] sm:$0xf]
    %v717 = vld [vmem:[#allocation8 + $0x64] sm:$0xf]
    %v718 = vld [vmem:[#allocation8 + $0x68] sm:$0xf]
    %v719 = vld [vmem:[#allocation8 + $0x6c] sm:$0xf]
    %v720 = vld [vmem:[#allocation8 + $0x70] sm:$0xf]
    %v721 = vld [vmem:[#allocation8 + $0x74] sm:$0xf]
    %v722 = vld [vmem:[#allocation8 + $0x78] sm:$0xf]
    %v723 = vld [vmem:[#allocation8 + $0x7c] sm:$0xf]
    %v724 = vld [vmem:[#allocation8 + $0x80] sm:$0xf]
    %v725 = vld [vmem:[#allocation8 + $0x84] sm:$0xf]
    %v726 = vld [vmem:[#allocation8 + $0x88] sm:$0xf]
    %v727 = vld [vmem:[#allocation8 + $0x8c] sm:$0xf]
    %v728 = vld [vmem:[#allocation8 + $0x90] sm:$0xf]
    %v729 = vld [vmem:[#allocation8 + $0x94] sm:$0xf]
    %v730 = vld [vmem:[#allocation8 + $0x98] sm:$0xf]
    %v731 = vld [vmem:[#allocation8 + $0x9c] sm:$0xf]
    %v732 = vld [vmem:[#allocation8 + $0xa0] sm:$0xf]
    %v733 = vld [vmem:[#allocation8 + $0xa4] sm:$0xf]
    %v734 = vld [vmem:[#allocation8 + $0xa8] sm:$0xf]
    %v735 = vld [vmem:[#allocation8 + $0xac] sm:$0xf]
    %v736 = vld [vmem:[#allocation8 + $0xb0] sm:$0xf]
    %v737 = vld [vmem:[#allocation8 + $0xb4] sm:$0xf]
    %v738 = vld [vmem:[#allocation8 + $0xb8] sm:$0xf]
    %v739 = vld [vmem:[#allocation8 + $0xbc] sm:$0xf]
    %v740 = vld [vmem:[#allocation8 + $0xc0] sm:$0xf]
    %v741 = vld [vmem:[#allocation8 + $0xc4] sm:$0xf]
    %v742 = vld [vmem:[#allocation8 + $0xc8] sm:$0xf]
    %v743 = vld [vmem:[#allocation8 + $0xcc] sm:$0xf]
    %v744 = vld [vmem:[#allocation8 + $0xd0] sm:$0xf]
    %v745 = vld [vmem:[#allocation8 + $0xd4] sm:$0xf]
    %v746 = vld [vmem:[#allocation8 + $0xd8] sm:$0xf]
    %v747 = vld [vmem:[#allocation8 + $0xdc] sm:$0xf]
    %v748 = vld [vmem:[#allocation8 + $0xe0] sm:$0xf]
    %v749 = vld [vmem:[#allocation8 + $0xe4] sm:$0xf]
    %v750 = vld [vmem:[#allocation8 + $0xe8] sm:$0xf]
    %v751 = vld [vmem:[#allocation8 + $0xec] sm:$0xf]
    %v752 = vld [vmem:[#allocation8 + $0xf0] sm:$0xf]
    %v753 = vld [vmem:[#allocation8 + $0xf4] sm:$0xf]
    %v754 = vld [vmem:[#allocation8 + $0xf8] sm:$0xf]
    %v755 = vld [vmem:[#allocation8 + $0xfc] sm:$0xf]
    %v756 = vunpack.c.l.bf16 %v692
    %v757 = vunpack.c.l.bf16 %v693
    %v758 = vunpack.c.l.bf16 %v694
    %v759 = vunpack.c.l.bf16 %v695
    %v760 = vunpack.c.l.bf16 %v696
    %v761 = vunpack.c.l.bf16 %v697
    %v762 = vunpack.c.l.bf16 %v698
    %v763 = vunpack.c.l.bf16 %v699
    %v764 = vunpack.c.l.bf16 %v700
    %v765 = vunpack.c.l.bf16 %v701
    %v766 = vunpack.c.l.bf16 %v702
    %v767 = vunpack.c.l.bf16 %v703
    %v768 = vunpack.c.l.bf16 %v704
    %v769 = vunpack.c.l.bf16 %v705
    %v770 = vunpack.c.l.bf16 %v706
    %v771 = vunpack.c.l.bf16 %v707
    %v772 = vunpack.c.l.bf16 %v708
    %v773 = vunpack.c.l.bf16 %v709
    %v774 = vunpack.c.l.bf16 %v710
    %v775 = vunpack.c.l.bf16 %v711
    %v776 = vunpack.c.l.bf16 %v712
    %v777 = vunpack.c.l.bf16 %v713
    %v778 = vunpack.c.l.bf16 %v714
    %v779 = vunpack.c.l.bf16 %v715
    %v780 = vunpack.c.l.bf16 %v716
    %v781 = vunpack.c.l.bf16 %v717
    %v782 = vunpack.c.l.bf16 %v718
    %v783 = vunpack.c.l.bf16 %v719
    %v784 = vunpack.c.l.bf16 %v720
    %v785 = vunpack.c.l.bf16 %v721
    %v786 = vunpack.c.l.bf16 %v722
    %v787 = vunpack.c.l.bf16 %v723
    %v788 = vunpack.c.l.bf16 %v724
    %v789 = vunpack.c.l.bf16 %v725
    %v790 = vunpack.c.l.bf16 %v726
    %v791 = vunpack.c.l.bf16 %v727
    %v792 = vunpack.c.l.bf16 %v728
    %v793 = vunpack.c.l.bf16 %v729
    %v794 = vunpack.c.l.bf16 %v730
    %v795 = vunpack.c.l.bf16 %v731
    %v796 = vunpack.c.l.bf16 %v732
    %v797 = vunpack.c.l.bf16 %v733
    %v798 = vunpack.c.l.bf16 %v734
    %v799 = vunpack.c.l.bf16 %v735
    %v800 = vunpack.c.l.bf16 %v736
    %v801 = vunpack.c.l.bf16 %v737
    %v802 = vunpack.c.l.bf16 %v738
    %v803 = vunpack.c.l.bf16 %v739
    %v804 = vunpack.c.l.bf16 %v740
    %v805 = vunpack.c.l.bf16 %v741
    %v806 = vunpack.c.l.bf16 %v742
    %v807 = vunpack.c.l.bf16 %v743
    %v808 = vunpack.c.l.bf16 %v744
    %v809 = vunpack.c.l.bf16 %v745
    %v810 = vunpack.c.l.bf16 %v746
    %v811 = vunpack.c.l.bf16 %v747
    %v812 = vunpack.c.l.bf16 %v748
    %v813 = vunpack.c.l.bf16 %v749
    %v814 = vunpack.c.l.bf16 %v750
    %v815 = vunpack.c.l.bf16 %v751
    %v816 = vunpack.c.l.bf16 %v752
    %v817 = vunpack.c.l.bf16 %v753
    %v818 = vunpack.c.l.bf16 %v754
    %v819 = vunpack.c.l.bf16 %v755
    %v820 = vadd.f32 %v438, %v756
    %v821 = vadd.f32 %v441, %v757
    %v822 = vadd.f32 %v446, %v758
    %v823 = vadd.f32 %v449, %v759
    %v824 = vadd.f32 %v454, %v760
    %v825 = vadd.f32 %v457, %v761
    %v826 = vadd.f32 %v462, %v762
    %v827 = vadd.f32 %v465, %v763
    %v828 = vadd.f32 %v470, %v764
    %v829 = vadd.f32 %v473, %v765
    %v830 = vadd.f32 %v478, %v766
    %v831 = vadd.f32 %v481, %v767
    %v832 = vadd.f32 %v486, %v768
    %v833 = vadd.f32 %v489, %v769
    %v834 = vadd.f32 %v494, %v770
    %v835 = vadd.f32 %v497, %v771
    %v836 = vadd.f32 %v502, %v772
    %v837 = vadd.f32 %v505, %v773
    %v838 = vadd.f32 %v510, %v774
    %v839 = vadd.f32 %v513, %v775
    %v840 = vadd.f32 %v518, %v776
    %v841 = vadd.f32 %v521, %v777
    %v842 = vadd.f32 %v526, %v778
    %v843 = vadd.f32 %v529, %v779
    %v844 = vadd.f32 %v534, %v780
    %v845 = vadd.f32 %v537, %v781
    %v846 = vadd.f32 %v542, %v782
    %v847 = vadd.f32 %v545, %v783
    %v848 = vadd.f32 %v550, %v784
    %v849 = vadd.f32 %v553, %v785
    %v850 = vadd.f32 %v558, %v786
    %v851 = vadd.f32 %v561, %v787
    %v852 = vadd.f32 %v566, %v788
    %v853 = vadd.f32 %v569, %v789
    %v854 = vadd.f32 %v574, %v790
    %v855 = vadd.f32 %v577, %v791
    %v856 = vadd.f32 %v582, %v792
    %v857 = vadd.f32 %v585, %v793
    %v858 = vadd.f32 %v590, %v794
    %v859 = vadd.f32 %v593, %v795
    %v860 = vadd.f32 %v598, %v796
    %v861 = vadd.f32 %v601, %v797
    %v862 = vadd.f32 %v606, %v798
    %v863 = vadd.f32 %v609, %v799
    %v864 = vadd.f32 %v614, %v800
    %v865 = vadd.f32 %v617, %v801
    %v866 = vadd.f32 %v622, %v802
    %v867 = vadd.f32 %v625, %v803
    %v868 = vadd.f32 %v630, %v804
    %v869 = vadd.f32 %v633, %v805
    %v870 = vadd.f32 %v638, %v806
    %v871 = vadd.f32 %v641, %v807
    %v872 = vadd.f32 %v646, %v808
    %v873 = vadd.f32 %v649, %v809
    %v874 = vadd.f32 %v654, %v810
    %v875 = vadd.f32 %v657, %v811
    %v876 = vadd.f32 %v662, %v812
    %v877 = vadd.f32 %v665, %v813
    %v878 = vadd.f32 %v670, %v814
    %v879 = vadd.f32 %v673, %v815
    %v880 = vadd.f32 %v678, %v816
    %v881 = vadd.f32 %v681, %v817
    %v882 = vadd.f32 %v686, %v818
    %v883 = vadd.f32 %v689, %v819
    %v884 = vmax.f32 %v820, 0.0
    %v885 = vmax.f32 %v821, 0.0
    %v886 = vmax.f32 %v822, 0.0
    %v887 = vmax.f32 %v823, 0.0
    %v888 = vmax.f32 %v824, 0.0
    %v889 = vmax.f32 %v825, 0.0
    %v890 = vmax.f32 %v826, 0.0
    %v891 = vmax.f32 %v827, 0.0
    %v892 = vmax.f32 %v828, 0.0
    %v893 = vmax.f32 %v829, 0.0
    %v894 = vmax.f32 %v830, 0.0
    %v895 = vmax.f32 %v831, 0.0
    %v896 = vmax.f32 %v832, 0.0
    %v897 = vmax.f32 %v833, 0.0
    %v898 = vmax.f32 %v834, 0.0
    %v899 = vmax.f32 %v835, 0.0
    %v900 = vmax.f32 %v836, 0.0
    %v901 = vmax.f32 %v837, 0.0
    %v902 = vmax.f32 %v838, 0.0
    %v903 = vmax.f32 %v839, 0.0
    %v904 = vmax.f32 %v840, 0.0
    %v905 = vmax.f32 %v841, 0.0
    %v906 = vmax.f32 %v842, 0.0
    %v907 = vmax.f32 %v843, 0.0
    %v908 = vmax.f32 %v844, 0.0
    %v909 = vmax.f32 %v845, 0.0
    %v910 = vmax.f32 %v846, 0.0
    %v911 = vmax.f32 %v847, 0.0
    %v912 = vmax.f32 %v848, 0.0
    %v913 = vmax.f32 %v849, 0.0
    %v914 = vmax.f32 %v850, 0.0
    %v915 = vmax.f32 %v851, 0.0
    %v916 = vmax.f32 %v852, 0.0
    %v917 = vmax.f32 %v853, 0.0
    %v918 = vmax.f32 %v854, 0.0
    %v919 = vmax.f32 %v855, 0.0
    %v920 = vmax.f32 %v856, 0.0
    %v921 = vmax.f32 %v857, 0.0
    %v922 = vmax.f32 %v858, 0.0
    %v923 = vmax.f32 %v859, 0.0
    %v924 = vmax.f32 %v860, 0.0
    %v925 = vmax.f32 %v861, 0.0
    %v926 = vmax.f32 %v862, 0.0
    %v927 = vmax.f32 %v863, 0.0
    %v928 = vmax.f32 %v864, 0.0
    %v929 = vmax.f32 %v865, 0.0
    %v930 = vmax.f32 %v866, 0.0
    %v931 = vmax.f32 %v867, 0.0
    %v932 = vmax.f32 %v868, 0.0
    %v933 = vmax.f32 %v869, 0.0
    %v934 = vmax.f32 %v870, 0.0
    %v935 = vmax.f32 %v871, 0.0
    %v936 = vmax.f32 %v872, 0.0
    %v937 = vmax.f32 %v873, 0.0
    %v938 = vmax.f32 %v874, 0.0
    %v939 = vmax.f32 %v875, 0.0
    %v940 = vmax.f32 %v876, 0.0
    %v941 = vmax.f32 %v877, 0.0
    %v942 = vmax.f32 %v878, 0.0
    %v943 = vmax.f32 %v879, 0.0
    %v944 = vmax.f32 %v880, 0.0
    %v945 = vmax.f32 %v881, 0.0
    %v946 = vmax.f32 %v882, 0.0
    %v947 = vmax.f32 %v883, 0.0
    %vm948 = vcmask 261120
    %949 = vst.msk [vmem:[#allocation10] sm:$0xff] %vm948, %v884
    %950 = vst.msk [vmem:[#allocation10 + $0x8] sm:$0xff] %vm948, %v885
    %951 = vst.msk [vmem:[#allocation10 + $0x10] sm:$0xff] %vm948, %v886
    %952 = vst.msk [vmem:[#allocation10 + $0x18] sm:$0xff] %vm948, %v887
    %953 = vst.msk [vmem:[#allocation10 + $0x20] sm:$0xff] %vm948, %v888
    %954 = vst.msk [vmem:[#allocation10 + $0x28] sm:$0xff] %vm948, %v889
    %955 = vst.msk [vmem:[#allocation10 + $0x30] sm:$0xff] %vm948, %v890
    %956 = vst.msk [vmem:[#allocation10 + $0x38] sm:$0xff] %vm948, %v891
    %957 = vst.msk [vmem:[#allocation10 + $0x40] sm:$0xff] %vm948, %v892
    %958 = vst.msk [vmem:[#allocation10 + $0x48] sm:$0xff] %vm948, %v893
    %959 = vst.msk [vmem:[#allocation10 + $0x50] sm:$0xff] %vm948, %v894
    %960 = vst.msk [vmem:[#allocation10 + $0x58] sm:$0xff] %vm948, %v895
    %961 = vst.msk [vmem:[#allocation10 + $0x60] sm:$0xff] %vm948, %v896
    %962 = vst.msk [vmem:[#allocation10 + $0x68] sm:$0xff] %vm948, %v897
    %963 = vst.msk [vmem:[#allocation10 + $0x70] sm:$0xff] %vm948, %v898
    %964 = vst.msk [vmem:[#allocation10 + $0x78] sm:$0xff] %vm948, %v899
    %965 = vst.msk [vmem:[#allocation10 + $0x80] sm:$0xff] %vm948, %v900
    %966 = vst.msk [vmem:[#allocation10 + $0x88] sm:$0xff] %vm948, %v901
    %967 = vst.msk [vmem:[#allocation10 + $0x90] sm:$0xff] %vm948, %v902
    %968 = vst.msk [vmem:[#allocation10 + $0x98] sm:$0xff] %vm948, %v903
    %969 = vst.msk [vmem:[#allocation10 + $0xa0] sm:$0xff] %vm948, %v904
    %970 = vst.msk [vmem:[#allocation10 + $0xa8] sm:$0xff] %vm948, %v905
    %971 = vst.msk [vmem:[#allocation10 + $0xb0] sm:$0xff] %vm948, %v906
    %972 = vst.msk [vmem:[#allocation10 + $0xb8] sm:$0xff] %vm948, %v907
    %973 = vst.msk [vmem:[#allocation10 + $0xc0] sm:$0xff] %vm948, %v908
    %974 = vst.msk [vmem:[#allocation10 + $0xc8] sm:$0xff] %vm948, %v909
    %975 = vst.msk [vmem:[#allocation10 + $0xd0] sm:$0xff] %vm948, %v910
    %976 = vst.msk [vmem:[#allocation10 + $0xd8] sm:$0xff] %vm948, %v911
    %977 = vst.msk [vmem:[#allocation10 + $0xe0] sm:$0xff] %vm948, %v912
    %978 = vst.msk [vmem:[#allocation10 + $0xe8] sm:$0xff] %vm948, %v913
    %979 = vst.msk [vmem:[#allocation10 + $0xf0] sm:$0xff] %vm948, %v914
    %980 = vst.msk [vmem:[#allocation10 + $0xf8] sm:$0xff] %vm948, %v915
    %981 = vst.msk [vmem:[#allocation10 + $0x100] sm:$0xff] %vm948, %v916
    %982 = vst.msk [vmem:[#allocation10 + $0x108] sm:$0xff] %vm948, %v917
    %983 = vst.msk [vmem:[#allocation10 + $0x110] sm:$0xff] %vm948, %v918
    %984 = vst.msk [vmem:[#allocation10 + $0x118] sm:$0xff] %vm948, %v919
    %985 = vst.msk [vmem:[#allocation10 + $0x120] sm:$0xff] %vm948, %v920
    %986 = vst.msk [vmem:[#allocation10 + $0x128] sm:$0xff] %vm948, %v921
    %987 = vst.msk [vmem:[#allocation10 + $0x130] sm:$0xff] %vm948, %v922
    %988 = vst.msk [vmem:[#allocation10 + $0x138] sm:$0xff] %vm948, %v923
    %989 = vst.msk [vmem:[#allocation10 + $0x140] sm:$0xff] %vm948, %v924
    %990 = vst.msk [vmem:[#allocation10 + $0x148] sm:$0xff] %vm948, %v925
    %991 = vst.msk [vmem:[#allocation10 + $0x150] sm:$0xff] %vm948, %v926
    %992 = vst.msk [vmem:[#allocation10 + $0x158] sm:$0xff] %vm948, %v927
    %993 = vst.msk [vmem:[#allocation10 + $0x160] sm:$0xff] %vm948, %v928
    %994 = vst.msk [vmem:[#allocation10 + $0x168] sm:$0xff] %vm948, %v929
    %995 = vst.msk [vmem:[#allocation10 + $0x170] sm:$0xff] %vm948, %v930
    %996 = vst.msk [vmem:[#allocation10 + $0x178] sm:$0xff] %vm948, %v931
    %997 = vst.msk [vmem:[#allocation10 + $0x180] sm:$0xff] %vm948, %v932
    %998 = vst.msk [vmem:[#allocation10 + $0x188] sm:$0xff] %vm948, %v933
    %999 = vst.msk [vmem:[#allocation10 + $0x190] sm:$0xff] %vm948, %v934
    %1000 = vst.msk [vmem:[#allocation10 + $0x198] sm:$0xff] %vm948, %v935
    %1001 = vst.msk [vmem:[#allocation10 + $0x1a0] sm:$0xff] %vm948, %v936
    %1002 = vst.msk [vmem:[#allocation10 + $0x1a8] sm:$0xff] %vm948, %v937
    %1003 = vst.msk [vmem:[#allocation10 + $0x1b0] sm:$0xff] %vm948, %v938
    %1004 = vst.msk [vmem:[#allocation10 + $0x1b8] sm:$0xff] %vm948, %v939
    %1005 = vst.msk [vmem:[#allocation10 + $0x1c0] sm:$0xff] %vm948, %v940
    %1006 = vst.msk [vmem:[#allocation10 + $0x1c8] sm:$0xff] %vm948, %v941
    %1007 = vst.msk [vmem:[#allocation10 + $0x1d0] sm:$0xff] %vm948, %v942
    %1008 = vst.msk [vmem:[#allocation10 + $0x1d8] sm:$0xff] %vm948, %v943
    %1009 = vst.msk [vmem:[#allocation10 + $0x1e0] sm:$0xff] %vm948, %v944
    %1010 = vst.msk [vmem:[#allocation10 + $0x1e8] sm:$0xff] %vm948, %v945
    %1011 = vst.msk [vmem:[#allocation10 + $0x1f0] sm:$0xff] %vm948, %v946
    %1012 = vst.msk [vmem:[#allocation10 + $0x1f8] sm:$0xff] %vm948, %v947
    // Predicated region
    $region34: #{tablock_forward.5} parent=1 // pred_check
      _
    $region35: #{tablock_forward.5} parent=1 // pred_check_branch
      %1014 = sbr.rel (0) target = $region37
    $region36: #{tablock_forward.5} parent=1 // pred_region
      %s1016 = ssub.s32 8192, 8192
      %1017 = vsyncadd [#allocation4], %s1016
      %s1018 = sshll.u32 [#allocation10], 4
      %s1019 = int_to_ptr.vmem [resolvable:$true] %s1018
      %1024 = dma.vmem_to_hbm [thread:$0]  %s1019, 8192, %s4, [#allocation4], 128, 128, 8
    $region37: #{tablock_forward.5} parent=1 // pred_fallthru
      _
    // Predicated region
    $region38: #{tablock_forward.5} parent=1 // pred_check
      _
    $region39: #{tablock_forward.5} parent=1 // pred_check_branch
      %1026 = sbr.rel (0) target = $region41
    $region40: #{tablock_forward.5} parent=1 // pred_region
      %1027 = dma.done [#allocation4], 8192
    $region41: #{tablock_forward.5} parent=1 // pred_fallthru
      _
    %1028 = vsyncpa [#allocation3], 1
    %1029 = vsyncpa [#allocation6], 1
    %1030 = vsyncpa [#allocation9], 1
    %1031 = vsyncpa [#allocation4], 1

// kernel: tablock_forward.4
$region0: #{tablock_forward.4}
  #allocation0 [shape = 'u32[]', space=smem, size = 0x4, offset = 0x4, fixed_abs, tag = 'smem constant byte address 0x4 - core index']
  #allocation1 [shape = 'u32[144,128]{1,0:T(1,128)}', space=vmem, size = 0x12000, scoped, tag = 'internal scratch']
  #allocation2 [shape = 'bf16[110,8]{1,0:T(8,128)(2,1)}', space=vmem, size = 0x7000, scoped, tag = 'scratch operand']
  %s0 = inlined_call_operand.hbm [shape: bf16[2,4,64,8], index: 0, kind: input, shape index: {}, may-alias: {0,1,2}]
  %s1 = inlined_call_operand.hbm [shape: bf16[2,4,64,8], index: 1, kind: input, shape index: {}, may-alias: {0,1,2}]
  %s2 = inlined_call_operand.hbm [shape: bf16[2,4,64,8], index: 2, kind: input, shape index: {}, may-alias: {0,1,2}]
  %s3 = inlined_call_operand.hbm [shape: f32[2,4,3,8], index: 3, kind: input, shape index: {}]
  %s4 = inlined_call_operand.hbm [shape: bf16[9,8,8], index: 4, kind: input, shape index: {}]
  %s5 = inlined_call_operand.hbm [shape: f32[1,8], index: 5, kind: input, shape index: {}]
  %s6 = inlined_call_operand.hbm [shape: bf16[2,4,80,8], index: 6, kind: output, shape index: {}]
  %s7 = sld [smem:[#allocation0]]
  $region81: #{tablock_forward.4} parent=0
    _
  %s9 = ssub.s32 1, %s7
  %s10 = scalar_select 0, %s9, %s7
  $region1: #{tablock_forward.4} parent=0
    #allocation3 [shape = 'u8[32768]{0}', space=vmem, size = 0x8000, scoped, tag = 'input window, operand 0']
    #allocation4 [shape = 's32[2]{0}', space=sflag, size = 0x8, scoped, tag = 'scoped memory for tablock_forward.4']
    #allocation5 [shape = 's32[2]{0}', space=sflag, size = 0x8, scoped, tag = 'scoped memory for tablock_forward.4']
    #allocation6 [shape = 'u8[32768]{0}', space=vmem, size = 0x8000, scoped, tag = 'input window, operand 1']
    #allocation7 [shape = 's32[2]{0}', space=sflag, size = 0x8, scoped, tag = 'scoped memory for tablock_forward.4']
    #allocation8 [shape = 'u8[32768]{0}', space=vmem, size = 0x8000, scoped, tag = 'input window, operand 2']
    #allocation9 [shape = 'u8[4096]{0}', space=vmem, size = 0x1000, scoped, tag = 'input window, operand 3']
    #allocation10 [shape = 's32[2]{0}', space=sflag, size = 0x8, scoped, tag = 'scoped memory for tablock_forward.4']
    #allocation11 [shape = 'u8[18432]{0}', space=vmem, size = 0x4800, scoped, tag = 'input window, operand 4, single buffered']
    #allocation12 [shape = 'u8[512]{0}', space=vmem, size = 0x400, scoped, tag = 'input window, operand 5, single buffered']
    #allocation13 [shape = 's32[1]{0}', space=sflag, size = 0x4, scoped, tag = 'scoped memory for tablock_forward.4']
    #allocation14 [shape = 'u8[40960]{0}', space=vmem, size = 0xa000, scoped, tag = 'output window, operand 0']
    %11 = vsyncpa [#allocation4], 0
    %s12 = scalar_lea.sflag [#allocation4], 1
    %13 = vsyncpa %s12, 0
    %14 = vsyncpa [#allocation7], 0
    %s15 = scalar_lea.sflag [#allocation7], 1
    %16 = vsyncpa %s15, 0
    %17 = vsyncpa [#allocation10], 0
    %s18 = scalar_lea.sflag [#allocation10], 1
    %19 = vsyncpa %s18, 0
    %20 = vsyncpa [#allocation13], 0
    %21 = vsyncpa [#allocation5], 0
    %s22 = scalar_lea.sflag [#allocation5], 1
    %23 = vsyncpa %s22, 0
    loop: start=0, step=1, limit=10
    $region2: #{tablock_forward.4} parent=1 // loop_pre_header
      _
    $region3: #{tablock_forward.4} parent=1 // loop_header
      %s25 = sphi 0, %s29
      %p26 = scmp.ge.s32.totalorder %s25, 10
      %s32 = sphi 0, %s44
      %s33 = sphi 0, %s40
      %s34 = sphi 0, %s32
      %s35 = sphi 0, %s33
      %s36 = sphi 0, %s34
      %s37 = sphi 0, %s35
      %s55 = sphi 0, %s57
      %s58 = sphi 0, %s55
      %s59 = sphi 0, %s58
      %s75 = sphi 0, %s59
      %s83 = sphi 0, %s85
      %s86 = sphi 0, %s83
      %s87 = sphi 0, %s86
      %s103 = sphi 0, %s87
      %s117 = sphi 0, %s119
      %s120 = sphi 0, %s117
      %s121 = sphi 0, %s120
      %s137 = sphi 0, %s121
      %s145 = sphi 0, %s147
      %s148 = sphi 0, %s145
      %s149 = sphi 0, %s148
      %s165 = sphi 0, %s149
      %s169 = sphi 0, %s169
      %s171 = sphi 0, %s169
      %s172 = sphi 0, %s171
      %s186 = sphi 0, %s172
      %s190 = sphi 0, %s190
      %s192 = sphi 0, %s190
      %s193 = sphi 0, %s192
      %s207 = sphi 0, %s193
      %s215 = sphi 0, %s217
      %s218 = sphi 0, %s215
      %s219 = sphi 0, %s218
      %s235 = sphi 0, %s219
    $region4: #{tablock_forward.4} parent=1 // loop_header_branch
      %28 = sbr.rel (%p26) target = $region8
    $region5: #{tablock_forward.4} parent=1 // loop_body
      %s30 = ssub.s32 %s25, 1
      %s31 = ssub.s32 %s25, 2
      %s38 = sadd.s32 1, %s33
      %p39 = scmp.ge.s32.totalorder %s38, 4
      %s40 = scalar_select %p39, 0, %s38
      %s41 = sadd.s32 1, %s32
      %s42 = scalar_select %p39, %s41, %s32
      %p43 = scmp.ge.s32.totalorder %s42, 2
      %s44 = scalar_select %p43, 0, %s42
      %s45 = ssub.s32 %s33, 1
      %p46 = scmp.gt.s32.totalorder %s45, 0
      %s47 = scalar_select %p46, %s45, 0
      %s48 = ssub.s32 %s40, 1
      %p49 = scmp.gt.s32.totalorder %s48, 0
      %s50 = scalar_select %p49, %s48, 0
      %s51 = ssub.s32 %s32, %s44
      %s52 = ssub.s32 %s47, %s50
      %s53 = sor.u32 %s51, %s52
      %p54 = scmp.eq.s32.totalorder %s53, 0
      %s56 = sadd.s32 %s55, 1
      %s57 = scalar_select %p54, %s55, %s56
      %p60 = pneg %p54
      %p61 = scmp.eq.s32.totalorder %s25, 7
      %p62 = por %p60, %p61
      %p63 = scmp.ne.s32.totalorder %s55, %s58
      %p64 = scmp.eq.s32.totalorder %s25, 0
      %p65 = por %p63, %p64
      %p66 = scmp.ne.s32.totalorder %s55, %s58
      %p67 = scmp.eq.s32.totalorder %s30, 7
      %p68 = por %p66, %p67
      %p69 = scmp.ne.s32.totalorder %s58, %s59
      %p70 = scmp.eq.s32.totalorder %s30, 0
      %p71 = por %p69, %p70
      %p72 = scmp.ne.s32.totalorder %s58, %s59
      %p73 = scmp.eq.s32.totalorder %s31, 7
      %p74 = por %p72, %p73
      %p76 = scmp.ne.s32.totalorder %s59, %s75
      %p77 = scmp.eq.s32.totalorder %s31, 0
      %p78 = por %p76, %p77
      %s79 = ssub.s32 %s32, %s44
      %s80 = ssub.s32 %s33, %s40
      %s81 = sor.u32 %s79, %s80
      %p82 = scmp.eq.s32.totalorder %s81, 0
      %s84 = sadd.s32 %s83, 1
      %s85 = scalar_select %p82, %s83, %s84
      %p88 = pneg %p82
      %p89 = scmp.eq.s32.totalorder %s25, 7
      %p90 = por %p88, %p89
      %p91 = scmp.ne.s32.totalorder %s83, %s86
      %p92 = scmp.eq.s32.totalorder %s25, 0
      %p93 = por %p91, %p92
      %p94 = scmp.ne.s32.totalorder %s83, %s86
      %p95 = scmp.eq.s32.totalorder %s30, 7
      %p96 = por %p94, %p95
      %p97 = scmp.ne.s32.totalorder %s86, %s87
      %p98 = scmp.eq.s32.totalorder %s30, 0
      %p99 = por %p97, %p98
      %p100 = scmp.ne.s32.totalorder %s86, %s87
      %p101 = scmp.eq.s32.totalorder %s31, 7
      %p102 = por %p100, %p101
      %p104 = scmp.ne.s32.totalorder %s87, %s103
      %p105 = scmp.eq.s32.totalorder %s31, 0
      %p106 = por %p104, %p105
      %s107 = sadd.s32 %s33, 1
      %p108 = scmp.lt.s32.totalorder %s107, 3
      %s109 = scalar_select %p108, %s107, 3
      %s110 = sadd.s32 %s40, 1
      %p111 = scmp.lt.s32.totalorder %s110, 3
      %s112 = scalar_select %p111, %s110, 3
      %s113 = ssub.s32 %s32, %s44
      %s114 = ssub.s32 %s109, %s112
      %s115 = sor.u32 %s113, %s114
      %p116 = scmp.eq.s32.totalorder %s115, 0
      %s118 = sadd.s32 %s117, 1
      %s119 = scalar_select %p116, %s117, %s118
      %p122 = pneg %p116
      %p123 = scmp.eq.s32.totalorder %s25, 7
      %p124 = por %p122, %p123
      %p125 = scmp.ne.s32.totalorder %s117, %s120
      %p126 = scmp.eq.s32.totalorder %s25, 0
      %p127 = por %p125, %p126
      %p128 = scmp.ne.s32.totalorder %s117, %s120
      %p129 = scmp.eq.s32.totalorder %s30, 7
      %p130 = por %p128, %p129
      %p131 = scmp.ne.s32.totalorder %s120, %s121
      %p132 = scmp.eq.s32.totalorder %s30, 0
      %p133 = por %p131, %p132
      %p134 = scmp.ne.s32.totalorder %s120, %s121
      %p135 = scmp.eq.s32.totalorder %s31, 7
      %p136 = por %p134, %p135
      %p138 = scmp.ne.s32.totalorder %s121, %s137
      %p139 = scmp.eq.s32.totalorder %s31, 0
      %p140 = por %p138, %p139
      %s141 = ssub.s32 %s32, %s44
      %s142 = ssub.s32 %s33, %s40
      %s143 = sor.u32 %s141, %s142
      %p144 = scmp.eq.s32.totalorder %s143, 0
      %s146 = sadd.s32 %s145, 1
      %s147 = scalar_select %p144, %s145, %s146
      %p150 = pneg %p144
      %p151 = scmp.eq.s32.totalorder %s25, 7
      %p152 = por %p150, %p151
      %p153 = scmp.ne.s32.totalorder %s145, %s148
      %p154 = scmp.eq.s32.totalorder %s25, 0
      %p155 = por %p153, %p154
      %p156 = scmp.ne.s32.totalorder %s145, %s148
      %p157 = scmp.eq.s32.totalorder %s30, 7
      %p158 = por %p156, %p157
      %p159 = scmp.ne.s32.totalorder %s148, %s149
      %p160 = scmp.eq.s32.totalorder %s30, 0
      %p161 = por %p159, %p160
      %p162 = scmp.ne.s32.totalorder %s148, %s149
      %p163 = scmp.eq.s32.totalorder %s31, 7
      %p164 = por %p162, %p163
      %p166 = scmp.ne.s32.totalorder %s149, %s165
      %p167 = scmp.eq.s32.totalorder %s31, 0
      %p168 = por %p166, %p167
      %s170 = sadd.s32 %s169, 1
      %p173 = scmp.eq.s32.totalorder %s25, 7
      %p174 = scmp.ne.s32.totalorder %s169, %s171
      %p175 = scmp.eq.s32.totalorder %s25, 0
      %p176 = por %p174, %p175
      %p177 = scmp.ne.s32.totalorder %s169, %s171
      %p178 = scmp.eq.s32.totalorder %s30, 7
      %p179 = por %p177, %p178
      %p180 = scmp.ne.s32.totalorder %s171, %s172
      %p181 = scmp.eq.s32.totalorder %s30, 0
      %p182 = por %p180, %p181
      %p183 = scmp.ne.s32.totalorder %s171, %s172
      %p184 = scmp.eq.s32.totalorder %s31, 7
      %p185 = por %p183, %p184
      %p187 = scmp.ne.s32.totalorder %s172, %s186
      %p188 = scmp.eq.s32.totalorder %s31, 0
      %p189 = por %p187, %p188
      %s191 = sadd.s32 %s190, 1
      %p194 = scmp.eq.s32.totalorder %s25, 7
      %p195 = scmp.ne.s32.totalorder %s190, %s192
      %p196 = scmp.eq.s32.totalorder %s25, 0
      %p197 = por %p195, %p196
      %p198 = scmp.ne.s32.totalorder %s190, %s192
      %p199 = scmp.eq.s32.totalorder %s30, 7
      %p200 = por %p198, %p199
      %p201 = scmp.ne.s32.totalorder %s192, %s193
      %p202 = scmp.eq.s32.totalorder %s30, 0
      %p203 = por %p201, %p202
      %p204 = scmp.ne.s32.totalorder %s192, %s193
      %p205 = scmp.eq.s32.totalorder %s31, 7
      %p206 = por %p204, %p205
      %p208 = scmp.ne.s32.totalorder %s193, %s207
      %p209 = scmp.eq.s32.totalorder %s31, 0
      %p210 = por %p208, %p209
      %s211 = ssub.s32 %s32, %s44
      %s212 = ssub.s32 %s33, %s40
      %s213 = sor.u32 %s211, %s212
      %p214 = scmp.eq.s32.totalorder %s213, 0
      %s216 = sadd.s32 %s215, 1
      %s217 = scalar_select %p214, %s215, %s216
      %p220 = pneg %p214
      %p221 = scmp.eq.s32.totalorder %s25, 7
      %p222 = por %p220, %p221
      %p223 = scmp.ne.s32.totalorder %s215, %s218
      %p224 = scmp.eq.s32.totalorder %s25, 0
      %p225 = por %p223, %p224
      %p226 = scmp.ne.s32.totalorder %s215, %s218
      %p227 = scmp.eq.s32.totalorder %s30, 7
      %p228 = por %p226, %p227
      %p229 = scmp.ne.s32.totalorder %s218, %s219
      %p230 = scmp.eq.s32.totalorder %s30, 0
      %p231 = por %p229, %p230
      %p232 = scmp.ne.s32.totalorder %s218, %s219
      %p233 = scmp.eq.s32.totalorder %s31, 7
      %p234 = por %p232, %p233
      %p236 = scmp.ne.s32.totalorder %s219, %s235
      %p237 = scmp.eq.s32.totalorder %s31, 0
      %p238 = por %p236, %p237
      %p239 = scmp.le.s32.totalorder 1, %s25
      %p240 = scmp.lt.s32.totalorder %s25, 9
      %p241 = pnand %p239, %p240
      %p242 = pneg %p241
      // Predicated region
      $region9: #{tablock_forward.4} parent=5 // pred_check
        _
      $region10: #{tablock_forward.4} parent=5 // pred_check_branch
        %244 = sbr.rel (%p241) target = $region12
      $region11: #{tablock_forward.4} parent=5 // pred_region
        %s245 = ssub.s32 %s25, 1
        // Predicated region
        $region13: #{tablock_forward.4} parent=11 // pred_check
          %p246 = pneg %p182
        $region14: #{tablock_forward.4} parent=11 // pred_check_branch
          %248 = sbr.rel (%p246) target = $region16
        $region15: #{tablock_forward.4} parent=11 // pred_region
          %s250 = ssub.s32 576, 576
          %251 = vsyncadd [#allocation10], %s250
          %s252 = sshll.u32 [#allocation11], 4
          %s253 = int_to_ptr.vmem [resolvable:$true] %s252
          %258 = dma.hbm_to_vmem [thread:$0]  %s4, 576, %s253, [#allocation10], 64, 64, 4
        $region16: #{tablock_forward.4} parent=11 // pred_fallthru
          _
        // Predicated region
        $region17: #{tablock_forward.4} parent=11 // pred_check
          %p259 = pneg %p203
        $region18: #{tablock_forward.4} parent=11 // pred_check_branch
          %261 = sbr.rel (%p259) target = $region20
        $region19: #{tablock_forward.4} parent=11 // pred_region
          %s263 = ssub.s32 16, 16
          %264 = vsyncadd [#allocation13], %s263
          %s266 = sshll.u32 [#allocation12], 4
          %s267 = int_to_ptr.vmem [resolvable:$true] %s266
          %269 = dma.hbm_to_vmem [thread:$0]  %s5, 16, %s267, [#allocation13]
        $region20: #{tablock_forward.4} parent=11 // pred_fallthru
          _
      $region12: #{tablock_forward.4} parent=5 // pred_fallthru
        _
      %p270 = scmp.lt.s32.totalorder %s25, 8
      // Predicated region
      $region21: #{tablock_forward.4} parent=5 // pred_check
        %p271 = pneg %p270
      $region22: #{tablock_forward.4} parent=5 // pred_check_branch
        %273 = sbr.rel (%p271) target = $region24
      $region23: #{tablock_forward.4} parent=5 // pred_region
        // Predicated region
        $region25: #{tablock_forward.4} parent=23 // pred_check
          %p274 = pneg %p65
        $region26: #{tablock_forward.4} parent=23 // pred_check_branch
          %276 = sbr.rel (%p274) target = $region28
        $region27: #{tablock_forward.4} parent=23 // pred_region
          %s277 = sand.u32 %s55, 1
          %s278 = scalar_lea.sflag [#allocation4], %s277
          %s279 = sand.u32 %s55, 1
          %s280 = smul.addr %s279, 32
          %s281 = scalar_lea.vmem [#allocation3], %s280
          %s282 = ssub.s32 %s33, 1
          %p283 = scmp.gt.s32.totalorder %s282, 0
          %s284 = scalar_select %p283, %s282, 0
          %s286 = ssub.s32 512, 512
          %287 = vsyncadd %s278, %s286
          %s288 = smul.addr %s284, 8
          %s289 = smul.addr %s32, 32
          %s290 = sadd.s32 %s288, %s289
          %s291 = smul.addr %s290, 64
          %s292 = scalar_lea.hbm %s0, %s291
          %s293 = sshll.u32 %s281, 4
          %s294 = int_to_ptr.vmem [resolvable:$true] %s293
          %299 = dma.hbm_to_vmem [thread:$0]  %s292, 512, %s294, %s278, 64, 64, 4
        $region28: #{tablock_forward.4} parent=23 // pred_fallthru
          _
        // Predicated region
        $region29: #{tablock_forward.4} parent=23 // pred_check
          %p300 = pneg %p93
        $region30: #{tablock_forward.4} parent=23 // pred_check_branch
          %302 = sbr.rel (%p300) target = $region32
        $region31: #{tablock_forward.4} parent=23 // pred_region
          %s303 = sand.u32 %s25, 1
          %s304 = scalar_lea.sflag [#allocation7], %s303
          %s305 = sand.u32 %s83, 1
          %s306 = smul.addr %s305, 32
          %s307 = scalar_lea.vmem [#allocation6], %s306
          %s309 = ssub.s32 512, 512
          %310 = vsyncadd %s304, %s309
          %s311 = smul.addr %s33, 8
          %s312 = smul.addr %s32, 32
          %s313 = sadd.s32 %s311, %s312
          %s314 = smul.addr %s313, 64
          %s315 = scalar_lea.hbm %s1, %s314
          %s316 = sshll.u32 %s307, 4
          %s317 = int_to_ptr.vmem [resolvable:$true] %s316
          %322 = dma.hbm_to_vmem [thread:$0]  %s315, 512, %s317, %s304, 64, 64, 4
        $region32: #{tablock_forward.4} parent=23 // pred_fallthru
          _
        // Predicated region
        $region33: #{tablock_forward.4} parent=23 // pred_check
          %p323 = pneg %p127
        $region34: #{tablock_forward.4} parent=23 // pred_check_branch
          %325 = sbr.rel (%p323) target = $region36
        $region35: #{tablock_forward.4} parent=23 // pred_region
          %s326 = sand.u32 %s25, 1
          %s327 = scalar_lea.sflag [#allocation7], %s326
          %s328 = sand.u32 %s117, 1
          %s329 = smul.addr %s328, 32
          %s330 = scalar_lea.vmem [#allocation8], %s329
          %s331 = sadd.s32 %s33, 1
          %p332 = scmp.lt.s32.totalorder %s331, 3
          %s333 = scalar_select %p332, %s331, 3
          %s335 = ssub.s32 512, 512
          %336 = vsyncadd %s327, %s335
          %s337 = smul.addr %s333, 8
          %s338 = smul.addr %s32, 32
          %s339 = sadd.s32 %s337, %s338
          %s340 = smul.addr %s339, 64
          %s341 = scalar_lea.hbm %s2, %s340
          %s342 = sshll.u32 %s330, 4
          %s343 = int_to_ptr.vmem [resolvable:$true] %s342
          %348 = dma.hbm_to_vmem [thread:$0]  %s341, 512, %s343, %s327, 64, 64, 4
        $region36: #{tablock_forward.4} parent=23 // pred_fallthru
          _
        // Predicated region
        $region37: #{tablock_forward.4} parent=23 // pred_check
          %p349 = pneg %p155
        $region38: #{tablock_forward.4} parent=23 // pred_check_branch
          %351 = sbr.rel (%p349) target = $region40
        $region39: #{tablock_forward.4} parent=23 // pred_region
          %s352 = sand.u32 %s25, 1
          %s353 = scalar_lea.sflag [#allocation10], %s352
          %s354 = sand.u32 %s145, 1
          %s355 = smul.addr %s354, 4
          %s356 = scalar_lea.vmem [#allocation9], %s355
          %s358 = ssub.s32 64, 64
          %359 = vsyncadd %s353, %s358
          %s360 = smul.addr %s32, 4
          %s361 = sadd.s32 %s33, %s360
          %s362 = smul.addr %s361, 64
          %s363 = scalar_lea.hbm %s3, %s362
          %s365 = sshll.u32 %s356, 4
          %s366 = int_to_ptr.vmem [resolvable:$true] %s365
          %368 = dma.hbm_to_vmem [thread:$0]  %s363, 64, %s366, %s353
        $region40: #{tablock_forward.4} parent=23 // pred_fallthru
          _
      $region24: #{tablock_forward.4} parent=5 // pred_fallthru
        _
      %p369 = scmp.le.s32.totalorder 1, %s25
      %p370 = scmp.lt.s32.totalorder %s25, 9
      %p371 = pnand %p369, %p370
      %p372 = pneg %p371
      // Predicated region
      $region41: #{tablock_forward.4} parent=5 // pred_check
        _
      $region42: #{tablock_forward.4} parent=5 // pred_check_branch
        %374 = sbr.rel (%p371) target = $region44
      $region43: #{tablock_forward.4} parent=5 // pred_region
        %s375 = ssub.s32 %s25, 1
        %s376 = sand.u32 %s58, 1
        %s377 = scalar_lea.sflag [#allocation4], %s376
        %s378 = sand.u32 %s58, 1
        %s379 = smul.addr %s378, 32
        %s380 = scalar_lea.vmem [#allocation3], %s379
        // Predicated region
        $region45: #{tablock_forward.4} parent=43 // pred_check
          %p381 = pneg %p71
        $region46: #{tablock_forward.4} parent=43 // pred_check_branch
          %383 = sbr.rel (%p381) target = $region48
        $region47: #{tablock_forward.4} parent=43 // pred_region
          %384 = dma.done %s377, 512
        $region48: #{tablock_forward.4} parent=43 // pred_fallthru
          _
        %s385 = sand.u32 %s30, 1
        %s386 = scalar_lea.sflag [#allocation7], %s385
        %s387 = sand.u32 %s86, 1
        %s388 = smul.addr %s387, 32
        %s389 = scalar_lea.vmem [#allocation6], %s388
        // Predicated region
        $region49: #{tablock_forward.4} parent=43 // pred_check
          %p390 = pneg %p99
        $region50: #{tablock_forward.4} parent=43 // pred_check_branch
          %392 = sbr.rel (%p390) target = $region52
        $region51: #{tablock_forward.4} parent=43 // pred_region
          %393 = dma.done %s386, 512
        $region52: #{tablock_forward.4} parent=43 // pred_fallthru
          _
        %s394 = sand.u32 %s30, 1
        %s395 = scalar_lea.sflag [#allocation7], %s394
        %s396 = sand.u32 %s120, 1
        %s397 = smul.addr %s396, 32
        %s398 = scalar_lea.vmem [#allocation8], %s397
        // Predicated region
        $region53: #{tablock_forward.4} parent=43 // pred_check
          %p399 = pneg %p133
        $region54: #{tablock_forward.4} parent=43 // pred_check_branch
          %401 = sbr.rel (%p399) target = $region56
        $region55: #{tablock_forward.4} parent=43 // pred_region
          %402 = dma.done %s395, 512
        $region56: #{tablock_forward.4} parent=43 // pred_fallthru
          _
        %s403 = sand.u32 %s30, 1
        %s404 = scalar_lea.sflag [#allocation10], %s403
        %s405 = sand.u32 %s148, 1
        %s406 = smul.addr %s405, 4
        %s407 = scalar_lea.vmem [#allocation9], %s406
        // Predicated region
        $region57: #{tablock_forward.4} parent=43 // pred_check
          %p408 = pneg %p161
        $region58: #{tablock_forward.4} parent=43 // pred_check_branch
          %410 = sbr.rel (%p408) target = $region60
        $region59: #{tablock_forward.4} parent=43 // pred_region
          %411 = dma.done %s404, 64
        $region60: #{tablock_forward.4} parent=43 // pred_fallthru
          _
        // Predicated region
        $region61: #{tablock_forward.4} parent=43 // pred_check
          %p412 = pneg %p182
        $region62: #{tablock_forward.4} parent=43 // pred_check_branch
          %414 = sbr.rel (%p412) target = $region64
        $region63: #{tablock_forward.4} parent=43 // pred_region
          %415 = dma.done [#allocation10], 576
        $region64: #{tablock_forward.4} parent=43 // pred_fallthru
          _
        // Predicated region
        $region65: #{tablock_forward.4} parent=43 // pred_check
          %p416 = pneg %p203
        $region66: #{tablock_forward.4} parent=43 // pred_check_branch
          %418 = sbr.rel (%p416) target = $region68
        $region67: #{tablock_forward.4} parent=43 // pred_region
          %419 = dma.done [#allocation13], 16
        $region68: #{tablock_forward.4} parent=43 // pred_fallthru
          _
        %s420 = sand.u32 %s58, 1
        %s421 = scalar_lea.sflag [#allocation4], %s420
        %s422 = sand.u32 %s58, 1
        %s423 = smul.addr %s422, 32
        %s424 = scalar_lea.vmem [#allocation3], %s423
        %p425 = pneg %p71
        %p426 = pneg %p68
        %s427 = sand.u32 %s30, 1
        %s428 = scalar_lea.sflag [#allocation7], %s427
        %s429 = sand.u32 %s86, 1
        %s430 = smul.addr %s429, 32
        %s431 = scalar_lea.vmem [#allocation6], %s430
        %p432 = pneg %p99
        %p433 = pneg %p96
        %s434 = sand.u32 %s30, 1
        %s435 = scalar_lea.sflag [#allocation7], %s434
        %s436 = sand.u32 %s120, 1
        %s437 = smul.addr %s436, 32
        %s438 = scalar_lea.vmem [#allocation8], %s437
        %p439 = pneg %p133
        %p440 = pneg %p130
        %s441 = sand.u32 %s30, 1
        %s442 = scalar_lea.sflag [#allocation10], %s441
        %s443 = sand.u32 %s148, 1
        %s444 = smul.addr %s443, 4
        %s445 = scalar_lea.vmem [#allocation9], %s444
        %p446 = pneg %p161
        %p447 = pneg %p158
        %p448 = pneg %p182
        %p449 = pneg %p179
        %p450 = pneg %p203
        %p451 = pneg %p200
        %p452 = pneg %p231
        %p453 = pneg %p228
        %s454 = sand.u32 %s218, 1
        %s455 = scalar_lea.sflag [#allocation5], %s454
        %s456 = sand.u32 %s218, 1
        %s457 = smul.addr %s456, 40
        %s458 = scalar_lea.vmem [#allocation14], %s457
        %s459 = ssub.s32 %s35, 1
        %p460 = scmp.gt.s32.totalorder %s459, 0
        %s461 = scalar_select %p460, %s459, 0
        %s462 = sadd.s32 %s35, 1
        %p463 = scmp.lt.s32.totalorder %s462, 3
        %s464 = scalar_select %p463, %s462, 3
        %v466 = vld [vmem:[%s407] sm:$0x7]
        %v467 = vld [vmem:[%s380] sm:$0xf]
        %v468 = vld [vmem:[%s380 + $0x4] sm:$0xf]
        %v469 = vld [vmem:[%s380 + $0x8] sm:$0xf]
        %v470 = vld [vmem:[%s380 + $0xc] sm:$0xf]
        %v471 = vld [vmem:[%s380 + $0x10] sm:$0xf]
        %v472 = vld [vmem:[%s380 + $0x14] sm:$0xf]
        %v473 = vld [vmem:[%s380 + $0x18] sm:$0xf]
        %v474 = vld [vmem:[%s380 + $0x1c] sm:$0xf]
        %v475 = vunpack.c.l.bf16 %v467
        %v476 = vunpack.c.l.bf16 %v468
        %v477 = vunpack.c.l.bf16 %v469
        %v478 = vunpack.c.l.bf16 %v470
        %v479 = vunpack.c.l.bf16 %v471
        %v480 = vunpack.c.l.bf16 %v472
        %v481 = vunpack.c.l.bf16 %v473
        %v482 = vunpack.c.l.bf16 %v474
        %v483 = vlaneseq
        %v484 = vshrl.u32 %v483, 7
        %v485 = vsub.s32 0, %v484
        %v486 = vrot.slane %v466, %v485
        %v487 = vmul.f32 %v475, %v486
        %v488 = vmul.f32 %v476, %v486
        %v489 = vmul.f32 %v477, %v486
        %v490 = vmul.f32 %v478, %v486
        %v491 = vmul.f32 %v479, %v486
        %v492 = vmul.f32 %v480, %v486
        %v493 = vmul.f32 %v481, %v486
        %v494 = vmul.f32 %v482, %v486
        %v495 = vld [vmem:[%s389] sm:$0xf]
        %v496 = vld [vmem:[%s389 + $0x4] sm:$0xf]
        %v497 = vld [vmem:[%s389 + $0x8] sm:$0xf]
        %v498 = vld [vmem:[%s389 + $0xc] sm:$0xf]
        %v499 = vld [vmem:[%s389 + $0x10] sm:$0xf]
        %v500 = vld [vmem:[%s389 + $0x14] sm:$0xf]
        %v501 = vld [vmem:[%s389 + $0x18] sm:$0xf]
        %v502 = vld [vmem:[%s389 + $0x1c] sm:$0xf]
        %v503 = vunpack.c.l.bf16 %v495
        %v504 = vunpack.c.l.bf16 %v496
        %v505 = vunpack.c.l.bf16 %v497
        %v506 = vunpack.c.l.bf16 %v498
        %v507 = vunpack.c.l.bf16 %v499
        %v508 = vunpack.c.l.bf16 %v500
        %v509 = vunpack.c.l.bf16 %v501
        %v510 = vunpack.c.l.bf16 %v502
        %v511 = vlaneseq
        %v512 = vshrl.u32 %v511, 7
        %v513 = vsub.s32 1, %v512
        %v514 = vrot.slane %v466, %v513
        %v515 = vmul.f32 %v503, %v514
        %v516 = vmul.f32 %v504, %v514
        %v517 = vmul.f32 %v505, %v514
        %v518 = vmul.f32 %v506, %v514
        %v519 = vmul.f32 %v507, %v514
        %v520 = vmul.f32 %v508, %v514
        %v521 = vmul.f32 %v509, %v514
        %v522 = vmul.f32 %v510, %v514
        %v523 = vadd.f32 %v487, %v515
        %v524 = vadd.f32 %v488, %v516
        %v525 = vadd.f32 %v489, %v517
        %v526 = vadd.f32 %v490, %v518
        %v527 = vadd.f32 %v491, %v519
        %v528 = vadd.f32 %v492, %v520
        %v529 = vadd.f32 %v493, %v521
        %v530 = vadd.f32 %v494, %v522
        %v531 = vld [vmem:[%s398] sm:$0xf]
        %v532 = vld [vmem:[%s398 + $0x4] sm:$0xf]
        %v533 = vld [vmem:[%s398 + $0x8] sm:$0xf]
        %v534 = vld [vmem:[%s398 + $0xc] sm:$0xf]
        %v535 = vld [vmem:[%s398 + $0x10] sm:$0xf]
        %v536 = vld [vmem:[%s398 + $0x14] sm:$0xf]
        %v537 = vld [vmem:[%s398 + $0x18] sm:$0xf]
        %v538 = vld [vmem:[%s398 + $0x1c] sm:$0xf]
        %v539 = vunpack.c.l.bf16 %v531
        %v540 = vunpack.c.l.bf16 %v532
        %v541 = vunpack.c.l.bf16 %v533
        %v542 = vunpack.c.l.bf16 %v534
        %v543 = vunpack.c.l.bf16 %v535
        %v544 = vunpack.c.l.bf16 %v536
        %v545 = vunpack.c.l.bf16 %v537
        %v546 = vunpack.c.l.bf16 %v538
        %v547 = vlaneseq
        %v548 = vshrl.u32 %v547, 7
        %v549 = vsub.s32 2, %v548
        %v550 = vrot.slane %v466, %v549
        %v551 = vmul.f32 %v539, %v550
        %v552 = vmul.f32 %v540, %v550
        %v553 = vmul.f32 %v541, %v550
        %v554 = vmul.f32 %v542, %v550
        %v555 = vmul.f32 %v543, %v550
        %v556 = vmul.f32 %v544, %v550
        %v557 = vmul.f32 %v545, %v550
        %v558 = vmul.f32 %v546, %v550
        %v559 = vadd.f32 %v523, %v551
        %v560 = vadd.f32 %v524, %v552
        %v561 = vadd.f32 %v525, %v553
        %v562 = vadd.f32 %v526, %v554
        %v563 = vadd.f32 %v527, %v555
        %v564 = vadd.f32 %v528, %v556
        %v565 = vadd.f32 %v529, %v557
        %v566 = vadd.f32 %v530, %v558
        %v567 = vpack.c.bf16 %v560, %v559
        %v568 = vpack.c.bf16 %v562, %v561
        %v569 = vpack.c.bf16 %v564, %v563
        %v570 = vpack.c.bf16 %v566, %v565
        %vm571 = vcmask 60416
        %572 = vst.msk [vmem:[#allocation2] sm:$0xf] %vm571, 0
        %573 = vst.msk [vmem:[#allocation2 + $0x4] sm:$0xf] %vm571, 0
        %574 = vst.msk [vmem:[#allocation2 + $0x8] sm:$0xf] %vm571, 0
        %575 = vst.msk [vmem:[#allocation2 + $0xc] sm:$0xf] %vm571, 0
        %576 = vst.msk [vmem:[#allocation2 + $0x10] sm:$0xf] %vm571, 0
        %577 = vst.msk [vmem:[#allocation2 + $0x14] sm:$0xf] %vm571, 0
        %578 = vst.msk [vmem:[#allocation2 + $0x18] sm:$0xf] %vm571, 0
        %579 = vst.msk [vmem:[#allocation2 + $0x1c] sm:$0xf] %vm571, 0
        %580 = vst.msk [vmem:[#allocation2 + $0x20] sm:$0xf] %vm571, 0
        %581 = vst.msk [vmem:[#allocation2 + $0x24] sm:$0xf] %vm571, 0
        %582 = vst.msk [vmem:[#allocation2 + $0x28] sm:$0xf] %vm571, 0
        %583 = vst.msk [vmem:[#allocation2 + $0x2c] sm:$0xf] %vm571, 0
        %584 = vst.msk [vmem:[#allocation2 + $0x30] sm:$0xf] %vm571, 0
        %vm585 = vcmask 59392
        %586 = vst.msk [vmem:[#allocation2 + $0x34] sm:$0x7] %vm585, 0
        %v588 = vunpack.c.l.b16 %v567
        %v589 = vpack.c.b16 %v588, %v588
        %v591 = vshrl.u32 %v589, 16
        %v593 = vrot.slane %v591, 6
        %v594 = vshll.u32 %v589, 16
        %v596 = vrot.slane %v594, 7
        %v597 = vor.u32 %v593, %v596
        %v598 = vrot.slane %v597, 4
        %vm601 = vcmask 60417
        %vm602 = vsmask.f32 7942
        %vm603 = vmand %vm601, %vm602
        %v604 = vld [vmem:[#allocation2 + $0x4] sm:$0xe]
        %v605 = vsel %vm603, %v597, %v604
        %606 = vst [vmem:[#allocation2 + $0x4] sm:$0xe] %v605
        %vm607 = vcmask 58368
        %vm608 = vsmask.f32 1280
        %vm609 = vmand %vm607, %vm608
        %v610 = vld [vmem:[#allocation2 + $0x8] sm:$0x3]
        %v611 = vsel %vm609, %v598, %v610
        %612 = vst [vmem:[#allocation2 + $0x8] sm:$0x3] %v611
        %v613 = vunpack.c.h.b16 %v567
        %v614 = vpack.c.b16 %v613, %v613
        %v616 = vshrl.u32 %v614, 16
        %v618 = vrot.slane %v616, 5
        %v619 = vshll.u32 %v614, 16
        %v621 = vrot.slane %v619, 6
        %v622 = vor.u32 %v618, %v621
        %v623 = vrot.slane %v622, 4
        %vm626 = vcmask 60418
        %vm627 = vsmask.f32 7946
        %vm628 = vmand %vm626, %vm627
        %v629 = vld [vmem:[#allocation2 + $0x8] sm:$0xc]
        %v630 = vsel %vm628, %v622, %v629
        %631 = vst [vmem:[#allocation2 + $0x8] sm:$0xc] %v630
        %vm632 = vcmask 59392
        %vm633 = vsmask.f32 2304
        %vm634 = vmand %vm632, %vm633
        %v635 = vld [vmem:[#allocation2 + $0xc] sm:$0x7]
        %v636 = vsel %vm634, %v623, %v635
        %637 = vst [vmem:[#allocation2 + $0xc] sm:$0x7] %v636
        %v639 = vunpack.c.l.b16 %v568
        %v640 = vpack.c.b16 %v639, %v639
        %v642 = vshll.u32 %v640, 16
        %v644 = vrot.slane %v642, 5
        %v645 = vshrl.u32 %v640, 16
        %v647 = vrot.slane %v645, 4
        %v648 = vor.u32 %v647, %v644
        %v649 = vrot.slane %v648, 4
        %vm652 = vcmask 60419
        %vm653 = vsmask.f32 7950
        %vm654 = vmand %vm652, %vm653
        %v655 = vld [vmem:[#allocation2 + $0xc] sm:$0x8]
        %v656 = vsel %vm654, %v644, %v655
        %657 = vst [vmem:[#allocation2 + $0xc] sm:$0x8] %v656
        %vm658 = vcmask 60416
        %vm659 = vsmask.f32 3328
        %vm660 = vmand %vm658, %vm659
        %v661 = vld [vmem:[#allocation2 + $0x10] sm:$0xf]
        %v662 = vsel %vm660, %v649, %v661
        %663 = vst [vmem:[#allocation2 + $0x10] sm:$0xf] %v662
        %v664 = vunpack.c.h.b16 %v568
        %v665 = vpack.c.b16 %v664, %v664
        %v667 = vshrl.u32 %v665, 16
        %v669 = vrot.slane %v667, 7
        %v670 = vshll.u32 %v665, 16
        %v672 = vor.u32 %v669, %v670
        %v673 = vrot.slane %v669, 4
        %vm676 = vsmask.f32 7938
        %vm677 = vmand %vm658, %vm676
        %v678 = vld [vmem:[#allocation2 + $0x14] sm:$0xf]
        %v679 = vsel %vm677, %v672, %v678
        %680 = vst [vmem:[#allocation2 + $0x14] sm:$0xf] %v679
        %vm681 = vcmask 57344
        %vm682 = vsmask.f32 256
        %vm683 = vmand %vm681, %vm682
        %v684 = vld [vmem:[#allocation2 + $0x18] sm:$0x1]
        %v685 = vsel %vm683, %v673, %v684
        %686 = vst [vmem:[#allocation2 + $0x18] sm:$0x1] %v685
        %v688 = vunpack.c.l.b16 %v569
        %v689 = vpack.c.b16 %v688, %v688
        %v691 = vshrl.u32 %v689, 16
        %v693 = vrot.slane %v691, 6
        %v694 = vshll.u32 %v689, 16
        %v696 = vrot.slane %v694, 7
        %v697 = vor.u32 %v693, %v696
        %v698 = vrot.slane %v697, 4
        %v701 = vld [vmem:[#allocation2 + $0x18] sm:$0xe]
        %v702 = vsel %vm603, %v697, %v701
        %703 = vst [vmem:[#allocation2 + $0x18] sm:$0xe] %v702
        %v704 = vld [vmem:[#allocation2 + $0x1c] sm:$0x3]
        %v705 = vsel %vm609, %v698, %v704
        %706 = vst [vmem:[#allocation2 + $0x1c] sm:$0x3] %v705
        %v707 = vunpack.c.h.b16 %v569
        %v708 = vpack.c.b16 %v707, %v707
        %v710 = vshrl.u32 %v708, 16
        %v712 = vrot.slane %v710, 5
        %v713 = vshll.u32 %v708, 16
        %v715 = vrot.slane %v713, 6
        %v716 = vor.u32 %v712, %v715
        %v717 = vrot.slane %v716, 4
        %v720 = vld [vmem:[#allocation2 + $0x1c] sm:$0xc]
        %v721 = vsel %vm628, %v716, %v720
        %722 = vst [vmem:[#allocation2 + $0x1c] sm:$0xc] %v721
        %v723 = vld [vmem:[#allocation2 + $0x20] sm:$0x7]
        %v724 = vsel %vm634, %v717, %v723
        %725 = vst [vmem:[#allocation2 + $0x20] sm:$0x7] %v724
        %v727 = vunpack.c.l.b16 %v570
        %v728 = vpack.c.b16 %v727, %v727
        %v730 = vshll.u32 %v728, 16
        %v732 = vrot.slane %v730, 5
        %v733 = vshrl.u32 %v728, 16
        %v735 = vrot.slane %v733, 4
        %v736 = vor.u32 %v735, %v732
        %v737 = vrot.slane %v736, 4
        %v740 = vld [vmem:[#allocation2 + $0x20] sm:$0x8]
        %v741 = vsel %vm654, %v732, %v740
        %742 = vst [vmem:[#allocation2 + $0x20] sm:$0x8] %v741
        %v743 = vld [vmem:[#allocation2 + $0x24] sm:$0xf]
        %v744 = vsel %vm660, %v737, %v743
        %745 = vst [vmem:[#allocation2 + $0x24] sm:$0xf] %v744
        %v746 = vunpack.c.h.b16 %v570
        %v747 = vpack.c.b16 %v746, %v746
        %v749 = vshrl.u32 %v747, 16
        %v751 = vrot.slane %v749, 7
        %v752 = vshll.u32 %v747, 16
        %v754 = vor.u32 %v751, %v752
        %v755 = vrot.slane %v751, 4
        %v758 = vld [vmem:[#allocation2 + $0x28] sm:$0xf]
        %v759 = vsel %vm677, %v754, %v758
        %760 = vst [vmem:[#allocation2 + $0x28] sm:$0xf] %v759
        %v761 = vld [vmem:[#allocation2 + $0x2c] sm:$0x1]
        %v762 = vsel %vm683, %v755, %v761
        %763 = vst [vmem:[#allocation2 + $0x2c] sm:$0x1] %v762
        %v764 = vld [vmem:[#allocation2] sm:$0xf]
        %v765 = vld [vmem:[#allocation2 + $0x4] sm:$0xf]
        %v766 = vld [vmem:[#allocation2 + $0x8] sm:$0xf]
        %v767 = vld [vmem:[#allocation2 + $0xc] sm:$0xf]
        %v768 = vld [vmem:[#allocation2 + $0x10] sm:$0xf]
        %v769 = vld [vmem:[#allocation2 + $0x14] sm:$0xf]
        %v770 = vld [vmem:[#allocation2 + $0x18] sm:$0xf]
        %v771 = vld [vmem:[#allocation2 + $0x1c] sm:$0xf]
        %v772 = vld [vmem:[#allocation2 + $0x20] sm:$0xf]
        %v773 = vld [vmem:[#allocation2 + $0x24] sm:$0xf]
        %v774 = vld [vmem:[#allocation11] sm:$0xf]
        %v775 = vld [vmem:[#allocation2 + $0x28] sm:$0x1]
        %s776 = scalar_lea.vmem [#allocation11], 4
        %v777 = vld [vmem:[%s776] sm:$0xf]
        %v789 = vunpack.c.l.b16 %v764
        %v790 = vunpack.c.l.b16 %v765
        %v791 = vunpack.c.l.b16 %v766
        %v792 = vunpack.c.l.b16 %v767
        %v793 = vunpack.c.l.b16 %v768
        %v794 = vunpack.c.l.b16 %v769
        %v795 = vunpack.c.l.b16 %v770
        %v796 = vunpack.c.l.b16 %v771
        %v797 = vunpack.c.l.b16 %v772
        %v798 = vunpack.c.l.b16 %v773
        %v799 = vunpack.c.l.b16 %v775
        %v800 = vpack.c.b16 %v790, %v789
        %v801 = vpack.c.b16 %v792, %v791
        %v802 = vpack.c.b16 %v794, %v793
        %v803 = vpack.c.b16 %v796, %v795
        %v804 = vpack.c.b16 %v798, %v797
        %v805 = vpack.c.b16 %v799, %v799
        %vm806 = vsmask.f32 7424
        %v808 = vshrl.u32 %v800, 16
        %v810 = vshll.u32 %v800, 16
        %v812 = vrot.slane %v810, 1
        %v813 = vor.u32 %v808, %v812
        %v815 = vshll.u32 %v801, 16
        %v817 = vrot.slane %v815, 1
        %v818 = vsel %vm806, %v813, %v817
        %v819 = vshrl.u32 %v801, 16
        %v821 = vor.u32 %v819, %v817
        %v823 = vshll.u32 %v802, 16
        %v825 = vrot.slane %v823, 1
        %v826 = vsel %vm806, %v821, %v825
        %v827 = vshrl.u32 %v802, 16
        %v829 = vor.u32 %v827, %v825
        %v831 = vshll.u32 %v803, 16
        %v833 = vrot.slane %v831, 1
        %v834 = vsel %vm806, %v829, %v833
        %v835 = vshrl.u32 %v803, 16
        %v837 = vor.u32 %v835, %v833
        %v839 = vshll.u32 %v804, 16
        %v841 = vrot.slane %v839, 1
        %v842 = vsel %vm806, %v837, %v841
        %v843 = vshrl.u32 %v804, 16
        %v845 = vor.u32 %v843, %v841
        %v847 = vshll.u32 %v805, 16
        %v849 = vrot.slane %v847, 1
        %v850 = vsel %vm806, %v845, %v849
        %vm851 = vcmask 64512
        %v853 = vsel %vm851, %v818, 0
        %v856 = vsel %vm851, %v826, 0
        %v859 = vsel %vm851, %v834, 0
        %v862 = vsel %vm851, %v842, 0
        %v865 = vsel %vm851, %v850, 0
        %vm867 = vcmask 1043456
        %v869 = vsel %vm867, %v777, 0
        %871 = vmatprep.subr.bf16.mxu0 0
        %872 = vmatpush1.bf16.msra.mxu0 %v869
        %873 = vmatprep.subr.bf16.mxu0 0
        %874 = vmatpush1.bf16.msra.mxu0 0
        %875 = vmatprep.subr.bf16.mxu0 0
        %876 = vmatpush1.bf16.msra.mxu0 0
        %877 = vmatprep.subr.bf16.mxu0 0
        %878 = vmatpush1.bf16.msra.mxu0 0
        %879 = vmatprep.subr.bf16.mxu0 0
        %880 = vmatpush1.bf16.msra.mxu0 0
        %881 = vmatprep.subr.bf16.mxu0 0
        %882 = vmatpush1.bf16.msra.mxu0 0
        %883 = vmatprep.subr.bf16.mxu0 0
        %884 = vmatpush1.bf16.msra.mxu0 0
        %885 = vmatprep.subr.bf16.mxu0 0
        %886 = vmatpush1.bf16.msra.mxu0 0
        %887 = vmatprep.subr.bf16.mxu0 0
        %888 = vmatpush1.bf16.msra.mxu0 0
        %889 = vmatprep.subr.bf16.mxu0 0
        %890 = vmatpush1.bf16.msra.mxu0 0
        %891 = vmatprep.subr.bf16.mxu0 0
        %892 = vmatpush1.bf16.msra.mxu0 0
        %893 = vmatprep.subr.bf16.mxu0 0
        %894 = vmatpush1.bf16.msra.mxu0 0
        %895 = vmatprep.subr.bf16.mxu0 0
        %896 = vmatpush1.bf16.msra.mxu0 0
        %897 = vmatprep.subr.bf16.mxu0 0
        %898 = vmatpush1.bf16.msra.mxu0 0
        %899 = vmatprep.subr.bf16.mxu0 0
        %900 = vmatpush1.bf16.msra.mxu0 0
        %901 = vmatprep.subr.bf16.mxu0 0
        %902 = vmatpush1.bf16.msra.mxu0 0
        %903 = vmatprep.mubr.bf16.mxu0 0
        %904 = vmatmul.mubr.bf16.gmra.mrb[0].mxu0 %v853
        %v905 = vpop.f32.mrb[0].mxu0
        %v906 = vadd.f32 0.0, %v905
        %v907 = vpop.f32.mrb[0].mxu0
        %v908 = vpop.f32.mrb[0].mxu0
        %v909 = vadd.f32 0.0, %v908
        %v910 = vpop.f32.mrb[0].mxu0
        %911 = vmatprep.mubr.bf16.mxu0 0
        %912 = vmatmul.mubr.bf16.gmra.mrb[0].mxu0 %v856
        %v913 = vpop.f32.mrb[0].mxu0
        %v914 = vadd.f32 0.0, %v913
        %v915 = vpop.f32.mrb[0].mxu0
        %v916 = vpop.f32.mrb[0].mxu0
        %v917 = vadd.f32 0.0, %v916
        %v918 = vpop.f32.mrb[0].mxu0
        %919 = vmatprep.mubr.bf16.mxu0 0
        %920 = vmatmul.mubr.bf16.gmra.mrb[0].mxu0 %v859
        %v921 = vpop.f32.mrb[0].mxu0
        %v922 = vadd.f32 0.0, %v921
        %v923 = vpop.f32.mrb[0].mxu0
        %v924 = vpop.f32.mrb[0].mxu0
        %v925 = vadd.f32 0.0, %v924
        %v926 = vpop.f32.mrb[0].mxu0
        %927 = vmatprep.mubr.bf16.mxu0 0
        %928 = vmatmul.mubr.bf16.gmra.mrb[0].mxu0 %v862
        %v929 = vpop.f32.mrb[0].mxu0
        %v930 = vadd.f32 0.0, %v929
        %v931 = vpop.f32.mrb[0].mxu0
        %v932 = vpop.f32.mrb[0].mxu0
        %v933 = vadd.f32 0.0, %v932
        %v934 = vpop.f32.mrb[0].mxu0
        %935 = vmatprep.mubr.bf16.mxu0 0
        %936 = vmatmul.mubr.bf16.gmra.mrb[0].mxu0 %v865
        %v937 = vpop.f32.mrb[0].mxu0
        %v938 = vadd.f32 0.0, %v937
        %v939 = vpop.f32.mrb[0].mxu0
        %v940 = vpop.f32.mrb[0].mxu0
        %v941 = vadd.f32 0.0, %v940
        %v942 = vpop.f32.mrb[0].mxu0
        %943 = vdwg.mxu0
        %v944 = vsel %vm851, %v800, 0
        %v946 = vsel %vm851, %v801, 0
        %v948 = vsel %vm851, %v802, 0
        %v950 = vsel %vm851, %v803, 0
        %v952 = vsel %vm851, %v804, 0
        %v955 = vsel %vm867, %v774, 0
        %957 = vmatprep.subr.bf16.mxu0 0
        %958 = vmatpush1.bf16.msra.mxu0 %v955
        %959 = vmatprep.subr.bf16.mxu0 0
        %960 = vmatpush1.bf16.msra.mxu0 0
        %961 = vmatprep.subr.bf16.mxu0 0
        %962 = vmatpush1.bf16.msra.mxu0 0
        %963 = vmatprep.subr.bf16.mxu0 0
        %964 = vmatpush1.bf16.msra.mxu0 0
        %965 = vmatprep.subr.bf16.mxu0 0
        %966 = vmatpush1.bf16.msra.mxu0 0
        %967 = vmatprep.subr.bf16.mxu0 0
        %968 = vmatpush1.bf16.msra.mxu0 0
        %969 = vmatprep.subr.bf16.mxu0 0
        %970 = vmatpush1.bf16.msra.mxu0 0
        %971 = vmatprep.subr.bf16.mxu0 0
        %972 = vmatpush1.bf16.msra.mxu0 0
        %973 = vmatprep.subr.bf16.mxu0 0
        %974 = vmatpush1.bf16.msra.mxu0 0
        %975 = vmatprep.subr.bf16.mxu0 0
        %976 = vmatpush1.bf16.msra.mxu0 0
        %977 = vmatprep.subr.bf16.mxu0 0
        %978 = vmatpush1.bf16.msra.mxu0 0
        %979 = vmatprep.subr.bf16.mxu0 0
        %980 = vmatpush1.bf16.msra.mxu0 0
        %981 = vmatprep.subr.bf16.mxu0 0
        %982 = vmatpush1.bf16.msra.mxu0 0
        %983 = vmatprep.subr.bf16.mxu0 0
        %984 = vmatpush1.bf16.msra.mxu0 0
        %985 = vmatprep.subr.bf16.mxu0 0
        %986 = vmatpush1.bf16.msra.mxu0 0
        %987 = vmatprep.subr.bf16.mxu0 0
        %988 = vmatpush1.bf16.msra.mxu0 0
        %989 = vmatprep.mubr.bf16.mxu0 0
        %990 = vmatmul.mubr.bf16.gmra.mrb[0].mxu0 %v944
        %v991 = vpop.f32.mrb[0].mxu0
        %v992 = vadd.f32 %v906, %v991
        %v993 = vpop.f32.mrb[0].mxu0
        %v994 = vpop.f32.mrb[0].mxu0
        %v995 = vadd.f32 %v909, %v994
        %v996 = vpop.f32.mrb[0].mxu0
        %997 = vmatprep.mubr.bf16.mxu0 0
        %998 = vmatmul.mubr.bf16.gmra.mrb[0].mxu0 %v946
        %v999 = vpop.f32.mrb[0].mxu0
        %v1000 = vadd.f32 %v914, %v999
        %v1001 = vpop.f32.mrb[0].mxu0
        %v1002 = vpop.f32.mrb[0].mxu0
        %v1003 = vadd.f32 %v917, %v1002
        %v1004 = vpop.f32.mrb[0].mxu0
        %1005 = vmatprep.mubr.bf16.mxu0 0
        %1006 = vmatmul.mubr.bf16.gmra.mrb[0].mxu0 %v948
        %v1007 = vpop.f32.mrb[0].mxu0
        %v1008 = vadd.f32 %v922, %v1007
        %v1009 = vpop.f32.mrb[0].mxu0
        %v1010 = vpop.f32.mrb[0].mxu0
        %v1011 = vadd.f32 %v925, %v1010
        %v1012 = vpop.f32.mrb[0].mxu0
        %1013 = vmatprep.mubr.bf16.mxu0 0
        %1014 = vmatmul.mubr.bf16.gmra.mrb[0].mxu0 %v950
        %v1015 = vpop.f32.mrb[0].mxu0
        %v1016 = vadd.f32 %v930, %v1015
        %v1017 = vpop.f32.mrb[0].mxu0
        %v1018 = vpop.f32.mrb[0].mxu0
        %v1019 = vadd.f32 %v933, %v1018
        %v1020 = vpop.f32.mrb[0].mxu0
        %1021 = vmatprep.mubr.bf16.mxu0 0
        %1022 = vmatmul.mubr.bf16.gmra.mrb[0].mxu0 %v952
        %v1023 = vpop.f32.mrb[0].mxu0
        %v1024 = vadd.f32 %v938, %v1023
        %v1025 = vpop.f32.mrb[0].mxu0
        %v1026 = vpop.f32.mrb[0].mxu0
        %v1027 = vadd.f32 %v941, %v1026
        %v1028 = vpop.f32.mrb[0].mxu0
        %1029 = vdwg.mxu0
        %v1030 = vld [vmem:[#allocation2] sm:$0xe]
        %s1031 = scalar_lea.vmem [#allocation11], 8
        %v1032 = vld [vmem:[%s1031] sm:$0xf]
        %v1034 = vunpack.c.l.b16 %v1030
        %v1035 = vpack.c.b16 %v790, %v1034
        %vm1036 = vcmask 1046528
        %v1037 = vrot.slane %v1035, 1
        %v1038 = vrot.slane %v801, 1
        %v1039 = vsel %vm1036, %v1037, %v1038
        %v1040 = vrot.slane %v802, 1
        %v1041 = vsel %vm1036, %v1038, %v1040
        %v1042 = vrot.slane %v803, 1
        %v1043 = vsel %vm1036, %v1040, %v1042
        %v1044 = vrot.slane %v804, 1
        %v1045 = vsel %vm1036, %v1042, %v1044
        %v1046 = vrot.slane %v805, 1
        %v1047 = vsel %vm1036, %v1044, %v1046
        %v1049 = vsel %vm851, %v1039, 0
        %v1052 = vsel %vm851, %v1041, 0
        %v1055 = vsel %vm851, %v1043, 0
        %v1058 = vsel %vm851, %v1045, 0
        %v1061 = vsel %vm851, %v1047, 0
        %v1064 = vsel %vm867, %v1032, 0
        %1066 = vmatprep.subr.bf16.mxu0 0
        %1067 = vmatpush1.bf16.msra.mxu0 %v1064
        %1068 = vmatprep.subr.bf16.mxu0 0
        %1069 = vmatpush1.bf16.msra.mxu0 0
        %1070 = vmatprep.subr.bf16.mxu0 0
        %1071 = vmatpush1.bf16.msra.mxu0 0
        %1072 = vmatprep.subr.bf16.mxu0 0
        %1073 = vmatpush1.bf16.msra.mxu0 0
        %1074 = vmatprep.subr.bf16.mxu0 0
        %1075 = vmatpush1.bf16.msra.mxu0 0
        %1076 = vmatprep.subr.bf16.mxu0 0
        %1077 = vmatpush1.bf16.msra.mxu0 0
        %1078 = vmatprep.subr.bf16.mxu0 0
        %1079 = vmatpush1.bf16.msra.mxu0 0
        %1080 = vmatprep.subr.bf16.mxu0 0
        %1081 = vmatpush1.bf16.msra.mxu0 0
        %1082 = vmatprep.subr.bf16.mxu0 0
        %1083 = vmatpush1.bf16.msra.mxu0 0
        %1084 = vmatprep.subr.bf16.mxu0 0
        %1085 = vmatpush1.bf16.msra.mxu0 0
        %1086 = vmatprep.subr.bf16.mxu0 0
        %1087 = vmatpush1.bf16.msra.mxu0 0
        %1088 = vmatprep.subr.bf16.mxu0 0
        %1089 = vmatpush1.bf16.msra.mxu0 0
        %1090 = vmatprep.subr.bf16.mxu0 0
        %1091 = vmatpush1.bf16.msra.mxu0 0
        %1092 = vmatprep.subr.bf16.mxu0 0
        %1093 = vmatpush1.bf16.msra.mxu0 0
        %1094 = vmatprep.subr.bf16.mxu0 0
        %1095 = vmatpush1.bf16.msra.mxu0 0
        %1096 = vmatprep.subr.bf16.mxu0 0
        %1097 = vmatpush1.bf16.msra.mxu0 0
        %1098 = vmatprep.mubr.bf16.mxu0 0
        %1099 = vmatmul.mubr.bf16.gmra.mrb[0].mxu0 %v1049
        %v1100 = vpop.f32.mrb[0].mxu0
        %v1101 = vadd.f32 0.0, %v1100
        %v1102 = vpop.f32.mrb[0].mxu0
        %v1103 = vpop.f32.mrb[0].mxu0
        %v1104 = vadd.f32 0.0, %v1103
        %v1105 = vpop.f32.mrb[0].mxu0
        %1106 = vmatprep.mubr.bf16.mxu0 0
        %1107 = vmatmul.mubr.bf16.gmra.mrb[0].mxu0 %v1052
        %v1108 = vpop.f32.mrb[0].mxu0
        %v1109 = vadd.f32 0.0, %v1108
        %v1110 = vpop.f32.mrb[0].mxu0
        %v1111 = vpop.f32.mrb[0].mxu0
        %v1112 = vadd.f32 0.0, %v1111
        %v1113 = vpop.f32.mrb[0].mxu0
        %1114 = vmatprep.mubr.bf16.mxu0 0
        %1115 = vmatmul.mubr.bf16.gmra.mrb[0].mxu0 %v1055
        %v1116 = vpop.f32.mrb[0].mxu0
        %v1117 = vadd.f32 0.0, %v1116
        %v1118 = vpop.f32.mrb[0].mxu0
        %v1119 = vpop.f32.mrb[0].mxu0
        %v1120 = vadd.f32 0.0, %v1119
        %v1121 = vpop.f32.mrb[0].mxu0
        %1122 = vmatprep.mubr.bf16.mxu0 0
        %1123 = vmatmul.mubr.bf16.gmra.mrb[0].mxu0 %v1058
        %v1124 = vpop.f32.mrb[0].mxu0
        %v1125 = vadd.f32 0.0, %v1124
        %v1126 = vpop.f32.mrb[0].mxu0
        %v1127 = vpop.f32.mrb[0].mxu0
        %v1128 = vadd.f32 0.0, %v1127
        %v1129 = vpop.f32.mrb[0].mxu0
        %1130 = vmatprep.mubr.bf16.mxu0 0
        %1131 = vmatmul.mubr.bf16.gmra.mrb[0].mxu0 %v1061
        %v1132 = vpop.f32.mrb[0].mxu0
        %v1133 = vadd.f32 0.0, %v1132
        %v1134 = vpop.f32.mrb[0].mxu0
        %v1135 = vpop.f32.mrb[0].mxu0
        %v1136 = vadd.f32 0.0, %v1135
        %v1137 = vpop.f32.mrb[0].mxu0
        %1138 = vdwg.mxu0
        %v1139 = vadd.f32 %v992, %v1101
        %v1140 = vadd.f32 %v995, %v1104
        %v1141 = vadd.f32 %v1000, %v1109
        %v1142 = vadd.f32 %v1003, %v1112
        %v1143 = vadd.f32 %v1008, %v1117
        %v1144 = vadd.f32 %v1011, %v1120
        %v1145 = vadd.f32 %v1016, %v1125
        %v1146 = vadd.f32 %v1019, %v1128
        %v1147 = vadd.f32 %v1024, %v1133
        %v1148 = vadd.f32 %v1027, %v1136
        %v1149 = vld [vmem:[#allocation2 + $0x4] sm:$0xe]
        %v1150 = vld [vmem:[#allocation2 + $0x8] sm:$0xf]
        %v1151 = vld [vmem:[#allocation2 + $0xc] sm:$0xf]
        %v1152 = vld [vmem:[#allocation2 + $0x10] sm:$0xf]
        %v1153 = vld [vmem:[#allocation2 + $0x14] sm:$0xf]
        %v1154 = vld [vmem:[#allocation2 + $0x18] sm:$0xf]
        %v1155 = vld [vmem:[#allocation2 + $0x1c] sm:$0xf]
        %v1156 = vld [vmem:[#allocation2 + $0x20] sm:$0xf]
        %v1157 = vld [vmem:[#allocation2 + $0x24] sm:$0xf]
        %v1158 = vld [vmem:[#allocation2 + $0x28] sm:$0xf]
        %v1159 = vld [vmem:[#allocation2 + $0x2c] sm:$0x1]
        %s1160 = scalar_lea.vmem [#allocation11], 12
        %v1161 = vld [vmem:[%s1160] sm:$0xf]
        %v1173 = vunpack.c.l.b16 %v1149
        %v1174 = vunpack.c.l.b16 %v1150
        %v1175 = vunpack.c.l.b16 %v1151
        %v1176 = vunpack.c.l.b16 %v1152
        %v1177 = vunpack.c.l.b16 %v1153
        %v1178 = vunpack.c.l.b16 %v1154
        %v1179 = vunpack.c.l.b16 %v1155
        %v1180 = vunpack.c.l.b16 %v1156
        %v1181 = vunpack.c.l.b16 %v1157
        %v1182 = vunpack.c.l.b16 %v1158
        %v1183 = vunpack.c.l.b16 %v1159
        %v1184 = vpack.c.b16 %v1174, %v1173
        %v1185 = vpack.c.b16 %v1176, %v1175
        %v1186 = vpack.c.b16 %v1178, %v1177
        %v1187 = vpack.c.b16 %v1180, %v1179
        %v1188 = vpack.c.b16 %v1182, %v1181
        %v1189 = vpack.c.b16 %v1183, %v1183
        %v1190 = vrot.slane %v1184, 1
        %v1191 = vrot.slane %v1185, 1
        %v1192 = vsel %vm1036, %v1190, %v1191
        %v1193 = vrot.slane %v1186, 1
        %v1194 = vsel %vm1036, %v1191, %v1193
        %v1195 = vrot.slane %v1187, 1
        %v1196 = vsel %vm1036, %v1193, %v1195
        %v1197 = vrot.slane %v1188, 1
        %v1198 = vsel %vm1036, %v1195, %v1197
        %v1199 = vrot.slane %v1189, 1
        %v1200 = vsel %vm1036, %v1197, %v1199
        %v1202 = vsel %vm851, %v1192, 0
        %v1205 = vsel %vm851, %v1194, 0
        %v1208 = vsel %vm851, %v1196, 0
        %v1211 = vsel %vm851, %v1198, 0
        %v1214 = vsel %vm851, %v1200, 0
        %v1217 = vsel %vm867, %v1161, 0
        %1219 = vmatprep.subr.bf16.mxu0 0
        %1220 = vmatpush1.bf16.msra.mxu0 %v1217
        %1221 = vmatprep.subr.bf16.mxu0 0
        %1222 = vmatpush1.bf16.msra.mxu0 0
        %1223 = vmatprep.subr.bf16.mxu0 0
        %1224 = vmatpush1.bf16.msra.mxu0 0
        %1225 = vmatprep.subr.bf16.mxu0 0
        %1226 = vmatpush1.bf16.msra.mxu0 0
        %1227 = vmatprep.subr.bf16.mxu0 0
        %1228 = vmatpush1.bf16.msra.mxu0 0
        %1229 = vmatprep.subr.bf16.mxu0 0
        %1230 = vmatpush1.bf16.msra.mxu0 0
        %1231 = vmatprep.subr.bf16.mxu0 0
        %1232 = vmatpush1.bf16.msra.mxu0 0
        %1233 = vmatprep.subr.bf16.mxu0 0
        %1234 = vmatpush1.bf16.msra.mxu0 0
        %1235 = vmatprep.subr.bf16.mxu0 0
        %1236 = vmatpush1.bf16.msra.mxu0 0
        %1237 = vmatprep.subr.bf16.mxu0 0
        %1238 = vmatpush1.bf16.msra.mxu0 0
        %1239 = vmatprep.subr.bf16.mxu0 0
        %1240 = vmatpush1.bf16.msra.mxu0 0
        %1241 = vmatprep.subr.bf16.mxu0 0
        %1242 = vmatpush1.bf16.msra.mxu0 0
        %1243 = vmatprep.subr.bf16.mxu0 0
        %1244 = vmatpush1.bf16.msra.mxu0 0
        %1245 = vmatprep.subr.bf16.mxu0 0
        %1246 = vmatpush1.bf16.msra.mxu0 0
        %1247 = vmatprep.subr.bf16.mxu0 0
        %1248 = vmatpush1.bf16.msra.mxu0 0
        %1249 = vmatprep.subr.bf16.mxu0 0
        %1250 = vmatpush1.bf16.msra.mxu0 0
        %1251 = vmatprep.mubr.bf16.mxu0 0
        %1252 = vmatmul.mubr.bf16.gmra.mrb[0].mxu0 %v1202
        %v1253 = vpop.f32.mrb[0].mxu0
        %v1254 = vadd.f32 0.0, %v1253
        %v1255 = vpop.f32.mrb[0].mxu0
        %v1256 = vpop.f32.mrb[0].mxu0
        %v1257 = vadd.f32 0.0, %v1256
        %v1258 = vpop.f32.mrb[0].mxu0
        %1259 = vmatprep.mubr.bf16.mxu0 0
        %1260 = vmatmul.mubr.bf16.gmra.mrb[0].mxu0 %v1205
        %v1261 = vpop.f32.mrb[0].mxu0
        %v1262 = vadd.f32 0.0, %v1261
        %v1263 = vpop.f32.mrb[0].mxu0
        %v1264 = vpop.f32.mrb[0].mxu0
        %v1265 = vadd.f32 0.0, %v1264
        %v1266 = vpop.f32.mrb[0].mxu0
        %1267 = vmatprep.mubr.bf16.mxu0 0
        %1268 = vmatmul.mubr.bf16.gmra.mrb[0].mxu0 %v1208
        %v1269 = vpop.f32.mrb[0].mxu0
        %v1270 = vadd.f32 0.0, %v1269
        %v1271 = vpop.f32.mrb[0].mxu0
        %v1272 = vpop.f32.mrb[0].mxu0
        %v1273 = vadd.f32 0.0, %v1272
        %v1274 = vpop.f32.mrb[0].mxu0
        %1275 = vmatprep.mubr.bf16.mxu0 0
        %1276 = vmatmul.mubr.bf16.gmra.mrb[0].mxu0 %v1211
        %v1277 = vpop.f32.mrb[0].mxu0
        %v1278 = vadd.f32 0.0, %v1277
        %v1279 = vpop.f32.mrb[0].mxu0
        %v1280 = vpop.f32.mrb[0].mxu0
        %v1281 = vadd.f32 0.0, %v1280
        %v1282 = vpop.f32.mrb[0].mxu0
        %1283 = vmatprep.mubr.bf16.mxu0 0
        %1284 = vmatmul.mubr.bf16.gmra.mrb[0].mxu0 %v1214
        %v1285 = vpop.f32.mrb[0].mxu0
        %v1286 = vadd.f32 0.0, %v1285
        %v1287 = vpop.f32.mrb[0].mxu0
        %v1288 = vpop.f32.mrb[0].mxu0
        %v1289 = vadd.f32 0.0, %v1288
        %v1290 = vpop.f32.mrb[0].mxu0
        %1291 = vdwg.mxu0
        %v1292 = vadd.f32 %v1139, %v1254
        %v1293 = vadd.f32 %v1140, %v1257
        %v1294 = vadd.f32 %v1141, %v1262
        %v1295 = vadd.f32 %v1142, %v1265
        %v1296 = vadd.f32 %v1143, %v1270
        %v1297 = vadd.f32 %v1144, %v1273
        %v1298 = vadd.f32 %v1145, %v1278
        %v1299 = vadd.f32 %v1146, %v1281
        %v1300 = vadd.f32 %v1147, %v1286
        %v1301 = vadd.f32 %v1148, %v1289
        %v1302 = vld [vmem:[#allocation2 + $0x2c] sm:$0x3]
        %s1303 = scalar_lea.vmem [#allocation11], 16
        %v1304 = vld [vmem:[%s1303] sm:$0xf]
        %v1306 = vunpack.c.l.b16 %v1302
        %v1307 = vpack.c.b16 %v1306, %v1306
        %vm1308 = vsmask.f32 6400
        %v1310 = vshrl.u32 %v1184, 16
        %v1312 = vrot.slane %v1310, 1
        %v1313 = vshll.u32 %v1184, 16
        %v1315 = vrot.slane %v1313, 2
        %v1316 = vor.u32 %v1312, %v1315
        %v1318 = vshrl.u32 %v1185, 16
        %v1320 = vrot.slane %v1318, 1
        %v1321 = vshll.u32 %v1185, 16
        %v1323 = vrot.slane %v1321, 2
        %v1324 = vor.u32 %v1320, %v1323
        %v1325 = vsel %vm1308, %v1316, %v1324
        %v1327 = vshrl.u32 %v1186, 16
        %v1329 = vrot.slane %v1327, 1
        %v1330 = vshll.u32 %v1186, 16
        %v1332 = vrot.slane %v1330, 2
        %v1333 = vor.u32 %v1329, %v1332
        %v1334 = vsel %vm1308, %v1324, %v1333
        %v1336 = vshrl.u32 %v1187, 16
        %v1338 = vrot.slane %v1336, 1
        %v1339 = vshll.u32 %v1187, 16
        %v1341 = vrot.slane %v1339, 2
        %v1342 = vor.u32 %v1338, %v1341
        %v1343 = vsel %vm1308, %v1333, %v1342
        %v1345 = vshrl.u32 %v1188, 16
        %v1347 = vrot.slane %v1345, 1
        %v1348 = vshll.u32 %v1188, 16
        %v1350 = vrot.slane %v1348, 2
        %v1351 = vor.u32 %v1347, %v1350
        %v1352 = vsel %vm1308, %v1342, %v1351
        %v1354 = vshrl.u32 %v1307, 16
        %v1356 = vrot.slane %v1354, 1
        %v1357 = vshll.u32 %v1307, 16
        %v1359 = vrot.slane %v1357, 2
        %v1360 = vor.u32 %v1356, %v1359
        %v1361 = vsel %vm1308, %v1351, %v1360
        %v1363 = vsel %vm851, %v1325, 0
        %v1366 = vsel %vm851, %v1334, 0
        %v1369 = vsel %vm851, %v1343, 0
        %v1372 = vsel %vm851, %v1352, 0
        %v1375 = vsel %vm851, %v1361, 0
        %v1378 = vsel %vm867, %v1304, 0
        %1380 = vmatprep.subr.bf16.mxu0 0
        %1381 = vmatpush1.bf16.msra.mxu0 %v1378
        %1382 = vmatprep.subr.bf16.mxu0 0
        %1383 = vmatpush1.bf16.msra.mxu0 0
        %1384 = vmatprep.subr.bf16.mxu0 0
        %1385 = vmatpush1.bf16.msra.mxu0 0
        %1386 = vmatprep.subr.bf16.mxu0 0
        %1387 = vmatpush1.bf16.msra.mxu0 0
        %1388 = vmatprep.subr.bf16.mxu0 0
        %1389 = vmatpush1.bf16.msra.mxu0 0
        %1390 = vmatprep.subr.bf16.mxu0 0
        %1391 = vmatpush1.bf16.msra.mxu0 0
        %1392 = vmatprep.subr.bf16.mxu0 0
        %1393 = vmatpush1.bf16.msra.mxu0 0
        %1394 = vmatprep.subr.bf16.mxu0 0
        %1395 = vmatpush1.bf16.msra.mxu0 0
        %1396 = vmatprep.subr.bf16.mxu0 0
        %1397 = vmatpush1.bf16.msra.mxu0 0
        %1398 = vmatprep.subr.bf16.mxu0 0
        %1399 = vmatpush1.bf16.msra.mxu0 0
        %1400 = vmatprep.subr.bf16.mxu0 0
        %1401 = vmatpush1.bf16.msra.mxu0 0
        %1402 = vmatprep.subr.bf16.mxu0 0
        %1403 = vmatpush1.bf16.msra.mxu0 0
        %1404 = vmatprep.subr.bf16.mxu0 0
        %1405 = vmatpush1.bf16.msra.mxu0 0
        %1406 = vmatprep.subr.bf16.mxu0 0
        %1407 = vmatpush1.bf16.msra.mxu0 0
        %1408 = vmatprep.subr.bf16.mxu0 0
        %1409 = vmatpush1.bf16.msra.mxu0 0
        %1410 = vmatprep.subr.bf16.mxu0 0
        %1411 = vmatpush1.bf16.msra.mxu0 0
        %1412 = vmatprep.mubr.bf16.mxu0 0
        %1413 = vmatmul.mubr.bf16.gmra.mrb[0].mxu0 %v1363
        %v1414 = vpop.f32.mrb[0].mxu0
        %v1415 = vadd.f32 0.0, %v1414
        %v1416 = vpop.f32.mrb[0].mxu0
        %v1417 = vpop.f32.mrb[0].mxu0
        %v1418 = vadd.f32 0.0, %v1417
        %v1419 = vpop.f32.mrb[0].mxu0
        %1420 = vmatprep.mubr.bf16.mxu0 0
        %1421 = vmatmul.mubr.bf16.gmra.mrb[0].mxu0 %v1366
        %v1422 = vpop.f32.mrb[0].mxu0
        %v1423 = vadd.f32 0.0, %v1422
        %v1424 = vpop.f32.mrb[0].mxu0
        %v1425 = vpop.f32.mrb[0].mxu0
        %v1426 = vadd.f32 0.0, %v1425
        %v1427 = vpop.f32.mrb[0].mxu0
        %1428 = vmatprep.mubr.bf16.mxu0 0
        %1429 = vmatmul.mubr.bf16.gmra.mrb[0].mxu0 %v1369
        %v1430 = vpop.f32.mrb[0].mxu0
        %v1431 = vadd.f32 0.0, %v1430
        %v1432 = vpop.f32.mrb[0].mxu0
        %v1433 = vpop.f32.mrb[0].mxu0
        %v1434 = vadd.f32 0.0, %v1433
        %v1435 = vpop.f32.mrb[0].mxu0
        %1436 = vmatprep.mubr.bf16.mxu0 0
        %1437 = vmatmul.mubr.bf16.gmra.mrb[0].mxu0 %v1372
        %v1438 = vpop.f32.mrb[0].mxu0
        %v1439 = vadd.f32 0.0, %v1438
        %v1440 = vpop.f32.mrb[0].mxu0
        %v1441 = vpop.f32.mrb[0].mxu0
        %v1442 = vadd.f32 0.0, %v1441
        %v1443 = vpop.f32.mrb[0].mxu0
        %1444 = vmatprep.mubr.bf16.mxu0 0
        %1445 = vmatmul.mubr.bf16.gmra.mrb[0].mxu0 %v1375
        %v1446 = vpop.f32.mrb[0].mxu0
        %v1447 = vadd.f32 0.0, %v1446
        %v1448 = vpop.f32.mrb[0].mxu0
        %v1449 = vpop.f32.mrb[0].mxu0
        %v1450 = vadd.f32 0.0, %v1449
        %v1451 = vpop.f32.mrb[0].mxu0
        %1452 = vdwg.mxu0
        %v1453 = vadd.f32 %v1292, %v1415
        %v1454 = vadd.f32 %v1293, %v1418
        %v1455 = vadd.f32 %v1294, %v1423
        %v1456 = vadd.f32 %v1295, %v1426
        %v1457 = vadd.f32 %v1296, %v1431
        %v1458 = vadd.f32 %v1297, %v1434
        %v1459 = vadd.f32 %v1298, %v1439
        %v1460 = vadd.f32 %v1299, %v1442
        %v1461 = vadd.f32 %v1300, %v1447
        %v1462 = vadd.f32 %v1301, %v1450
        %v1463 = vld [vmem:[#allocation2 + $0x4] sm:$0xc]
        %s1464 = scalar_lea.vmem [#allocation11], 20
        %v1465 = vld [vmem:[%s1464] sm:$0xf]
        %v1467 = vunpack.c.l.b16 %v1463
        %v1468 = vpack.c.b16 %v1174, %v1467
        %vm1469 = vcmask 1045504
        %v1470 = vrot.slane %v1468, 2
        %v1471 = vrot.slane %v1185, 2
        %v1472 = vsel %vm1469, %v1470, %v1471
        %v1473 = vrot.slane %v1186, 2
        %v1474 = vsel %vm1469, %v1471, %v1473
        %v1475 = vrot.slane %v1187, 2
        %v1476 = vsel %vm1469, %v1473, %v1475
        %v1477 = vrot.slane %v1188, 2
        %v1478 = vsel %vm1469, %v1475, %v1477
        %v1479 = vrot.slane %v1307, 2
        %v1480 = vsel %vm1469, %v1477, %v1479
        %v1482 = vsel %vm851, %v1472, 0
        %v1485 = vsel %vm851, %v1474, 0
        %v1488 = vsel %vm851, %v1476, 0
        %v1491 = vsel %vm851, %v1478, 0
        %v1494 = vsel %vm851, %v1480, 0
        %v1497 = vsel %vm867, %v1465, 0
        %1499 = vmatprep.subr.bf16.mxu0 0
        %1500 = vmatpush1.bf16.msra.mxu0 %v1497
        %1501 = vmatprep.subr.bf16.mxu0 0
        %1502 = vmatpush1.bf16.msra.mxu0 0
        %1503 = vmatprep.subr.bf16.mxu0 0
        %1504 = vmatpush1.bf16.msra.mxu0 0
        %1505 = vmatprep.subr.bf16.mxu0 0
        %1506 = vmatpush1.bf16.msra.mxu0 0
        %1507 = vmatprep.subr.bf16.mxu0 0
        %1508 = vmatpush1.bf16.msra.mxu0 0
        %1509 = vmatprep.subr.bf16.mxu0 0
        %1510 = vmatpush1.bf16.msra.mxu0 0
        %1511 = vmatprep.subr.bf16.mxu0 0
        %1512 = vmatpush1.bf16.msra.mxu0 0
        %1513 = vmatprep.subr.bf16.mxu0 0
        %1514 = vmatpush1.bf16.msra.mxu0 0
        %1515 = vmatprep.subr.bf16.mxu0 0
        %1516 = vmatpush1.bf16.msra.mxu0 0
        %1517 = vmatprep.subr.bf16.mxu0 0
        %1518 = vmatpush1.bf16.msra.mxu0 0
        %1519 = vmatprep.subr.bf16.mxu0 0
        %1520 = vmatpush1.bf16.msra.mxu0 0
        %1521 = vmatprep.subr.bf16.mxu0 0
        %1522 = vmatpush1.bf16.msra.mxu0 0
        %1523 = vmatprep.subr.bf16.mxu0 0
        %1524 = vmatpush1.bf16.msra.mxu0 0
        %1525 = vmatprep.subr.bf16.mxu0 0
        %1526 = vmatpush1.bf16.msra.mxu0 0
        %1527 = vmatprep.subr.bf16.mxu0 0
        %1528 = vmatpush1.bf16.msra.mxu0 0
        %1529 = vmatprep.subr.bf16.mxu0 0
        %1530 = vmatpush1.bf16.msra.mxu0 0
        %1531 = vmatprep.mubr.bf16.mxu0 0
        %1532 = vmatmul.mubr.bf16.gmra.mrb[0].mxu0 %v1482
        %v1533 = vpop.f32.mrb[0].mxu0
        %v1534 = vadd.f32 0.0, %v1533
        %v1535 = vpop.f32.mrb[0].mxu0
        %v1536 = vpop.f32.mrb[0].mxu0
        %v1537 = vadd.f32 0.0, %v1536
        %v1538 = vpop.f32.mrb[0].mxu0
        %1539 = vmatprep.mubr.bf16.mxu0 0
        %1540 = vmatmul.mubr.bf16.gmra.mrb[0].mxu0 %v1485
        %v1541 = vpop.f32.mrb[0].mxu0
        %v1542 = vadd.f32 0.0, %v1541
        %v1543 = vpop.f32.mrb[0].mxu0
        %v1544 = vpop.f32.mrb[0].mxu0
        %v1545 = vadd.f32 0.0, %v1544
        %v1546 = vpop.f32.mrb[0].mxu0
        %1547 = vmatprep.mubr.bf16.mxu0 0
        %1548 = vmatmul.mubr.bf16.gmra.mrb[0].mxu0 %v1488
        %v1549 = vpop.f32.mrb[0].mxu0
        %v1550 = vadd.f32 0.0, %v1549
        %v1551 = vpop.f32.mrb[0].mxu0
        %v1552 = vpop.f32.mrb[0].mxu0
        %v1553 = vadd.f32 0.0, %v1552
        %v1554 = vpop.f32.mrb[0].mxu0
        %1555 = vmatprep.mubr.bf16.mxu0 0
        %1556 = vmatmul.mubr.bf16.gmra.mrb[0].mxu0 %v1491
        %v1557 = vpop.f32.mrb[0].mxu0
        %v1558 = vadd.f32 0.0, %v1557
        %v1559 = vpop.f32.mrb[0].mxu0
        %v1560 = vpop.f32.mrb[0].mxu0
        %v1561 = vadd.f32 0.0, %v1560
        %v1562 = vpop.f32.mrb[0].mxu0
        %1563 = vmatprep.mubr.bf16.mxu0 0
        %1564 = vmatmul.mubr.bf16.gmra.mrb[0].mxu0 %v1494
        %v1565 = vpop.f32.mrb[0].mxu0
        %v1566 = vadd.f32 0.0, %v1565
        %v1567 = vpop.f32.mrb[0].mxu0
        %v1568 = vpop.f32.mrb[0].mxu0
        %v1569 = vadd.f32 0.0, %v1568
        %v1570 = vpop.f32.mrb[0].mxu0
        %1571 = vdwg.mxu0
        %v1572 = vadd.f32 %v1453, %v1534
        %v1573 = vadd.f32 %v1454, %v1537
        %v1574 = vadd.f32 %v1455, %v1542
        %v1575 = vadd.f32 %v1456, %v1545
        %v1576 = vadd.f32 %v1457, %v1550
        %v1577 = vadd.f32 %v1458, %v1553
        %v1578 = vadd.f32 %v1459, %v1558
        %v1579 = vadd.f32 %v1460, %v1561
        %v1580 = vadd.f32 %v1461, %v1566
        %v1581 = vadd.f32 %v1462, %v1569
        %v1582 = vld [vmem:[#allocation2 + $0x8] sm:$0xc]
        %v1583 = vld [vmem:[#allocation2 + $0xc] sm:$0xf]
        %v1584 = vld [vmem:[#allocation2 + $0x10] sm:$0xf]
        %v1585 = vld [vmem:[#allocation2 + $0x14] sm:$0xf]
        %v1586 = vld [vmem:[#allocation2 + $0x18] sm:$0xf]
        %v1587 = vld [vmem:[#allocation2 + $0x1c] sm:$0xf]
        %v1588 = vld [vmem:[#allocation2 + $0x20] sm:$0xf]
        %v1589 = vld [vmem:[#allocation2 + $0x24] sm:$0xf]
        %v1590 = vld [vmem:[#allocation2 + $0x28] sm:$0xf]
        %v1591 = vld [vmem:[#allocation2 + $0x2c] sm:$0xf]
        %v1592 = vld [vmem:[#allocation2 + $0x30] sm:$0x3]
        %s1593 = scalar_lea.vmem [#allocation11], 24
        %v1594 = vld [vmem:[%s1593] sm:$0xf]
        %v1606 = vunpack.c.l.b16 %v1582
        %v1607 = vunpack.c.l.b16 %v1583
        %v1608 = vunpack.c.l.b16 %v1584
        %v1609 = vunpack.c.l.b16 %v1585
        %v1610 = vunpack.c.l.b16 %v1586
        %v1611 = vunpack.c.l.b16 %v1587
        %v1612 = vunpack.c.l.b16 %v1588
        %v1613 = vunpack.c.l.b16 %v1589
        %v1614 = vunpack.c.l.b16 %v1590
        %v1615 = vunpack.c.l.b16 %v1591
        %v1616 = vunpack.c.l.b16 %v1592
        %v1617 = vpack.c.b16 %v1607, %v1606
        %v1618 = vpack.c.b16 %v1609, %v1608
        %v1619 = vpack.c.b16 %v1611, %v1610
        %v1620 = vpack.c.b16 %v1613, %v1612
        %v1621 = vpack.c.b16 %v1615, %v1614
        %v1622 = vpack.c.b16 %v1616, %v1616
        %v1623 = vrot.slane %v1617, 2
        %v1624 = vrot.slane %v1618, 2
        %v1625 = vsel %vm1469, %v1623, %v1624
        %v1626 = vrot.slane %v1619, 2
        %v1627 = vsel %vm1469, %v1624, %v1626
        %v1628 = vrot.slane %v1620, 2
        %v1629 = vsel %vm1469, %v1626, %v1628
        %v1630 = vrot.slane %v1621, 2
        %v1631 = vsel %vm1469, %v1628, %v1630
        %v1632 = vrot.slane %v1622, 2
        %v1633 = vsel %vm1469, %v1630, %v1632
        %v1635 = vsel %vm851, %v1625, 0
        %v1638 = vsel %vm851, %v1627, 0
        %v1641 = vsel %vm851, %v1629, 0
        %v1644 = vsel %vm851, %v1631, 0
        %v1647 = vsel %vm851, %v1633, 0
        %v1650 = vsel %vm867, %v1594, 0
        %1652 = vmatprep.subr.bf16.mxu0 0
        %1653 = vmatpush1.bf16.msra.mxu0 %v1650
        %1654 = vmatprep.subr.bf16.mxu0 0
        %1655 = vmatpush1.bf16.msra.mxu0 0
        %1656 = vmatprep.subr.bf16.mxu0 0
        %1657 = vmatpush1.bf16.msra.mxu0 0
        %1658 = vmatprep.subr.bf16.mxu0 0
        %1659 = vmatpush1.bf16.msra.mxu0 0
        %1660 = vmatprep.subr.bf16.mxu0 0
        %1661 = vmatpush1.bf16.msra.mxu0 0
        %1662 = vmatprep.subr.bf16.mxu0 0
        %1663 = vmatpush1.bf16.msra.mxu0 0
        %1664 = vmatprep.subr.bf16.mxu0 0
        %1665 = vmatpush1.bf16.msra.mxu0 0
        %1666 = vmatprep.subr.bf16.mxu0 0
        %1667 = vmatpush1.bf16.msra.mxu0 0
        %1668 = vmatprep.subr.bf16.mxu0 0
        %1669 = vmatpush1.bf16.msra.mxu0 0
        %1670 = vmatprep.subr.bf16.mxu0 0
        %1671 = vmatpush1.bf16.msra.mxu0 0
        %1672 = vmatprep.subr.bf16.mxu0 0
        %1673 = vmatpush1.bf16.msra.mxu0 0
        %1674 = vmatprep.subr.bf16.mxu0 0
        %1675 = vmatpush1.bf16.msra.mxu0 0
        %1676 = vmatprep.subr.bf16.mxu0 0
        %1677 = vmatpush1.bf16.msra.mxu0 0
        %1678 = vmatprep.subr.bf16.mxu0 0
        %1679 = vmatpush1.bf16.msra.mxu0 0
        %1680 = vmatprep.subr.bf16.mxu0 0
        %1681 = vmatpush1.bf16.msra.mxu0 0
        %1682 = vmatprep.subr.bf16.mxu0 0
        %1683 = vmatpush1.bf16.msra.mxu0 0
        %1684 = vmatprep.mubr.bf16.mxu0 0
        %1685 = vmatmul.mubr.bf16.gmra.mrb[0].mxu0 %v1635
        %v1686 = vpop.f32.mrb[0].mxu0
        %v1687 = vadd.f32 0.0, %v1686
        %v1688 = vpop.f32.mrb[0].mxu0
        %v1689 = vpop.f32.mrb[0].mxu0
        %v1690 = vadd.f32 0.0, %v1689
        %v1691 = vpop.f32.mrb[0].mxu0
        %1692 = vmatprep.mubr.bf16.mxu0 0
        %1693 = vmatmul.mubr.bf16.gmra.mrb[0].mxu0 %v1638
        %v1694 = vpop.f32.mrb[0].mxu0
        %v1695 = vadd.f32 0.0, %v1694
        %v1696 = vpop.f32.mrb[0].mxu0
        %v1697 = vpop.f32.mrb[0].mxu0
        %v1698 = vadd.f32 0.0, %v1697
        %v1699 = vpop.f32.mrb[0].mxu0
        %1700 = vmatprep.mubr.bf16.mxu0 0
        %1701 = vmatmul.mubr.bf16.gmra.mrb[0].mxu0 %v1641
        %v1702 = vpop.f32.mrb[0].mxu0
        %v1703 = vadd.f32 0.0, %v1702
        %v1704 = vpop.f32.mrb[0].mxu0
        %v1705 = vpop.f32.mrb[0].mxu0
        %v1706 = vadd.f32 0.0, %v1705
        %v1707 = vpop.f32.mrb[0].mxu0
        %1708 = vmatprep.mubr.bf16.mxu0 0
        %1709 = vmatmul.mubr.bf16.gmra.mrb[0].mxu0 %v1644
        %v1710 = vpop.f32.mrb[0].mxu0
        %v1711 = vadd.f32 0.0, %v1710
        %v1712 = vpop.f32.mrb[0].mxu0
        %v1713 = vpop.f32.mrb[0].mxu0
        %v1714 = vadd.f32 0.0, %v1713
        %v1715 = vpop.f32.mrb[0].mxu0
        %1716 = vmatprep.mubr.bf16.mxu0 0
        %1717 = vmatmul.mubr.bf16.gmra.mrb[0].mxu0 %v1647
        %v1718 = vpop.f32.mrb[0].mxu0
        %v1719 = vadd.f32 0.0, %v1718
        %v1720 = vpop.f32.mrb[0].mxu0
        %v1721 = vpop.f32.mrb[0].mxu0
        %v1722 = vadd.f32 0.0, %v1721
        %v1723 = vpop.f32.mrb[0].mxu0
        %1724 = vdwg.mxu0
        %v1725 = vadd.f32 %v1572, %v1687
        %v1726 = vadd.f32 %v1573, %v1690
        %v1727 = vadd.f32 %v1574, %v1695
        %v1728 = vadd.f32 %v1575, %v1698
        %v1729 = vadd.f32 %v1576, %v1703
        %v1730 = vadd.f32 %v1577, %v1706
        %v1731 = vadd.f32 %v1578, %v1711
        %v1732 = vadd.f32 %v1579, %v1714
        %v1733 = vadd.f32 %v1580, %v1719
        %v1734 = vadd.f32 %v1581, %v1722
        %v1735 = vld [vmem:[#allocation2 + $0x30] sm:$0x7]
        %s1736 = scalar_lea.vmem [#allocation11], 28
        %v1737 = vld [vmem:[%s1736] sm:$0xf]
        %v1739 = vunpack.c.l.b16 %v1735
        %v1740 = vpack.c.b16 %v1739, %v1739
        %vm1741 = vsmask.f32 5376
        %v1743 = vshrl.u32 %v1617, 16
        %v1745 = vrot.slane %v1743, 2
        %v1746 = vshll.u32 %v1617, 16
        %v1748 = vrot.slane %v1746, 3
        %v1749 = vor.u32 %v1745, %v1748
        %v1751 = vshrl.u32 %v1618, 16
        %v1753 = vrot.slane %v1751, 2
        %v1754 = vshll.u32 %v1618, 16
        %v1756 = vrot.slane %v1754, 3
        %v1757 = vor.u32 %v1753, %v1756
        %v1758 = vsel %vm1741, %v1749, %v1757
        %v1760 = vshrl.u32 %v1619, 16
        %v1762 = vrot.slane %v1760, 2
        %v1763 = vshll.u32 %v1619, 16
        %v1765 = vrot.slane %v1763, 3
        %v1766 = vor.u32 %v1762, %v1765
        %v1767 = vsel %vm1741, %v1757, %v1766
        %v1769 = vshrl.u32 %v1620, 16
        %v1771 = vrot.slane %v1769, 2
        %v1772 = vshll.u32 %v1620, 16
        %v1774 = vrot.slane %v1772, 3
        %v1775 = vor.u32 %v1771, %v1774
        %v1776 = vsel %vm1741, %v1766, %v1775
        %v1778 = vshrl.u32 %v1621, 16
        %v1780 = vrot.slane %v1778, 2
        %v1781 = vshll.u32 %v1621, 16
        %v1783 = vrot.slane %v1781, 3
        %v1784 = vor.u32 %v1780, %v1783
        %v1785 = vsel %vm1741, %v1775, %v1784
        %v1787 = vshrl.u32 %v1740, 16
        %v1789 = vrot.slane %v1787, 2
        %v1790 = vshll.u32 %v1740, 16
        %v1792 = vrot.slane %v1790, 3
        %v1793 = vor.u32 %v1789, %v1792
        %v1794 = vsel %vm1741, %v1784, %v1793
        %v1796 = vsel %vm851, %v1758, 0
        %v1799 = vsel %vm851, %v1767, 0
        %v1802 = vsel %vm851, %v1776, 0
        %v1805 = vsel %vm851, %v1785, 0
        %v1808 = vsel %vm851, %v1794, 0
        %v1811 = vsel %vm867, %v1737, 0
        %1813 = vmatprep.subr.bf16.mxu0 0
        %1814 = vmatpush1.bf16.msra.mxu0 %v1811
        %1815 = vmatprep.subr.bf16.mxu0 0
        %1816 = vmatpush1.bf16.msra.mxu0 0
        %1817 = vmatprep.subr.bf16.mxu0 0
        %1818 = vmatpush1.bf16.msra.mxu0 0
        %1819 = vmatprep.subr.bf16.mxu0 0
        %1820 = vmatpush1.bf16.msra.mxu0 0
        %1821 = vmatprep.subr.bf16.mxu0 0
        %1822 = vmatpush1.bf16.msra.mxu0 0
        %1823 = vmatprep.subr.bf16.mxu0 0
        %1824 = vmatpush1.bf16.msra.mxu0 0
        %1825 = vmatprep.subr.bf16.mxu0 0
        %1826 = vmatpush1.bf16.msra.mxu0 0
        %1827 = vmatprep.subr.bf16.mxu0 0
        %1828 = vmatpush1.bf16.msra.mxu0 0
        %1829 = vmatprep.subr.bf16.mxu0 0
        %1830 = vmatpush1.bf16.msra.mxu0 0
        %1831 = vmatprep.subr.bf16.mxu0 0
        %1832 = vmatpush1.bf16.msra.mxu0 0
        %1833 = vmatprep.subr.bf16.mxu0 0
        %1834 = vmatpush1.bf16.msra.mxu0 0
        %1835 = vmatprep.subr.bf16.mxu0 0
        %1836 = vmatpush1.bf16.msra.mxu0 0
        %1837 = vmatprep.subr.bf16.mxu0 0
        %1838 = vmatpush1.bf16.msra.mxu0 0
        %1839 = vmatprep.subr.bf16.mxu0 0
        %1840 = vmatpush1.bf16.msra.mxu0 0
        %1841 = vmatprep.subr.bf16.mxu0 0
        %1842 = vmatpush1.bf16.msra.mxu0 0
        %1843 = vmatprep.subr.bf16.mxu0 0
        %1844 = vmatpush1.bf16.msra.mxu0 0
        %1845 = vmatprep.mubr.bf16.mxu0 0
        %1846 = vmatmul.mubr.bf16.gmra.mrb[0].mxu0 %v1796
        %v1847 = vpop.f32.mrb[0].mxu0
        %v1848 = vadd.f32 0.0, %v1847
        %v1849 = vpop.f32.mrb[0].mxu0
        %v1850 = vpop.f32.mrb[0].mxu0
        %v1851 = vadd.f32 0.0, %v1850
        %v1852 = vpop.f32.mrb[0].mxu0
        %1853 = vmatprep.mubr.bf16.mxu0 0
        %1854 = vmatmul.mubr.bf16.gmra.mrb[0].mxu0 %v1799
        %v1855 = vpop.f32.mrb[0].mxu0
        %v1856 = vadd.f32 0.0, %v1855
        %v1857 = vpop.f32.mrb[0].mxu0
        %v1858 = vpop.f32.mrb[0].mxu0
        %v1859 = vadd.f32 0.0, %v1858
        %v1860 = vpop.f32.mrb[0].mxu0
        %1861 = vmatprep.mubr.bf16.mxu0 0
        %1862 = vmatmul.mubr.bf16.gmra.mrb[0].mxu0 %v1802
        %v1863 = vpop.f32.mrb[0].mxu0
        %v1864 = vadd.f32 0.0, %v1863
        %v1865 = vpop.f32.mrb[0].mxu0
        %v1866 = vpop.f32.mrb[0].mxu0
        %v1867 = vadd.f32 0.0, %v1866
        %v1868 = vpop.f32.mrb[0].mxu0
        %1869 = vmatprep.mubr.bf16.mxu0 0
        %1870 = vmatmul.mubr.bf16.gmra.mrb[0].mxu0 %v1805
        %v1871 = vpop.f32.mrb[0].mxu0
        %v1872 = vadd.f32 0.0, %v1871
        %v1873 = vpop.f32.mrb[0].mxu0
        %v1874 = vpop.f32.mrb[0].mxu0
        %v1875 = vadd.f32 0.0, %v1874
        %v1876 = vpop.f32.mrb[0].mxu0
        %1877 = vmatprep.mubr.bf16.mxu0 0
        %1878 = vmatmul.mubr.bf16.gmra.mrb[0].mxu0 %v1808
        %v1879 = vpop.f32.mrb[0].mxu0
        %v1880 = vadd.f32 0.0, %v1879
        %v1881 = vpop.f32.mrb[0].mxu0
        %v1882 = vpop.f32.mrb[0].mxu0
        %v1883 = vadd.f32 0.0, %v1882
        %v1884 = vpop.f32.mrb[0].mxu0
        %1885 = vdwg.mxu0
        %v1886 = vadd.f32 %v1725, %v1848
        %v1887 = vadd.f32 %v1726, %v1851
        %v1888 = vadd.f32 %v1727, %v1856
        %v1889 = vadd.f32 %v1728, %v1859
        %v1890 = vadd.f32 %v1729, %v1864
        %v1891 = vadd.f32 %v1730, %v1867
        %v1892 = vadd.f32 %v1731, %v1872
        %v1893 = vadd.f32 %v1732, %v1875
        %v1894 = vadd.f32 %v1733, %v1880
        %v1895 = vadd.f32 %v1734, %v1883
        %v1896 = vld [vmem:[#allocation2 + $0x8] sm:$0x8]
        %s1897 = scalar_lea.vmem [#allocation11], 32
        %v1898 = vld [vmem:[%s1897] sm:$0xf]
        %v1900 = vunpack.c.l.b16 %v1896
        %v1901 = vpack.c.b16 %v1607, %v1900
        %vm1902 = vcmask 1044480
        %v1903 = vrot.slane %v1901, 3
        %v1904 = vrot.slane %v1618, 3
        %v1905 = vsel %vm1902, %v1903, %v1904
        %v1906 = vrot.slane %v1619, 3
        %v1907 = vsel %vm1902, %v1904, %v1906
        %v1908 = vrot.slane %v1620, 3
        %v1909 = vsel %vm1902, %v1906, %v1908
        %v1910 = vrot.slane %v1621, 3
        %v1911 = vsel %vm1902, %v1908, %v1910
        %v1912 = vrot.slane %v1740, 3
        %v1913 = vsel %vm1902, %v1910, %v1912
        %v1915 = vsel %vm851, %v1905, 0
        %v1918 = vsel %vm851, %v1907, 0
        %v1921 = vsel %vm851, %v1909, 0
        %v1924 = vsel %vm851, %v1911, 0
        %v1927 = vsel %vm851, %v1913, 0
        %v1930 = vsel %vm867, %v1898, 0
        %1932 = vmatprep.subr.bf16.mxu0 0
        %1933 = vmatpush1.bf16.msra.mxu0 %v1930
        %1934 = vmatprep.subr.bf16.mxu0 0
        %1935 = vmatpush1.bf16.msra.mxu0 0
        %1936 = vmatprep.subr.bf16.mxu0 0
        %1937 = vmatpush1.bf16.msra.mxu0 0
        %1938 = vmatprep.subr.bf16.mxu0 0
        %1939 = vmatpush1.bf16.msra.mxu0 0
        %1940 = vmatprep.subr.bf16.mxu0 0
        %1941 = vmatpush1.bf16.msra.mxu0 0
        %1942 = vmatprep.subr.bf16.mxu0 0
        %1943 = vmatpush1.bf16.msra.mxu0 0
        %1944 = vmatprep.subr.bf16.mxu0 0
        %1945 = vmatpush1.bf16.msra.mxu0 0
        %1946 = vmatprep.subr.bf16.mxu0 0
        %1947 = vmatpush1.bf16.msra.mxu0 0
        %1948 = vmatprep.subr.bf16.mxu0 0
        %1949 = vmatpush1.bf16.msra.mxu0 0
        %1950 = vmatprep.subr.bf16.mxu0 0
        %1951 = vmatpush1.bf16.msra.mxu0 0
        %1952 = vmatprep.subr.bf16.mxu0 0
        %1953 = vmatpush1.bf16.msra.mxu0 0
        %1954 = vmatprep.subr.bf16.mxu0 0
        %1955 = vmatpush1.bf16.msra.mxu0 0
        %1956 = vmatprep.subr.bf16.mxu0 0
        %1957 = vmatpush1.bf16.msra.mxu0 0
        %1958 = vmatprep.subr.bf16.mxu0 0
        %1959 = vmatpush1.bf16.msra.mxu0 0
        %1960 = vmatprep.subr.bf16.mxu0 0
        %1961 = vmatpush1.bf16.msra.mxu0 0
        %1962 = vmatprep.subr.bf16.mxu0 0
        %1963 = vmatpush1.bf16.msra.mxu0 0
        %1964 = vmatprep.mubr.bf16.mxu0 0
        %1965 = vmatmul.mubr.bf16.gmra.mrb[0].mxu0 %v1915
        %v1966 = vpop.f32.mrb[0].mxu0
        %v1967 = vadd.f32 0.0, %v1966
        %v1968 = vpop.f32.mrb[0].mxu0
        %v1969 = vpop.f32.mrb[0].mxu0
        %v1970 = vadd.f32 0.0, %v1969
        %v1971 = vpop.f32.mrb[0].mxu0
        %1972 = vmatprep.mubr.bf16.mxu0 0
        %1973 = vmatmul.mubr.bf16.gmra.mrb[0].mxu0 %v1918
        %v1974 = vpop.f32.mrb[0].mxu0
        %v1975 = vadd.f32 0.0, %v1974
        %v1976 = vpop.f32.mrb[0].mxu0
        %v1977 = vpop.f32.mrb[0].mxu0
        %v1978 = vadd.f32 0.0, %v1977
        %v1979 = vpop.f32.mrb[0].mxu0
        %1980 = vmatprep.mubr.bf16.mxu0 0
        %1981 = vmatmul.mubr.bf16.gmra.mrb[0].mxu0 %v1921
        %v1982 = vpop.f32.mrb[0].mxu0
        %v1983 = vadd.f32 0.0, %v1982
        %v1984 = vpop.f32.mrb[0].mxu0
        %v1985 = vpop.f32.mrb[0].mxu0
        %v1986 = vadd.f32 0.0, %v1985
        %v1987 = vpop.f32.mrb[0].mxu0
        %1988 = vmatprep.mubr.bf16.mxu0 0
        %1989 = vmatmul.mubr.bf16.gmra.mrb[0].mxu0 %v1924
        %v1990 = vpop.f32.mrb[0].mxu0
        %v1991 = vadd.f32 0.0, %v1990
        %v1992 = vpop.f32.mrb[0].mxu0
        %v1993 = vpop.f32.mrb[0].mxu0
        %v1994 = vadd.f32 0.0, %v1993
        %v1995 = vpop.f32.mrb[0].mxu0
        %1996 = vmatprep.mubr.bf16.mxu0 0
        %1997 = vmatmul.mubr.bf16.gmra.mrb[0].mxu0 %v1927
        %v1998 = vpop.f32.mrb[0].mxu0
        %v1999 = vadd.f32 0.0, %v1998
        %v2000 = vpop.f32.mrb[0].mxu0
        %v2001 = vpop.f32.mrb[0].mxu0
        %v2002 = vadd.f32 0.0, %v2001
        %v2003 = vpop.f32.mrb[0].mxu0
        %2004 = vdwg.mxu0
        %v2005 = vadd.f32 %v1886, %v1967
        %v2006 = vadd.f32 %v1887, %v1970
        %v2007 = vadd.f32 %v1888, %v1975
        %v2008 = vadd.f32 %v1889, %v1978
        %v2009 = vadd.f32 %v1890, %v1983
        %v2010 = vadd.f32 %v1891, %v1986
        %v2011 = vadd.f32 %v1892, %v1991
        %v2012 = vadd.f32 %v1893, %v1994
        %v2013 = vadd.f32 %v1894, %v1999
        %v2014 = vadd.f32 %v1895, %v2002
        %v2015 = vld [vmem:[#allocation12] sm:$0x1]
        %v2017 = vlaneseq
        %v2018 = vshrl.u32 %v2017, 7
        %v2019 = vsub.s32 0, %v2018
        %v2020 = vrot.slane %v2015, %v2019
        %v2022 = vadd.f32 %v2005, %v2020
        %v2023 = vadd.f32 %v2006, %v2020
        %v2024 = vadd.f32 %v2007, %v2020
        %v2025 = vadd.f32 %v2008, %v2020
        %v2026 = vadd.f32 %v2009, %v2020
        %v2027 = vadd.f32 %v2010, %v2020
        %v2028 = vadd.f32 %v2011, %v2020
        %v2029 = vadd.f32 %v2012, %v2020
        %v2030 = vadd.f32 %v2013, %v2020
        %v2031 = vadd.f32 %v2014, %v2020
        %v2032 = vmax.f32 %v2022, 0.0
        %v2033 = vmax.f32 %v2023, 0.0
        %v2034 = vmax.f32 %v2024, 0.0
        %v2035 = vmax.f32 %v2025, 0.0
        %v2036 = vmax.f32 %v2026, 0.0
        %v2037 = vmax.f32 %v2027, 0.0
        %v2038 = vmax.f32 %v2028, 0.0
        %v2039 = vmax.f32 %v2029, 0.0
        %v2040 = vmax.f32 %v2030, 0.0
        %v2041 = vmax.f32 %v2031, 0.0
        %v2042 = vpack.c.bf16 %v2033, %v2032
        %v2043 = vpack.c.bf16 %v2035, %v2034
        %v2044 = vpack.c.bf16 %v2037, %v2036
        %v2045 = vpack.c.bf16 %v2039, %v2038
        %v2046 = vpack.c.bf16 %v2041, %v2040
        %v2052 = vunpack.c.l.b16 %v2042
        %v2053 = vunpack.c.h.b16 %v2042
        %v2054 = vunpack.c.l.b16 %v2043
        %v2055 = vunpack.c.h.b16 %v2043
        %v2056 = vunpack.c.l.b16 %v2044
        %v2057 = vunpack.c.h.b16 %v2044
        %v2058 = vunpack.c.l.b16 %v2045
        %v2059 = vunpack.c.h.b16 %v2045
        %v2060 = vunpack.c.l.b16 %v2046
        %v2061 = vunpack.c.h.b16 %v2046
        %v2062 = vpack.c.b16 %v2052, %v2052
        %v2063 = vpack.c.b16 %v2053, %v2053
        %v2064 = vpack.c.b16 %v2054, %v2054
        %v2065 = vpack.c.b16 %v2055, %v2055
        %v2066 = vpack.c.b16 %v2056, %v2056
        %v2067 = vpack.c.b16 %v2057, %v2057
        %v2068 = vpack.c.b16 %v2058, %v2058
        %v2069 = vpack.c.b16 %v2059, %v2059
        %v2070 = vpack.c.b16 %v2060, %v2060
        %v2071 = vpack.c.b16 %v2061, %v2061
        %2082 = vst.msk [vmem:[%s458] sm:$0xf] %vm571, %v2062
        %2083 = vst.msk [vmem:[%s458 + $0x4] sm:$0xf] %vm571, %v2063
        %2084 = vst.msk [vmem:[%s458 + $0x8] sm:$0xf] %vm571, %v2064
        %2085 = vst.msk [vmem:[%s458 + $0xc] sm:$0xf] %vm571, %v2065
        %2086 = vst.msk [vmem:[%s458 + $0x10] sm:$0xf] %vm571, %v2066
        %2087 = vst.msk [vmem:[%s458 + $0x14] sm:$0xf] %vm571, %v2067
        %2088 = vst.msk [vmem:[%s458 + $0x18] sm:$0xf] %vm571, %v2068
        %2089 = vst.msk [vmem:[%s458 + $0x1c] sm:$0xf] %vm571, %v2069
        %2090 = vst.msk [vmem:[%s458 + $0x20] sm:$0xf] %vm571, %v2070
        %2091 = vst.msk [vmem:[%s458 + $0x24] sm:$0xf] %vm571, %v2071
        %s2092 = sand.u32 %s218, 1
        %s2093 = scalar_lea.sflag [#allocation5], %s2092
        %s2094 = sand.u32 %s218, 1
        %s2095 = smul.addr %s2094, 40
        %s2096 = scalar_lea.vmem [#allocation14], %s2095
        // Predicated region
        $region69: #{tablock_forward.4} parent=43 // pred_check
          %p2097 = pneg %p228
        $region70: #{tablock_forward.4} parent=43 // pred_check_branch
          %2099 = sbr.rel (%p2097) target = $region72
        $region71: #{tablock_forward.4} parent=43 // pred_region
          %s2101 = ssub.s32 640, 640
          %2102 = vsyncadd %s2093, %s2101
          %s2103 = smul.addr %s35, 10
          %s2104 = smul.addr %s34, 40
          %s2105 = sadd.s32 %s2103, %s2104
          %s2106 = smul.addr %s2105, 64
          %s2107 = scalar_lea.hbm %s6, %s2106
          %s2108 = sshll.u32 %s2096, 4
          %s2109 = int_to_ptr.vmem [resolvable:$true] %s2108
          %2114 = dma.vmem_to_hbm [thread:$0]  %s2109, 640, %s2107, %s2093, 64, 64, 4
        $region72: #{tablock_forward.4} parent=43 // pred_fallthru
          _
      $region44: #{tablock_forward.4} parent=5 // pred_fallthru
        _
      %p2115 = scmp.le.s32.totalorder 2, %s25
      // Predicated region
      $region73: #{tablock_forward.4} parent=5 // pred_check
        %p2116 = pneg %p2115
      $region74: #{tablock_forward.4} parent=5 // pred_check_branch
        %2118 = sbr.rel (%p2116) target = $region76
      $region75: #{tablock_forward.4} parent=5 // pred_region
        %s2119 = ssub.s32 %s25, 2
        // Predicated region
        $region77: #{tablock_forward.4} parent=75 // pred_check
          %p2120 = pneg %p234
        $region78: #{tablock_forward.4} parent=75 // pred_check_branch
          %2122 = sbr.rel (%p2120) target = $region80
        $region79: #{tablock_forward.4} parent=75 // pred_region
          %s2123 = sand.u32 %s219, 1
          %s2124 = scalar_lea.sflag [#allocation5], %s2123
          %s2125 = sand.u32 %s219, 1
          %s2126 = smul.addr %s2125, 40
          %s2127 = scalar_lea.vmem [#allocation14], %s2126
          %2128 = dma.done %s2124, 640
        $region80: #{tablock_forward.4} parent=75 // pred_fallthru
          _
      $region76: #{tablock_forward.4} parent=5 // pred_fallthru
        _
    $region6: #{tablock_forward.4} parent=1 // loop_footer
      %s29 = sadd.s32 1, %s25
    $region7: #{tablock_forward.4} parent=1 // loop_footer_branch
      %24 = sbr.rel target = $region3
    $region8: #{tablock_forward.4} parent=1 // loop_exit
      _
    %2129 = vsyncpa [#allocation4], 1
    %s2130 = scalar_lea.sflag [#allocation4], 1
    %2131 = vsyncpa %s2130, 1
    %2132 = vsyncpa [#allocation7], 1
    %s2133 = scalar_lea.sflag [#allocation7], 1
    %2134 = vsyncpa %s2133, 1
    %2135 = vsyncpa [#allocation10], 1
    %s2136 = scalar_lea.sflag [#allocation10], 1
    %2137 = vsyncpa %s2136, 1
    %2138 = vsyncpa [#allocation13], 1
    %2139 = vsyncpa [#allocation5], 1
    %s2140 = scalar_lea.sflag [#allocation5], 1
    %2141 = vsyncpa %s2140, 1

</llo_original>
